<compile_context>
chip_gen: v6e
topology: v6e:2x2x1
jax: 0.10.0
libtpu: 0.0.40
codegen_flags: <defaults>
</compile_context>

<pallas_src>
import functools
import math

import jax
import jax.numpy as jnp
from jax.experimental import pallas as pl
from jax.experimental.pallas import tpu as pltpu

_LANE = 128


def _round_up(x, m):
    return ((x + m - 1) // m) * m


def _gelu(x, approx):
    if approx:
        # tanh approximation (EUP transcendental path on TPU).
        c = math.sqrt(2.0 / math.pi)
        return 0.5 * x * (1.0 + jnp.tanh(c * (x + 0.044715 * x * x * x)))
    # PyTorch nn.GELU() default: exact erf formulation.
    return 0.5 * x * (1.0 + jax.lax.erf(x * (1.0 / math.sqrt(2.0))))


def _default_tile_b():
    try:
        kind = jax.devices()[0].device_kind.lower()
    except Exception:
        kind = ""
    # v5e MXU is 128x128: M=128 already fills it; v6e/v7x want M>=256.
    return 128 if "v5" in kind else 256


def _physical_vmem_bytes():
    try:
        return int(pltpu.get_tpu_info().vmem_capacity_bytes)
    except Exception:
        return 64 * 1024 * 1024  # conservative: v7x per-TensorCore VMEM


class PreparedVAEParams:
    """Pads / casts / fuses the 9 (w, b) pairs once so the per-call wrapper does no
    parameter work. Order in: [enc1, enc2, enc3, fc_mu, fc_logvar, dec1, dec2, dec3,
    dec4]; fc_mu / fc_logvar are fused into one [hidden//2, 2*lat_p] weight."""

    def __init__(self, params, param_dtype=jnp.bfloat16):
        assert len(params) == 9
        enc1, enc2, enc3, fmu, flv, dec1, dec2, dec3, dec4 = params
        self.input_dim = enc1[0].shape[0]
        self.latent_dim = fmu[0].shape[1]
        self.in_p = _round_up(self.input_dim, _LANE)
        self.lat_p = _round_up(self.latent_dim, _LANE)
        self.param_dtype = param_dtype

        def pad_wb(w, b):
            fi, fo = w.shape
            fi_p, fo_p = _round_up(fi, _LANE), _round_up(fo, _LANE)
            w_p = jnp.pad(w, ((0, fi_p - fi), (0, fo_p - fo))).astype(param_dtype)
            b_p = jnp.pad(jnp.reshape(b, (1, -1)),
                          ((0, 0), (0, fo_p - fo))).astype(jnp.float32)
            return w_p, b_p

        mw, mb = pad_wb(*fmu)
        lw, lb = pad_wb(*flv)
        ml_w = jnp.concatenate([mw, lw], axis=1)   # [h2_p, 2*lat_p]
        ml_b = jnp.concatenate([mb, lb], axis=1)   # [1, 2*lat_p]

        layers = [pad_wb(*enc1), pad_wb(*enc2), pad_wb(*enc3), (ml_w, ml_b),
                  pad_wb(*dec1), pad_wb(*dec2), pad_wb(*dec3), pad_wb(*dec4)]
        self.flat = tuple(a for wb in layers for a in wb)          # 16 arrays
        self.gelu_cols = [layers[i][0].shape[1] for i in (0, 1, 2, 4, 5, 6)]
        self.flops_per_row = 2 * sum(w.shape[0] * w.shape[1] for w, _ in layers)
        self.param_bytes = sum(int(a.size) * a.dtype.itemsize for a in self.flat)


def _vae_forward_kernel(x_ref, eps_ref,
                        ew1, eb1, ew2, eb2, ew3, eb3,
                        mlw, mlb,
                        dw1, db1, dw2, db2, dw3, db3, dw4, db4,
                        z_ref, recon_ref, mu_ref, logvar_ref,
                        *, lat_p, approx_gelu):
    def linear(h, w_ref, b_ref):
        if h.dtype != w_ref.dtype:
            h = h.astype(w_ref.dtype)      # bf16 weight path; f32 path is a no-op
        return jnp.dot(h, w_ref[...], preferred_element_type=jnp.float32) + b_ref[...]

    g = lambda v: _gelu(v, approx_gelu)

    h = x_ref[...]                          # f32 activations

    # ---- encoder: (Linear -> GELU -> Dropout(identity)) x3 ----
    h = g(linear(h, ew1, eb1))
    h = g(linear(h, ew2, eb2))
    h = g(linear(h, ew3, eb3))

    # ---- fused fc_mu / fc_logvar: one MXU dot, split at 128-lane boundary ----
    ml = linear(h, mlw, mlb)
    mu = ml[:, :lat_p]
    logvar = ml[:, lat_p:]
    # Early stores: shorten live ranges before the decoder to avoid vreg spills.
    mu_ref[...] = mu.astype(mu_ref.dtype)
    logvar_ref[...] = logvar.astype(logvar_ref.dtype)

    # ---- reparameterize: z = mu + eps * exp(0.5 * logvar) ----
    z = mu + eps_ref[...] * jnp.exp(0.5 * logvar)
    z_ref[...] = z.astype(z_ref.dtype)

    # ---- decoder: (Linear -> GELU -> Dropout(identity)) x3, then Linear ----
    d = g(linear(z, dw1, db1))
    d = g(linear(d, dw2, db2))
    d = g(linear(d, dw3, db3))
    recon_ref[...] = linear(d, dw4, db4).astype(recon_ref.dtype)


def _vae_forward_one(x, eps, prep, *, tile_b=None, approx_gelu=True):
    """x: [B, input_dim] f32, eps: [B, latent_dim] f32, prep: PreparedVAEParams.
    Returns (z, x_recon, mu, logvar)."""
    B, input_dim = x.shape
    assert input_dim == prep.input_dim
    latent_dim = prep.latent_dim
    in_p, lat_p = prep.in_p, prep.lat_p

    if tile_b is None:
        tile_b = _default_tile_b()
    # >= 2 grid steps when the batch allows it (so v7x's second TC gets work),
    # multiple of 8 sublanes, at least 8 rows.
    tile_b = min(int(tile_b), max(8, _round_up((B + 1) // 2, 8)))
    tile_b = _round_up(tile_b, 8)
    B_p = _round_up(B, tile_b)
    grid = (B_p // tile_b,)

    x_p = jnp.pad(x.astype(jnp.float32), ((0, B_p - B), (0, in_p - input_dim)))
    eps_p = jnp.pad(eps.astype(jnp.float32), ((0, B_p - B), (0, lat_p - latent_dim)))

    out_shape = (jax.ShapeDtypeStruct((B_p, lat_p), jnp.float32),      # z
                 jax.ShapeDtypeStruct((B_p, in_p), jnp.float32),       # x_recon
                 jax.ShapeDtypeStruct((B_p, lat_p), jnp.float32),      # mu
                 jax.ShapeDtypeStruct((B_p, lat_p), jnp.float32))      # logvar
    out_specs = (pl.BlockSpec((tile_b, lat_p), lambda i: (i, 0)),
                 pl.BlockSpec((tile_b, in_p), lambda i: (i, 0)),
                 pl.BlockSpec((tile_b, lat_p), lambda i: (i, 0)),
                 pl.BlockSpec((tile_b, lat_p), lambda i: (i, 0)))

    kernel = functools.partial(_vae_forward_kernel, lat_p=lat_p,
                               approx_gelu=approx_gelu)

    # Cost estimate (advisory for XLA scheduling).
    flops = prep.flops_per_row * B_p
    transc = B_p * (sum(prep.gelu_cols) + lat_p)           # GELU layers + reparam exp
    bytes_accessed = ((x_p.size + eps_p.size) * 4 + prep.param_bytes
                      + 4 * B_p * (in_p + 3 * lat_p))
    cost = pl.CostEstimate(flops=int(flops), transcendentals=int(transc),
                           bytes_accessed=int(bytes_accessed))

    # VMEM budget: resident params (2x covers the non-Buffered fallback) +
    # double-buffered per-step I/O tiles + slack; capped at ~80% of physical VMEM.
    io_bytes = 4 * tile_b * (2 * in_p + 4 * lat_p)
    vmem_cap = int(0.8 * _physical_vmem_bytes())
    vmem_limit = min(vmem_cap,
                     max(32 << 20, 2 * prep.param_bytes + 2 * io_bytes + (4 << 20)))

    def _call(single_buffer_params):
        pmode = {"pipeline_mode": pl.Buffered(1)} if single_buffer_params else {}
        param_specs = [pl.BlockSpec(a.shape, lambda i: (0, 0), **pmode)
                       for a in prep.flat]
        in_specs = ([pl.BlockSpec((tile_b, in_p), lambda i: (i, 0)),
                     pl.BlockSpec((tile_b, lat_p), lambda i: (i, 0))]
                    + param_specs)
        return pl.pallas_call(
            kernel,
            grid=grid,
            in_specs=in_specs,
            out_specs=out_specs,
            out_shape=out_shape,
            compiler_params=pltpu.CompilerParams(
                dimension_semantics=("parallel",),       # megacore sharding on v7x
                vmem_limit_bytes=int(vmem_limit)),
            cost_estimate=cost,
        )(x_p, eps_p, *prep.flat)

    try:
        z_p, recon_p, mu_p, logvar_p = _call(True)     # single-buffer constant weights
    except Exception:
        z_p, recon_p, mu_p, logvar_p = _call(False)    # fallback: default pipelining

    return (z_p[:B, :latent_dim], recon_p[:B, :input_dim],
            mu_p[:B, :latent_dim], logvar_p[:B, :latent_dim])


def vae_forward(x1, eps1, params, x2=None, eps2=None, *,
                tile_b=None, param_dtype=jnp.bfloat16, approx_gelu=True):
    """Matches VAE.forward(): returns (z1, x1_recon, mu1, logvar1) or the paired
    8-tuple. `params` is either the raw list of 9 (w, b) pairs or a
    PreparedVAEParams (recommended: prepare once, reuse across calls)."""
    prep = (params if isinstance(params, PreparedVAEParams)
            else PreparedVAEParams(params, param_dtype))
    if x2 is None:
        return _vae_forward_one(x1, eps1, prep, tile_b=tile_b, approx_gelu=approx_gelu)
    # Paired path: one fused pallas_call over the concatenated batch (weights stay
    # VMEM-resident across the longer grid; one dispatch instead of two).
    B1 = x1.shape[0]
    x = jnp.concatenate([x1, x2], axis=0)
    eps = jnp.concatenate([eps1, eps2], axis=0)
    z, r, mu, lv = _vae_forward_one(x, eps, prep, tile_b=tile_b,
                                    approx_gelu=approx_gelu)
    return (z[:B1], z[B1:], r[:B1], r[B1:], mu[:B1], lv[:B1], mu[B1:], lv[B1:])


def init_vae_params(key, input_dim, hidden_dim, latent_dim):
    """PyTorch-Linear-style uniform(+-1/sqrt(fan_in)) init, deterministic from `key`."""
    dims = [(input_dim, hidden_dim),           # encoder L1
            (hidden_dim, hidden_dim),          # encoder L2
            (hidden_dim, hidden_dim // 2),     # encoder L3
            (hidden_dim // 2, latent_dim),     # fc_mu
            (hidden_dim // 2, latent_dim),     # fc_logvar
            (latent_dim, hidden_dim // 2),     # decoder L1
            (hidden_dim // 2, hidden_dim),     # decoder L2
            (hidden_dim, hidden_dim),          # decoder L3
            (hidden_dim, input_dim)]           # decoder L4
    params = []
    for fan_in, fan_out in dims:
        key, kw, kb = jax.random.split(key, 3)
        bound = 1.0 / math.sqrt(fan_in)
        w = jax.random.uniform(kw, (fan_in, fan_out), jnp.float32, -bound, bound)
        b = jax.random.uniform(kb, (1, fan_out), jnp.float32, -bound, bound)
        params.append((w, b))
    return params


if __name__ == "__main__":
    input_dim, hidden_dim, latent_dim = 64, 32, 16
    batch = 8

    key = jax.random.PRNGKey(0)
    key, kx1, kx2, ke1, ke2 = jax.random.split(key, 5)
    x1 = jax.random.normal(kx1, (batch, input_dim), jnp.float32)
    x2 = jax.random.normal(kx2, (batch, input_dim), jnp.float32)
    eps1 = jax.random.normal(ke1, (batch, latent_dim), jnp.float32)
    eps2 = jax.random.normal(ke2, (batch, latent_dim), jnp.float32)
    params = init_vae_params(key, input_dim, hidden_dim, latent_dim)

    # Pure-JAX reference of the same math (eval-mode dropout).
    def ref(x, eps, p, param_dtype, approx):
        def lin(h, i):
            w = p[i][0].astype(param_dtype)
            return (jnp.dot(h.astype(param_dtype), w,
                            preferred_element_type=jnp.float32) + p[i][1])
        g = lambda v: _gelu(v, approx)
        h = g(lin(x, 0)); h = g(lin(h, 1)); h = g(lin(h, 2))
        rmu, rlv = lin(h, 3), lin(h, 4)
        rz = rmu + eps * jnp.exp(0.5 * rlv)
        d = g(lin(rz, 5)); d = g(lin(d, 6)); d = g(lin(d, 7))
        return rz, lin(d, 8), rmu, rlv

    # --- check 1: exact PyTorch semantics (f32 weights, exact-erf GELU) ---
    prep_f32 = PreparedVAEParams(params, jnp.float32)
    z, recon, mu, logvar = vae_forward(x1, eps1, prep_f32, approx_gelu=False)
    jax.block_until_ready((z, recon, mu, logvar))
    rz, rr, rmu, rlv = ref(x1, eps1, params, jnp.float32, False)
    assert z.shape == (batch, latent_dim)
    assert recon.shape == (batch, input_dim)
    assert mu.shape == (batch, latent_dim) and logvar.shape == (batch, latent_dim)
    for got, want in ((z, rz), (recon, rr), (mu, rmu), (logvar, rlv)):
        assert jnp.allclose(got, want, atol=1e-4, rtol=1e-4), \
            float(jnp.max(jnp.abs(got - want)))

    # --- check 2: default perf path (bf16 weights, tanh GELU, paired fused call) ---
    prep = PreparedVAEParams(params)                 # bf16 by default
    outs = vae_forward(x1, eps1, prep, x2, eps2)     # one pallas_call, 2-step grid
    jax.block_until_ready(outs)
    z1, z2, r1, r2, mu1, lv1, mu2, lv2 = outs
    r1z, r1r, r1mu, r1lv = ref(x1, eps1, params, jnp.bfloat16, True)
    r2z, r2r, r2mu, r2lv = ref(x2, eps2, params, jnp.bfloat16, True)
    for got, want in ((z1, r1z), (r1, r1r), (mu1, r1mu), (lv1, r1lv),
                      (z2, r2z), (r2, r2r), (mu2, r2mu), (lv2, r2lv)):
        assert jnp.allclose(got, want, atol=2e-2, rtol=2e-2), \
            float(jnp.max(jnp.abs(got - want)))

    # TODO(synk): training-mode Dropout(0.1) (PRNG mask with 1/(1-p) scaling) is not
    # implemented; forward() here matches eval-mode semantics.
    print("KERNEL_OK")
</pallas_src>

<mosaic_0001>
module attributes {stable_mosaic.version = 11 : i64} {
  func.func @_vae_forward_kernel(%arg0: i32, %arg1: memref<8x128xf32, #tpu.memory_space<vmem>>, %arg2: memref<8x128xf32, #tpu.memory_space<vmem>>, %arg3: memref<128x128xf32, #tpu.memory_space<vmem>>, %arg4: memref<1x128xf32, #tpu.memory_space<vmem>>, %arg5: memref<128x128xf32, #tpu.memory_space<vmem>>, %arg6: memref<1x128xf32, #tpu.memory_space<vmem>>, %arg7: memref<128x128xf32, #tpu.memory_space<vmem>>, %arg8: memref<1x128xf32, #tpu.memory_space<vmem>>, %arg9: memref<128x256xf32, #tpu.memory_space<vmem>>, %arg10: memref<1x256xf32, #tpu.memory_space<vmem>>, %arg11: memref<128x128xf32, #tpu.memory_space<vmem>>, %arg12: memref<1x128xf32, #tpu.memory_space<vmem>>, %arg13: memref<128x128xf32, #tpu.memory_space<vmem>>, %arg14: memref<1x128xf32, #tpu.memory_space<vmem>>, %arg15: memref<128x128xf32, #tpu.memory_space<vmem>>, %arg16: memref<1x128xf32, #tpu.memory_space<vmem>>, %arg17: memref<128x128xf32, #tpu.memory_space<vmem>>, %arg18: memref<1x128xf32, #tpu.memory_space<vmem>>, %arg19: memref<8x128xf32, #tpu.memory_space<vmem>>, %arg20: memref<8x128xf32, #tpu.memory_space<vmem>>, %arg21: memref<8x128xf32, #tpu.memory_space<vmem>>, %arg22: memref<8x128xf32, #tpu.memory_space<vmem>>) attributes {dimension_semantics = [#tpu.dimension_semantics<parallel>], iteration_bounds = array<i64: 1>, scalar_prefetch = 0 : i64, scratch_operands = 0 : i64, tpu.core_type = #tpu.core_type<tc>, window_params = [{transform_indices = @transform_0, window_bounds = array<i64: 8, 128>}, {transform_indices = @transform_1, window_bounds = array<i64: 8, 128>}, {pipeline_mode = #tpu.pipeline_mode<synchronous>, transform_indices = @transform_2, window_bounds = array<i64: 128, 128>}, {pipeline_mode = #tpu.pipeline_mode<synchronous>, transform_indices = @transform_3, window_bounds = array<i64: 1, 128>}, {pipeline_mode = #tpu.pipeline_mode<synchronous>, transform_indices = @transform_4, window_bounds = array<i64: 128, 128>}, {pipeline_mode = #tpu.pipeline_mode<synchronous>, transform_indices = @transform_5, window_bounds = array<i64: 1, 128>}, {pipeline_mode = #tpu.pipeline_mode<synchronous>, transform_indices = @transform_6, window_bounds = array<i64: 128, 128>}, {pipeline_mode = #tpu.pipeline_mode<synchronous>, transform_indices = @transform_7, window_bounds = array<i64: 1, 128>}, {pipeline_mode = #tpu.pipeline_mode<synchronous>, transform_indices = @transform_8, window_bounds = array<i64: 128, 256>}, {pipeline_mode = #tpu.pipeline_mode<synchronous>, transform_indices = @transform_9, window_bounds = array<i64: 1, 256>}, {pipeline_mode = #tpu.pipeline_mode<synchronous>, transform_indices = @transform_10, window_bounds = array<i64: 128, 128>}, {pipeline_mode = #tpu.pipeline_mode<synchronous>, transform_indices = @transform_11, window_bounds = array<i64: 1, 128>}, {pipeline_mode = #tpu.pipeline_mode<synchronous>, transform_indices = @transform_12, window_bounds = array<i64: 128, 128>}, {pipeline_mode = #tpu.pipeline_mode<synchronous>, transform_indices = @transform_13, window_bounds = array<i64: 1, 128>}, {pipeline_mode = #tpu.pipeline_mode<synchronous>, transform_indices = @transform_14, window_bounds = array<i64: 128, 128>}, {pipeline_mode = #tpu.pipeline_mode<synchronous>, transform_indices = @transform_15, window_bounds = array<i64: 1, 128>}, {pipeline_mode = #tpu.pipeline_mode<synchronous>, transform_indices = @transform_16, window_bounds = array<i64: 128, 128>}, {pipeline_mode = #tpu.pipeline_mode<synchronous>, transform_indices = @transform_17, window_bounds = array<i64: 1, 128>}, {transform_indices = @transform_18, window_bounds = array<i64: 8, 128>}, {transform_indices = @transform_19, window_bounds = array<i64: 8, 128>}, {transform_indices = @transform_20, window_bounds = array<i64: 8, 128>}, {transform_indices = @transform_21, window_bounds = array<i64: 8, 128>}]} {
    %c0 = arith.constant 0 : index
    %c0_0 = arith.constant 0 : index
    %0 = vector.load %arg1[%c0, %c0_0] : memref<8x128xf32, #tpu.memory_space<vmem>>, vector<8x128xf32>
    %c0_1 = arith.constant 0 : index
    %c0_2 = arith.constant 0 : index
    %1 = vector.load %arg3[%c0_1, %c0_2] : memref<128x128xf32, #tpu.memory_space<vmem>>, vector<128x128xf32>
    %cst = arith.constant dense<0.000000e+00> : vector<8x128xf32>
    %2 = tpu.matmul %0, %1, %cst {dimension_numbers = #tpu.dot_dimension_numbers<[1], [0], [0], [1], [0, 0, 1, 1], [], []>} : vector<8x128xf32>, vector<128x128xf32>, vector<8x128xf32> -> vector<8x128xf32>
    %c0_3 = arith.constant 0 : index
    %c0_4 = arith.constant 0 : index
    %3 = vector.load %arg4[%c0_3, %c0_4] : memref<1x128xf32, #tpu.memory_space<vmem>>, vector<1x128xf32>
    %4 = vector.broadcast %3 : vector<1x128xf32> to vector<8x128xf32>
    %5 = arith.addf %2, %4 : vector<8x128xf32>
    %cst_5 = arith.constant 5.000000e-01 : f32
    %6 = vector.broadcast %cst_5 : f32 to vector<8x128xf32>
    %7 = arith.mulf %6, %5 : vector<8x128xf32>
    %cst_6 = arith.constant 0.707106769 : f32
    %8 = vector.broadcast %cst_6 : f32 to vector<8x128xf32>
    %9 = arith.mulf %5, %8 : vector<8x128xf32>
    %10 = math.erf %9 : vector<8x128xf32>
    %cst_7 = arith.constant 1.000000e+00 : f32
    %11 = vector.broadcast %cst_7 : f32 to vector<8x128xf32>
    %12 = arith.addf %11, %10 : vector<8x128xf32>
    %13 = arith.mulf %7, %12 : vector<8x128xf32>
    %c0_8 = arith.constant 0 : index
    %c0_9 = arith.constant 0 : index
    %14 = vector.load %arg5[%c0_8, %c0_9] : memref<128x128xf32, #tpu.memory_space<vmem>>, vector<128x128xf32>
    %cst_10 = arith.constant dense<0.000000e+00> : vector<8x128xf32>
    %15 = tpu.matmul %13, %14, %cst_10 {dimension_numbers = #tpu.dot_dimension_numbers<[1], [0], [0], [1], [0, 0, 1, 1], [], []>} : vector<8x128xf32>, vector<128x128xf32>, vector<8x128xf32> -> vector<8x128xf32>
    %c0_11 = arith.constant 0 : index
    %c0_12 = arith.constant 0 : index
    %16 = vector.load %arg6[%c0_11, %c0_12] : memref<1x128xf32, #tpu.memory_space<vmem>>, vector<1x128xf32>
    %17 = vector.broadcast %16 : vector<1x128xf32> to vector<8x128xf32>
    %18 = arith.addf %15, %17 : vector<8x128xf32>
    %cst_13 = arith.constant 5.000000e-01 : f32
    %19 = vector.broadcast %cst_13 : f32 to vector<8x128xf32>
    %20 = arith.mulf %19, %18 : vector<8x128xf32>
    %cst_14 = arith.constant 0.707106769 : f32
    %21 = vector.broadcast %cst_14 : f32 to vector<8x128xf32>
    %22 = arith.mulf %18, %21 : vector<8x128xf32>
    %23 = math.erf %22 : vector<8x128xf32>
    %cst_15 = arith.constant 1.000000e+00 : f32
    %24 = vector.broadcast %cst_15 : f32 to vector<8x128xf32>
    %25 = arith.addf %24, %23 : vector<8x128xf32>
    %26 = arith.mulf %20, %25 : vector<8x128xf32>
    %c0_16 = arith.constant 0 : index
    %c0_17 = arith.constant 0 : index
    %27 = vector.load %arg7[%c0_16, %c0_17] : memref<128x128xf32, #tpu.memory_space<vmem>>, vector<128x128xf32>
    %cst_18 = arith.constant dense<0.000000e+00> : vector<8x128xf32>
    %28 = tpu.matmul %26, %27, %cst_18 {dimension_numbers = #tpu.dot_dimension_numbers<[1], [0], [0], [1], [0, 0, 1, 1], [], []>} : vector<8x128xf32>, vector<128x128xf32>, vector<8x128xf32> -> vector<8x128xf32>
    %c0_19 = arith.constant 0 : index
    %c0_20 = arith.constant 0 : index
    %29 = vector.load %arg8[%c0_19, %c0_20] : memref<1x128xf32, #tpu.memory_space<vmem>>, vector<1x128xf32>
    %30 = vector.broadcast %29 : vector<1x128xf32> to vector<8x128xf32>
    %31 = arith.addf %28, %30 : vector<8x128xf32>
    %cst_21 = arith.constant 5.000000e-01 : f32
    %32 = vector.broadcast %cst_21 : f32 to vector<8x128xf32>
    %33 = arith.mulf %32, %31 : vector<8x128xf32>
    %cst_22 = arith.constant 0.707106769 : f32
    %34 = vector.broadcast %cst_22 : f32 to vector<8x128xf32>
    %35 = arith.mulf %31, %34 : vector<8x128xf32>
    %36 = math.erf %35 : vector<8x128xf32>
    %cst_23 = arith.constant 1.000000e+00 : f32
    %37 = vector.broadcast %cst_23 : f32 to vector<8x128xf32>
    %38 = arith.addf %37, %36 : vector<8x128xf32>
    %39 = arith.mulf %33, %38 : vector<8x128xf32>
    %c0_24 = arith.constant 0 : index
    %c0_25 = arith.constant 0 : index
    %40 = vector.load %arg9[%c0_24, %c0_25] : memref<128x256xf32, #tpu.memory_space<vmem>>, vector<128x256xf32>
    %cst_26 = arith.constant dense<0.000000e+00> : vector<8x256xf32>
    %41 = tpu.matmul %39, %40, %cst_26 {dimension_numbers = #tpu.dot_dimension_numbers<[1], [0], [0], [1], [0, 0, 1, 1], [], []>} : vector<8x128xf32>, vector<128x256xf32>, vector<8x256xf32> -> vector<8x256xf32>
    %c0_27 = arith.constant 0 : index
    %c0_28 = arith.constant 0 : index
    %42 = vector.load %arg10[%c0_27, %c0_28] : memref<1x256xf32, #tpu.memory_space<vmem>>, vector<1x256xf32>
    %43 = vector.broadcast %42 : vector<1x256xf32> to vector<8x256xf32>
    %44 = arith.addf %41, %43 : vector<8x256xf32>
    %45 = vector.extract_strided_slice %44 {offsets = [0, 0], sizes = [8, 128], strides = [1, 1]} : vector<8x256xf32> to vector<8x128xf32>
    %46 = vector.extract_strided_slice %44 {offsets = [0, 128], sizes = [8, 128], strides = [1, 1]} : vector<8x256xf32> to vector<8x128xf32>
    %c0_29 = arith.constant 0 : index
    %c0_30 = arith.constant 0 : index
    %47 = vector.load %arg21[%c0_29, %c0_30] : memref<8x128xf32, #tpu.memory_space<vmem>>, vector<8x128xf32>
    tpu.vector_store %arg21[%c0_29, %c0_30], %45 {strides = array<i32>} : memref<8x128xf32, #tpu.memory_space<vmem>>, vector<8x128xf32>,
    %c0_31 = arith.constant 0 : index
    %c0_32 = arith.constant 0 : index
    %48 = vector.load %arg22[%c0_31, %c0_32] : memref<8x128xf32, #tpu.memory_space<vmem>>, vector<8x128xf32>
    tpu.vector_store %arg22[%c0_31, %c0_32], %46 {strides = array<i32>} : memref<8x128xf32, #tpu.memory_space<vmem>>, vector<8x128xf32>,
    %c0_33 = arith.constant 0 : index
    %c0_34 = arith.constant 0 : index
    %49 = vector.load %arg2[%c0_33, %c0_34] : memref<8x128xf32, #tpu.memory_space<vmem>>, vector<8x128xf32>
    %cst_35 = arith.constant 5.000000e-01 : f32
    %50 = vector.broadcast %cst_35 : f32 to vector<8x128xf32>
    %51 = arith.mulf %50, %46 : vector<8x128xf32>
    %52 = math.exp %51 : vector<8x128xf32>
    %53 = arith.mulf %49, %52 : vector<8x128xf32>
    %54 = arith.addf %45, %53 : vector<8x128xf32>
    %c0_36 = arith.constant 0 : index
    %c0_37 = arith.constant 0 : index
    %55 = vector.load %arg19[%c0_36, %c0_37] : memref<8x128xf32, #tpu.memory_space<vmem>>, vector<8x128xf32>
    tpu.vector_store %arg19[%c0_36, %c0_37], %54 {strides = array<i32>} : memref<8x128xf32, #tpu.memory_space<vmem>>, vector<8x128xf32>,
    %c0_38 = arith.constant 0 : index
    %c0_39 = arith.constant 0 : index
    %56 = vector.load %arg11[%c0_38, %c0_39] : memref<128x128xf32, #tpu.memory_space<vmem>>, vector<128x128xf32>
    %cst_40 = arith.constant dense<0.000000e+00> : vector<8x128xf32>
    %57 = tpu.matmul %54, %56, %cst_40 {dimension_numbers = #tpu.dot_dimension_numbers<[1], [0], [0], [1], [0, 0, 1, 1], [], []>} : vector<8x128xf32>, vector<128x128xf32>, vector<8x128xf32> -> vector<8x128xf32>
    %c0_41 = arith.constant 0 : index
    %c0_42 = arith.constant 0 : index
    %58 = vector.load %arg12[%c0_41, %c0_42] : memref<1x128xf32, #tpu.memory_space<vmem>>, vector<1x128xf32>
    %59 = vector.broadcast %58 : vector<1x128xf32> to vector<8x128xf32>
    %60 = arith.addf %57, %59 : vector<8x128xf32>
    %cst_43 = arith.constant 5.000000e-01 : f32
    %61 = vector.broadcast %cst_43 : f32 to vector<8x128xf32>
    %62 = arith.mulf %61, %60 : vector<8x128xf32>
    %cst_44 = arith.constant 0.707106769 : f32
    %63 = vector.broadcast %cst_44 : f32 to vector<8x128xf32>
    %64 = arith.mulf %60, %63 : vector<8x128xf32>
    %65 = math.erf %64 : vector<8x128xf32>
    %cst_45 = arith.constant 1.000000e+00 : f32
    %66 = vector.broadcast %cst_45 : f32 to vector<8x128xf32>
    %67 = arith.addf %66, %65 : vector<8x128xf32>
    %68 = arith.mulf %62, %67 : vector<8x128xf32>
    %c0_46 = arith.constant 0 : index
    %c0_47 = arith.constant 0 : index
    %69 = vector.load %arg13[%c0_46, %c0_47] : memref<128x128xf32, #tpu.memory_space<vmem>>, vector<128x128xf32>
    %cst_48 = arith.constant dense<0.000000e+00> : vector<8x128xf32>
    %70 = tpu.matmul %68, %69, %cst_48 {dimension_numbers = #tpu.dot_dimension_numbers<[1], [0], [0], [1], [0, 0, 1, 1], [], []>} : vector<8x128xf32>, vector<128x128xf32>, vector<8x128xf32> -> vector<8x128xf32>
    %c0_49 = arith.constant 0 : index
    %c0_50 = arith.constant 0 : index
    %71 = vector.load %arg14[%c0_49, %c0_50] : memref<1x128xf32, #tpu.memory_space<vmem>>, vector<1x128xf32>
    %72 = vector.broadcast %71 : vector<1x128xf32> to vector<8x128xf32>
    %73 = arith.addf %70, %72 : vector<8x128xf32>
    %cst_51 = arith.constant 5.000000e-01 : f32
    %74 = vector.broadcast %cst_51 : f32 to vector<8x128xf32>
    %75 = arith.mulf %74, %73 : vector<8x128xf32>
    %cst_52 = arith.constant 0.707106769 : f32
    %76 = vector.broadcast %cst_52 : f32 to vector<8x128xf32>
    %77 = arith.mulf %73, %76 : vector<8x128xf32>
    %78 = math.erf %77 : vector<8x128xf32>
    %cst_53 = arith.constant 1.000000e+00 : f32
    %79 = vector.broadcast %cst_53 : f32 to vector<8x128xf32>
    %80 = arith.addf %79, %78 : vector<8x128xf32>
    %81 = arith.mulf %75, %80 : vector<8x128xf32>
    %c0_54 = arith.constant 0 : index
    %c0_55 = arith.constant 0 : index
    %82 = vector.load %arg15[%c0_54, %c0_55] : memref<128x128xf32, #tpu.memory_space<vmem>>, vector<128x128xf32>
    %cst_56 = arith.constant dense<0.000000e+00> : vector<8x128xf32>
    %83 = tpu.matmul %81, %82, %cst_56 {dimension_numbers = #tpu.dot_dimension_numbers<[1], [0], [0], [1], [0, 0, 1, 1], [], []>} : vector<8x128xf32>, vector<128x128xf32>, vector<8x128xf32> -> vector<8x128xf32>
    %c0_57 = arith.constant 0 : index
    %c0_58 = arith.constant 0 : index
    %84 = vector.load %arg16[%c0_57, %c0_58] : memref<1x128xf32, #tpu.memory_space<vmem>>, vector<1x128xf32>
    %85 = vector.broadcast %84 : vector<1x128xf32> to vector<8x128xf32>
    %86 = arith.addf %83, %85 : vector<8x128xf32>
    %cst_59 = arith.constant 5.000000e-01 : f32
    %87 = vector.broadcast %cst_59 : f32 to vector<8x128xf32>
    %88 = arith.mulf %87, %86 : vector<8x128xf32>
    %cst_60 = arith.constant 0.707106769 : f32
    %89 = vector.broadcast %cst_60 : f32 to vector<8x128xf32>
    %90 = arith.mulf %86, %89 : vector<8x128xf32>
    %91 = math.erf %90 : vector<8x128xf32>
    %cst_61 = arith.constant 1.000000e+00 : f32
    %92 = vector.broadcast %cst_61 : f32 to vector<8x128xf32>
    %93 = arith.addf %92, %91 : vector<8x128xf32>
    %94 = arith.mulf %88, %93 : vector<8x128xf32>
    %c0_62 = arith.constant 0 : index
    %c0_63 = arith.constant 0 : index
    %95 = vector.load %arg17[%c0_62, %c0_63] : memref<128x128xf32, #tpu.memory_space<vmem>>, vector<128x128xf32>
    %cst_64 = arith.constant dense<0.000000e+00> : vector<8x128xf32>
    %96 = tpu.matmul %94, %95, %cst_64 {dimension_numbers = #tpu.dot_dimension_numbers<[1], [0], [0], [1], [0, 0, 1, 1], [], []>} : vector<8x128xf32>, vector<128x128xf32>, vector<8x128xf32> -> vector<8x128xf32>
    %c0_65 = arith.constant 0 : index
    %c0_66 = arith.constant 0 : index
    %97 = vector.load %arg18[%c0_65, %c0_66] : memref<1x128xf32, #tpu.memory_space<vmem>>, vector<1x128xf32>
    %98 = vector.broadcast %97 : vector<1x128xf32> to vector<8x128xf32>
    %99 = arith.addf %96, %98 : vector<8x128xf32>
    %c0_67 = arith.constant 0 : index
    %c0_68 = arith.constant 0 : index
    %100 = vector.load %arg20[%c0_67, %c0_68] : memref<8x128xf32, #tpu.memory_space<vmem>>, vector<8x128xf32>
    tpu.vector_store %arg20[%c0_67, %c0_68], %99 {strides = array<i32>} : memref<8x128xf32, #tpu.memory_space<vmem>>, vector<8x128xf32>,
    return
  }
  func.func @transform_0(%arg0: i32) -> (i32, i32) {
    %c0_i32 = arith.constant 0 : i32
    %c0_i32_0 = arith.constant 0 : i32
    return %arg0, %c0_i32 : i32, i32
  }
  func.func @transform_1(%arg0: i32) -> (i32, i32) {
    %c0_i32 = arith.constant 0 : i32
    %c0_i32_0 = arith.constant 0 : i32
    return %arg0, %c0_i32 : i32, i32
  }
  func.func @transform_2(%arg0: i32) -> (i32, i32) {
    %c0_i32 = arith.constant 0 : i32
    %c0_i32_0 = arith.constant 0 : i32
    %c0_i32_1 = arith.constant 0 : i32
    return %c0_i32, %c0_i32_0 : i32, i32
  }
  func.func @transform_3(%arg0: i32) -> (i32, i32) {
    %c0_i32 = arith.constant 0 : i32
    %c0_i32_0 = arith.constant 0 : i32
    %c0_i32_1 = arith.constant 0 : i32
    return %c0_i32, %c0_i32_0 : i32, i32
  }
  func.func @transform_4(%arg0: i32) -> (i32, i32) {
    %c0_i32 = arith.constant 0 : i32
    %c0_i32_0 = arith.constant 0 : i32
    %c0_i32_1 = arith.constant 0 : i32
    return %c0_i32, %c0_i32_0 : i32, i32
  }
  func.func @transform_5(%arg0: i32) -> (i32, i32) {
    %c0_i32 = arith.constant 0 : i32
    %c0_i32_0 = arith.constant 0 : i32
    %c0_i32_1 = arith.constant 0 : i32
    return %c0_i32, %c0_i32_0 : i32, i32
  }
  func.func @transform_6(%arg0: i32) -> (i32, i32) {
    %c0_i32 = arith.constant 0 : i32
    %c0_i32_0 = arith.constant 0 : i32
    %c0_i32_1 = arith.constant 0 : i32
    return %c0_i32, %c0_i32_0 : i32, i32
  }
  func.func @transform_7(%arg0: i32) -> (i32, i32) {
    %c0_i32 = arith.constant 0 : i32
    %c0_i32_0 = arith.constant 0 : i32
    %c0_i32_1 = arith.constant 0 : i32
    return %c0_i32, %c0_i32_0 : i32, i32
  }
  func.func @transform_8(%arg0: i32) -> (i32, i32) {
    %c0_i32 = arith.constant 0 : i32
    %c0_i32_0 = arith.constant 0 : i32
    %c0_i32_1 = arith.constant 0 : i32
    return %c0_i32, %c0_i32_0 : i32, i32
  }
  func.func @transform_9(%arg0: i32) -> (i32, i32) {
    %c0_i32 = arith.constant 0 : i32
    %c0_i32_0 = arith.constant 0 : i32
    %c0_i32_1 = arith.constant 0 : i32
    return %c0_i32, %c0_i32_0 : i32, i32
  }
  func.func @transform_10(%arg0: i32) -> (i32, i32) {
    %c0_i32 = arith.constant 0 : i32
    %c0_i32_0 = arith.constant 0 : i32
    %c0_i32_1 = arith.constant 0 : i32
    return %c0_i32, %c0_i32_0 : i32, i32
  }
  func.func @transform_11(%arg0: i32) -> (i32, i32) {
    %c0_i32 = arith.constant 0 : i32
    %c0_i32_0 = arith.constant 0 : i32
    %c0_i32_1 = arith.constant 0 : i32
    return %c0_i32, %c0_i32_0 : i32, i32
  }
  func.func @transform_12(%arg0: i32) -> (i32, i32) {
    %c0_i32 = arith.constant 0 : i32
    %c0_i32_0 = arith.constant 0 : i32
    %c0_i32_1 = arith.constant 0 : i32
    return %c0_i32, %c0_i32_0 : i32, i32
  }
  func.func @transform_13(%arg0: i32) -> (i32, i32) {
    %c0_i32 = arith.constant 0 : i32
    %c0_i32_0 = arith.constant 0 : i32
    %c0_i32_1 = arith.constant 0 : i32
    return %c0_i32, %c0_i32_0 : i32, i32
  }
  func.func @transform_14(%arg0: i32) -> (i32, i32) {
    %c0_i32 = arith.constant 0 : i32
    %c0_i32_0 = arith.constant 0 : i32
    %c0_i32_1 = arith.constant 0 : i32
    return %c0_i32, %c0_i32_0 : i32, i32
  }
  func.func @transform_15(%arg0: i32) -> (i32, i32) {
    %c0_i32 = arith.constant 0 : i32
    %c0_i32_0 = arith.constant 0 : i32
    %c0_i32_1 = arith.constant 0 : i32
    return %c0_i32, %c0_i32_0 : i32, i32
  }
  func.func @transform_16(%arg0: i32) -> (i32, i32) {
    %c0_i32 = arith.constant 0 : i32
    %c0_i32_0 = arith.constant 0 : i32
    %c0_i32_1 = arith.constant 0 : i32
    return %c0_i32, %c0_i32_0 : i32, i32
  }
  func.func @transform_17(%arg0: i32) -> (i32, i32) {
    %c0_i32 = arith.constant 0 : i32
    %c0_i32_0 = arith.constant 0 : i32
    %c0_i32_1 = arith.constant 0 : i32
    return %c0_i32, %c0_i32_0 : i32, i32
  }
  func.func @transform_18(%arg0: i32) -> (i32, i32) {
    %c0_i32 = arith.constant 0 : i32
    %c0_i32_0 = arith.constant 0 : i32
    return %arg0, %c0_i32 : i32, i32
  }
  func.func @transform_19(%arg0: i32) -> (i32, i32) {
    %c0_i32 = arith.constant 0 : i32
    %c0_i32_0 = arith.constant 0 : i32
    return %arg0, %c0_i32 : i32, i32
  }
  func.func @transform_20(%arg0: i32) -> (i32, i32) {
    %c0_i32 = arith.constant 0 : i32
    %c0_i32_0 = arith.constant 0 : i32
    return %arg0, %c0_i32 : i32, i32
  }
  func.func @transform_21(%arg0: i32) -> (i32, i32) {
    %c0_i32 = arith.constant 0 : i32
    %c0_i32_0 = arith.constant 0 : i32
    return %arg0, %c0_i32 : i32, i32
  }
}

module attributes {stable_mosaic.version = 11 : i64} {
  func.func @_vae_forward_kernel(%arg0: i32, %arg1: memref<8x128xf32, #tpu.memory_space<vmem>>, %arg2: memref<8x128xf32, #tpu.memory_space<vmem>>, %arg3: memref<128x128xf32, #tpu.memory_space<vmem>>, %arg4: memref<1x128xf32, #tpu.memory_space<vmem>>, %arg5: memref<128x128xf32, #tpu.memory_space<vmem>>, %arg6: memref<1x128xf32, #tpu.memory_space<vmem>>, %arg7: memref<128x128xf32, #tpu.memory_space<vmem>>, %arg8: memref<1x128xf32, #tpu.memory_space<vmem>>, %arg9: memref<128x256xf32, #tpu.memory_space<vmem>>, %arg10: memref<1x256xf32, #tpu.memory_space<vmem>>, %arg11: memref<128x128xf32, #tpu.memory_space<vmem>>, %arg12: memref<1x128xf32, #tpu.memory_space<vmem>>, %arg13: memref<128x128xf32, #tpu.memory_space<vmem>>, %arg14: memref<1x128xf32, #tpu.memory_space<vmem>>, %arg15: memref<128x128xf32, #tpu.memory_space<vmem>>, %arg16: memref<1x128xf32, #tpu.memory_space<vmem>>, %arg17: memref<128x128xf32, #tpu.memory_space<vmem>>, %arg18: memref<1x128xf32, #tpu.memory_space<vmem>>, %arg19: memref<8x128xf32, #tpu.memory_space<vmem>>, %arg20: memref<8x128xf32, #tpu.memory_space<vmem>>, %arg21: memref<8x128xf32, #tpu.memory_space<vmem>>, %arg22: memref<8x128xf32, #tpu.memory_space<vmem>>) attributes {dimension_semantics = [#tpu.dimension_semantics<parallel>], iteration_bounds = array<i64: 1>, scalar_prefetch = 0 : i64, scratch_operands = 0 : i64, tpu.core_type = #tpu.core_type<tc>, window_params = [{transform_indices = @transform_0, window_bounds = array<i64: 8, 128>}, {transform_indices = @transform_1, window_bounds = array<i64: 8, 128>}, {pipeline_mode = #tpu.pipeline_mode<synchronous>, transform_indices = @transform_2, window_bounds = array<i64: 128, 128>}, {pipeline_mode = #tpu.pipeline_mode<synchronous>, transform_indices = @transform_3, window_bounds = array<i64: 1, 128>}, {pipeline_mode = #tpu.pipeline_mode<synchronous>, transform_indices = @transform_4, window_bounds = array<i64: 128, 128>}, {pipeline_mode = #tpu.pipeline_mode<synchronous>, transform_indices = @transform_5, window_bounds = array<i64: 1, 128>}, {pipeline_mode = #tpu.pipeline_mode<synchronous>, transform_indices = @transform_6, window_bounds = array<i64: 128, 128>}, {pipeline_mode = #tpu.pipeline_mode<synchronous>, transform_indices = @transform_7, window_bounds = array<i64: 1, 128>}, {pipeline_mode = #tpu.pipeline_mode<synchronous>, transform_indices = @transform_8, window_bounds = array<i64: 128, 256>}, {pipeline_mode = #tpu.pipeline_mode<synchronous>, transform_indices = @transform_9, window_bounds = array<i64: 1, 256>}, {pipeline_mode = #tpu.pipeline_mode<synchronous>, transform_indices = @transform_10, window_bounds = array<i64: 128, 128>}, {pipeline_mode = #tpu.pipeline_mode<synchronous>, transform_indices = @transform_11, window_bounds = array<i64: 1, 128>}, {pipeline_mode = #tpu.pipeline_mode<synchronous>, transform_indices = @transform_12, window_bounds = array<i64: 128, 128>}, {pipeline_mode = #tpu.pipeline_mode<synchronous>, transform_indices = @transform_13, window_bounds = array<i64: 1, 128>}, {pipeline_mode = #tpu.pipeline_mode<synchronous>, transform_indices = @transform_14, window_bounds = array<i64: 128, 128>}, {pipeline_mode = #tpu.pipeline_mode<synchronous>, transform_indices = @transform_15, window_bounds = array<i64: 1, 128>}, {pipeline_mode = #tpu.pipeline_mode<synchronous>, transform_indices = @transform_16, window_bounds = array<i64: 128, 128>}, {pipeline_mode = #tpu.pipeline_mode<synchronous>, transform_indices = @transform_17, window_bounds = array<i64: 1, 128>}, {transform_indices = @transform_18, window_bounds = array<i64: 8, 128>}, {transform_indices = @transform_19, window_bounds = array<i64: 8, 128>}, {transform_indices = @transform_20, window_bounds = array<i64: 8, 128>}, {transform_indices = @transform_21, window_bounds = array<i64: 8, 128>}]} {
    %c0 = arith.constant 0 : index
    %c0_0 = arith.constant 0 : index
    %0 = vector.load %arg1[%c0, %c0_0] : memref<8x128xf32, #tpu.memory_space<vmem>>, vector<8x128xf32>
    %c0_1 = arith.constant 0 : index
    %c0_2 = arith.constant 0 : index
    %1 = vector.load %arg3[%c0_1, %c0_2] : memref<128x128xf32, #tpu.memory_space<vmem>>, vector<128x128xf32>
    %cst = arith.constant dense<0.000000e+00> : vector<8x128xf32>
    %2 = tpu.matmul %0, %1, %cst {dimension_numbers = #tpu.dot_dimension_numbers<[1], [0], [0], [1], [0, 0, 1, 1], [], []>} : vector<8x128xf32>, vector<128x128xf32>, vector<8x128xf32> -> vector<8x128xf32>
    %c0_3 = arith.constant 0 : index
    %c0_4 = arith.constant 0 : index
    %3 = vector.load %arg4[%c0_3, %c0_4] : memref<1x128xf32, #tpu.memory_space<vmem>>, vector<1x128xf32>
    %4 = vector.broadcast %3 : vector<1x128xf32> to vector<8x128xf32>
    %5 = arith.addf %2, %4 : vector<8x128xf32>
    %cst_5 = arith.constant 5.000000e-01 : f32
    %6 = vector.broadcast %cst_5 : f32 to vector<8x128xf32>
    %7 = arith.mulf %6, %5 : vector<8x128xf32>
    %cst_6 = arith.constant 0.707106769 : f32
    %8 = vector.broadcast %cst_6 : f32 to vector<8x128xf32>
    %9 = arith.mulf %5, %8 : vector<8x128xf32>
    %10 = math.erf %9 : vector<8x128xf32>
    %cst_7 = arith.constant 1.000000e+00 : f32
    %11 = vector.broadcast %cst_7 : f32 to vector<8x128xf32>
    %12 = arith.addf %11, %10 : vector<8x128xf32>
    %13 = arith.mulf %7, %12 : vector<8x128xf32>
    %c0_8 = arith.constant 0 : index
    %c0_9 = arith.constant 0 : index
    %14 = vector.load %arg5[%c0_8, %c0_9] : memref<128x128xf32, #tpu.memory_space<vmem>>, vector<128x128xf32>
    %cst_10 = arith.constant dense<0.000000e+00> : vector<8x128xf32>
    %15 = tpu.matmul %13, %14, %cst_10 {dimension_numbers = #tpu.dot_dimension_numbers<[1], [0], [0], [1], [0, 0, 1, 1], [], []>} : vector<8x128xf32>, vector<128x128xf32>, vector<8x128xf32> -> vector<8x128xf32>
    %c0_11 = arith.constant 0 : index
    %c0_12 = arith.constant 0 : index
    %16 = vector.load %arg6[%c0_11, %c0_12] : memref<1x128xf32, #tpu.memory_space<vmem>>, vector<1x128xf32>
    %17 = vector.broadcast %16 : vector<1x128xf32> to vector<8x128xf32>
    %18 = arith.addf %15, %17 : vector<8x128xf32>
    %cst_13 = arith.constant 5.000000e-01 : f32
    %19 = vector.broadcast %cst_13 : f32 to vector<8x128xf32>
    %20 = arith.mulf %19, %18 : vector<8x128xf32>
    %cst_14 = arith.constant 0.707106769 : f32
    %21 = vector.broadcast %cst_14 : f32 to vector<8x128xf32>
    %22 = arith.mulf %18, %21 : vector<8x128xf32>
    %23 = math.erf %22 : vector<8x128xf32>
    %cst_15 = arith.constant 1.000000e+00 : f32
    %24 = vector.broadcast %cst_15 : f32 to vector<8x128xf32>
    %25 = arith.addf %24, %23 : vector<8x128xf32>
    %26 = arith.mulf %20, %25 : vector<8x128xf32>
    %c0_16 = arith.constant 0 : index
    %c0_17 = arith.constant 0 : index
    %27 = vector.load %arg7[%c0_16, %c0_17] : memref<128x128xf32, #tpu.memory_space<vmem>>, vector<128x128xf32>
    %cst_18 = arith.constant dense<0.000000e+00> : vector<8x128xf32>
    %28 = tpu.matmul %26, %27, %cst_18 {dimension_numbers = #tpu.dot_dimension_numbers<[1], [0], [0], [1], [0, 0, 1, 1], [], []>} : vector<8x128xf32>, vector<128x128xf32>, vector<8x128xf32> -> vector<8x128xf32>
    %c0_19 = arith.constant 0 : index
    %c0_20 = arith.constant 0 : index
    %29 = vector.load %arg8[%c0_19, %c0_20] : memref<1x128xf32, #tpu.memory_space<vmem>>, vector<1x128xf32>
    %30 = vector.broadcast %29 : vector<1x128xf32> to vector<8x128xf32>
    %31 = arith.addf %28, %30 : vector<8x128xf32>
    %cst_21 = arith.constant 5.000000e-01 : f32
    %32 = vector.broadcast %cst_21 : f32 to vector<8x128xf32>
    %33 = arith.mulf %32, %31 : vector<8x128xf32>
    %cst_22 = arith.constant 0.707106769 : f32
    %34 = vector.broadcast %cst_22 : f32 to vector<8x128xf32>
    %35 = arith.mulf %31, %34 : vector<8x128xf32>
    %36 = math.erf %35 : vector<8x128xf32>
    %cst_23 = arith.constant 1.000000e+00 : f32
    %37 = vector.broadcast %cst_23 : f32 to vector<8x128xf32>
    %38 = arith.addf %37, %36 : vector<8x128xf32>
    %39 = arith.mulf %33, %38 : vector<8x128xf32>
    %c0_24 = arith.constant 0 : index
    %c0_25 = arith.constant 0 : index
    %40 = vector.load %arg9[%c0_24, %c0_25] : memref<128x256xf32, #tpu.memory_space<vmem>>, vector<128x256xf32>
    %cst_26 = arith.constant dense<0.000000e+00> : vector<8x256xf32>
    %41 = tpu.matmul %39, %40, %cst_26 {dimension_numbers = #tpu.dot_dimension_numbers<[1], [0], [0], [1], [0, 0, 1, 1], [], []>} : vector<8x128xf32>, vector<128x256xf32>, vector<8x256xf32> -> vector<8x256xf32>
    %c0_27 = arith.constant 0 : index
    %c0_28 = arith.constant 0 : index
    %42 = vector.load %arg10[%c0_27, %c0_28] : memref<1x256xf32, #tpu.memory_space<vmem>>, vector<1x256xf32>
    %43 = vector.broadcast %42 : vector<1x256xf32> to vector<8x256xf32>
    %44 = arith.addf %41, %43 : vector<8x256xf32>
    %45 = vector.extract_strided_slice %44 {offsets = [0, 0], sizes = [8, 128], strides = [1, 1]} : vector<8x256xf32> to vector<8x128xf32>
    %46 = vector.extract_strided_slice %44 {offsets = [0, 128], sizes = [8, 128], strides = [1, 1]} : vector<8x256xf32> to vector<8x128xf32>
    %c0_29 = arith.constant 0 : index
    %c0_30 = arith.constant 0 : index
    %47 = vector.load %arg21[%c0_29, %c0_30] : memref<8x128xf32, #tpu.memory_space<vmem>>, vector<8x128xf32>
    tpu.vector_store %arg21[%c0_29, %c0_30], %45 {strides = array<i32>} : memref<8x128xf32, #tpu.memory_space<vmem>>, vector<8x128xf32>,
    %c0_31 = arith.constant 0 : index
    %c0_32 = arith.constant 0 : index
    %48 = vector.load %arg22[%c0_31, %c0_32] : memref<8x128xf32, #tpu.memory_space<vmem>>, vector<8x128xf32>
    tpu.vector_store %arg22[%c0_31, %c0_32], %46 {strides = array<i32>} : memref<8x128xf32, #tpu.memory_space<vmem>>, vector<8x128xf32>,
    %c0_33 = arith.constant 0 : index
    %c0_34 = arith.constant 0 : index
    %49 = vector.load %arg2[%c0_33, %c0_34] : memref<8x128xf32, #tpu.memory_space<vmem>>, vector<8x128xf32>
    %cst_35 = arith.constant 5.000000e-01 : f32
    %50 = vector.broadcast %cst_35 : f32 to vector<8x128xf32>
    %51 = arith.mulf %50, %46 : vector<8x128xf32>
    %52 = math.exp %51 : vector<8x128xf32>
    %53 = arith.mulf %49, %52 : vector<8x128xf32>
    %54 = arith.addf %45, %53 : vector<8x128xf32>
    %c0_36 = arith.constant 0 : index
    %c0_37 = arith.constant 0 : index
    %55 = vector.load %arg19[%c0_36, %c0_37] : memref<8x128xf32, #tpu.memory_space<vmem>>, vector<8x128xf32>
    tpu.vector_store %arg19[%c0_36, %c0_37], %54 {strides = array<i32>} : memref<8x128xf32, #tpu.memory_space<vmem>>, vector<8x128xf32>,
    %c0_38 = arith.constant 0 : index
    %c0_39 = arith.constant 0 : index
    %56 = vector.load %arg11[%c0_38, %c0_39] : memref<128x128xf32, #tpu.memory_space<vmem>>, vector<128x128xf32>
    %cst_40 = arith.constant dense<0.000000e+00> : vector<8x128xf32>
    %57 = tpu.matmul %54, %56, %cst_40 {dimension_numbers = #tpu.dot_dimension_numbers<[1], [0], [0], [1], [0, 0, 1, 1], [], []>} : vector<8x128xf32>, vector<128x128xf32>, vector<8x128xf32> -> vector<8x128xf32>
    %c0_41 = arith.constant 0 : index
    %c0_42 = arith.constant 0 : index
    %58 = vector.load %arg12[%c0_41, %c0_42] : memref<1x128xf32, #tpu.memory_space<vmem>>, vector<1x128xf32>
    %59 = vector.broadcast %58 : vector<1x128xf32> to vector<8x128xf32>
    %60 = arith.addf %57, %59 : vector<8x128xf32>
    %cst_43 = arith.constant 5.000000e-01 : f32
    %61 = vector.broadcast %cst_43 : f32 to vector<8x128xf32>
    %62 = arith.mulf %61, %60 : vector<8x128xf32>
    %cst_44 = arith.constant 0.707106769 : f32
    %63 = vector.broadcast %cst_44 : f32 to vector<8x128xf32>
    %64 = arith.mulf %60, %63 : vector<8x128xf32>
    %65 = math.erf %64 : vector<8x128xf32>
    %cst_45 = arith.constant 1.000000e+00 : f32
    %66 = vector.broadcast %cst_45 : f32 to vector<8x128xf32>
    %67 = arith.addf %66, %65 : vector<8x128xf32>
    %68 = arith.mulf %62, %67 : vector<8x128xf32>
    %c0_46 = arith.constant 0 : index
    %c0_47 = arith.constant 0 : index
    %69 = vector.load %arg13[%c0_46, %c0_47] : memref<128x128xf32, #tpu.memory_space<vmem>>, vector<128x128xf32>
    %cst_48 = arith.constant dense<0.000000e+00> : vector<8x128xf32>
    %70 = tpu.matmul %68, %69, %cst_48 {dimension_numbers = #tpu.dot_dimension_numbers<[1], [0], [0], [1], [0, 0, 1, 1], [], []>} : vector<8x128xf32>, vector<128x128xf32>, vector<8x128xf32> -> vector<8x128xf32>
    %c0_49 = arith.constant 0 : index
    %c0_50 = arith.constant 0 : index
    %71 = vector.load %arg14[%c0_49, %c0_50] : memref<1x128xf32, #tpu.memory_space<vmem>>, vector<1x128xf32>
    %72 = vector.broadcast %71 : vector<1x128xf32> to vector<8x128xf32>
    %73 = arith.addf %70, %72 : vector<8x128xf32>
    %cst_51 = arith.constant 5.000000e-01 : f32
    %74 = vector.broadcast %cst_51 : f32 to vector<8x128xf32>
    %75 = arith.mulf %74, %73 : vector<8x128xf32>
    %cst_52 = arith.constant 0.707106769 : f32
    %76 = vector.broadcast %cst_52 : f32 to vector<8x128xf32>
    %77 = arith.mulf %73, %76 : vector<8x128xf32>
    %78 = math.erf %77 : vector<8x128xf32>
    %cst_53 = arith.constant 1.000000e+00 : f32
    %79 = vector.broadcast %cst_53 : f32 to vector<8x128xf32>
    %80 = arith.addf %79, %78 : vector<8x128xf32>
    %81 = arith.mulf %75, %80 : vector<8x128xf32>
    %c0_54 = arith.constant 0 : index
    %c0_55 = arith.constant 0 : index
    %82 = vector.load %arg15[%c0_54, %c0_55] : memref<128x128xf32, #tpu.memory_space<vmem>>, vector<128x128xf32>
    %cst_56 = arith.constant dense<0.000000e+00> : vector<8x128xf32>
    %83 = tpu.matmul %81, %82, %cst_56 {dimension_numbers = #tpu.dot_dimension_numbers<[1], [0], [0], [1], [0, 0, 1, 1], [], []>} : vector<8x128xf32>, vector<128x128xf32>, vector<8x128xf32> -> vector<8x128xf32>
    %c0_57 = arith.constant 0 : index
    %c0_58 = arith.constant 0 : index
    %84 = vector.load %arg16[%c0_57, %c0_58] : memref<1x128xf32, #tpu.memory_space<vmem>>, vector<1x128xf32>
    %85 = vector.broadcast %84 : vector<1x128xf32> to vector<8x128xf32>
    %86 = arith.addf %83, %85 : vector<8x128xf32>
    %cst_59 = arith.constant 5.000000e-01 : f32
    %87 = vector.broadcast %cst_59 : f32 to vector<8x128xf32>
    %88 = arith.mulf %87, %86 : vector<8x128xf32>
    %cst_60 = arith.constant 0.707106769 : f32
    %89 = vector.broadcast %cst_60 : f32 to vector<8x128xf32>
    %90 = arith.mulf %86, %89 : vector<8x128xf32>
    %91 = math.erf %90 : vector<8x128xf32>
    %cst_61 = arith.constant 1.000000e+00 : f32
    %92 = vector.broadcast %cst_61 : f32 to vector<8x128xf32>
    %93 = arith.addf %92, %91 : vector<8x128xf32>
    %94 = arith.mulf %88, %93 : vector<8x128xf32>
    %c0_62 = arith.constant 0 : index
    %c0_63 = arith.constant 0 : index
    %95 = vector.load %arg17[%c0_62, %c0_63] : memref<128x128xf32, #tpu.memory_space<vmem>>, vector<128x128xf32>
    %cst_64 = arith.constant dense<0.000000e+00> : vector<8x128xf32>
    %96 = tpu.matmul %94, %95, %cst_64 {dimension_numbers = #tpu.dot_dimension_numbers<[1], [0], [0], [1], [0, 0, 1, 1], [], []>} : vector<8x128xf32>, vector<128x128xf32>, vector<8x128xf32> -> vector<8x128xf32>
    %c0_65 = arith.constant 0 : index
    %c0_66 = arith.constant 0 : index
    %97 = vector.load %arg18[%c0_65, %c0_66] : memref<1x128xf32, #tpu.memory_space<vmem>>, vector<1x128xf32>
    %98 = vector.broadcast %97 : vector<1x128xf32> to vector<8x128xf32>
    %99 = arith.addf %96, %98 : vector<8x128xf32>
    %c0_67 = arith.constant 0 : index
    %c0_68 = arith.constant 0 : index
    %100 = vector.load %arg20[%c0_67, %c0_68] : memref<8x128xf32, #tpu.memory_space<vmem>>, vector<8x128xf32>
    tpu.vector_store %arg20[%c0_67, %c0_68], %99 {strides = array<i32>} : memref<8x128xf32, #tpu.memory_space<vmem>>, vector<8x128xf32>,
    return
  }
  func.func @transform_0(%arg0: i32) -> (i32, i32) {
    %c0_i32 = arith.constant 0 : i32
    %c0_i32_0 = arith.constant 0 : i32
    return %arg0, %c0_i32 : i32, i32
  }
  func.func @transform_1(%arg0: i32) -> (i32, i32) {
    %c0_i32 = arith.constant 0 : i32
    %c0_i32_0 = arith.constant 0 : i32
    return %arg0, %c0_i32 : i32, i32
  }
  func.func @transform_2(%arg0: i32) -> (i32, i32) {
    %c0_i32 = arith.constant 0 : i32
    %c0_i32_0 = arith.constant 0 : i32
    %c0_i32_1 = arith.constant 0 : i32
    return %c0_i32, %c0_i32_0 : i32, i32
  }
  func.func @transform_3(%arg0: i32) -> (i32, i32) {
    %c0_i32 = arith.constant 0 : i32
    %c0_i32_0 = arith.constant 0 : i32
    %c0_i32_1 = arith.constant 0 : i32
    return %c0_i32, %c0_i32_0 : i32, i32
  }
  func.func @transform_4(%arg0: i32) -> (i32, i32) {
    %c0_i32 = arith.constant 0 : i32
    %c0_i32_0 = arith.constant 0 : i32
    %c0_i32_1 = arith.constant 0 : i32
    return %c0_i32, %c0_i32_0 : i32, i32
  }
  func.func @transform_5(%arg0: i32) -> (i32, i32) {
    %c0_i32 = arith.constant 0 : i32
    %c0_i32_0 = arith.constant 0 : i32
    %c0_i32_1 = arith.constant 0 : i32
    return %c0_i32, %c0_i32_0 : i32, i32
  }
  func.func @transform_6(%arg0: i32) -> (i32, i32) {
    %c0_i32 = arith.constant 0 : i32
    %c0_i32_0 = arith.constant 0 : i32
    %c0_i32_1 = arith.constant 0 : i32
    return %c0_i32, %c0_i32_0 : i32, i32
  }
  func.func @transform_7(%arg0: i32) -> (i32, i32) {
    %c0_i32 = arith.constant 0 : i32
    %c0_i32_0 = arith.constant 0 : i32
    %c0_i32_1 = arith.constant 0 : i32
    return %c0_i32, %c0_i32_0 : i32, i32
  }
  func.func @transform_8(%arg0: i32) -> (i32, i32) {
    %c0_i32 = arith.constant 0 : i32
    %c0_i32_0 = arith.constant 0 : i32
    %c0_i32_1 = arith.constant 0 : i32
    return %c0_i32, %c0_i32_0 : i32, i32
  }
  func.func @transform_9(%arg0: i32) -> (i32, i32) {
    %c0_i32 = arith.constant 0 : i32
    %c0_i32_0 = arith.constant 0 : i32
    %c0_i32_1 = arith.constant 0 : i32
    return %c0_i32, %c0_i32_0 : i32, i32
  }
  func.func @transform_10(%arg0: i32) -> (i32, i32) {
    %c0_i32 = arith.constant 0 : i32
    %c0_i32_0 = arith.constant 0 : i32
    %c0_i32_1 = arith.constant 0 : i32
    return %c0_i32, %c0_i32_0 : i32, i32
  }
  func.func @transform_11(%arg0: i32) -> (i32, i32) {
    %c0_i32 = arith.constant 0 : i32
    %c0_i32_0 = arith.constant 0 : i32
    %c0_i32_1 = arith.constant 0 : i32
    return %c0_i32, %c0_i32_0 : i32, i32
  }
  func.func @transform_12(%arg0: i32) -> (i32, i32) {
    %c0_i32 = arith.constant 0 : i32
    %c0_i32_0 = arith.constant 0 : i32
    %c0_i32_1 = arith.constant 0 : i32
    return %c0_i32, %c0_i32_0 : i32, i32
  }
  func.func @transform_13(%arg0: i32) -> (i32, i32) {
    %c0_i32 = arith.constant 0 : i32
    %c0_i32_0 = arith.constant 0 : i32
    %c0_i32_1 = arith.constant 0 : i32
    return %c0_i32, %c0_i32_0 : i32, i32
  }
  func.func @transform_14(%arg0: i32) -> (i32, i32) {
    %c0_i32 = arith.constant 0 : i32
    %c0_i32_0 = arith.constant 0 : i32
    %c0_i32_1 = arith.constant 0 : i32
    return %c0_i32, %c0_i32_0 : i32, i32
  }
  func.func @transform_15(%arg0: i32) -> (i32, i32) {
    %c0_i32 = arith.constant 0 : i32
    %c0_i32_0 = arith.constant 0 : i32
    %c0_i32_1 = arith.constant 0 : i32
    return %c0_i32, %c0_i32_0 : i32, i32
  }
  func.func @transform_16(%arg0: i32) -> (i32, i32) {
    %c0_i32 = arith.constant 0 : i32
    %c0_i32_0 = arith.constant 0 : i32
    %c0_i32_1 = arith.constant 0 : i32
    return %c0_i32, %c0_i32_0 : i32, i32
  }
  func.func @transform_17(%arg0: i32) -> (i32, i32) {
    %c0_i32 = arith.constant 0 : i32
    %c0_i32_0 = arith.constant 0 : i32
    %c0_i32_1 = arith.constant 0 : i32
    return %c0_i32, %c0_i32_0 : i32, i32
  }
  func.func @transform_18(%arg0: i32) -> (i32, i32) {
    %c0_i32 = arith.constant 0 : i32
    %c0_i32_0 = arith.constant 0 : i32
    return %arg0, %c0_i32 : i32, i32
  }
  func.func @transform_19(%arg0: i32) -> (i32, i32) {
    %c0_i32 = arith.constant 0 : i32
    %c0_i32_0 = arith.constant 0 : i32
    return %arg0, %c0_i32 : i32, i32
  }
  func.func @transform_20(%arg0: i32) -> (i32, i32) {
    %c0_i32 = arith.constant 0 : i32
    %c0_i32_0 = arith.constant 0 : i32
    return %arg0, %c0_i32 : i32, i32
  }
  func.func @transform_21(%arg0: i32) -> (i32, i32) {
    %c0_i32 = arith.constant 0 : i32
    %c0_i32_0 = arith.constant 0 : i32
    return %arg0, %c0_i32 : i32, i32
  }
}

</mosaic_0001>

<llo_original>
// kernel: tpu_custom_call.1
$region0: #{tpu_custom_call.1}
  #allocation0 [shape = 'u32[]', space=smem, size = 0x4, offset = 0x4, fixed_abs, tag = 'smem constant byte address 0x4 - core index']
  #allocation1 [shape = 'u32[144,128]{1,0:T(1,128)}', space=vmem, size = 0x12000, scoped, tag = 'internal scratch']
  %s0 = inlined_call_operand.hbm [shape: f32[8,128], index: 0, kind: input, shape index: {}]
  %s1 = inlined_call_operand.hbm [shape: f32[8,128], index: 1, kind: input, shape index: {}]
  %s2 = inlined_call_operand.hbm [shape: f32[128,128], index: 2, kind: input, shape index: {}]
  %s3 = inlined_call_operand.vmem [shape: f32[1,128], index: 3, kind: input, shape index: {}]
  %s4 = inlined_call_operand.hbm [shape: f32[128,128], index: 4, kind: input, shape index: {}]
  %s5 = inlined_call_operand.vmem [shape: f32[1,128], index: 5, kind: input, shape index: {}]
  %s6 = inlined_call_operand.hbm [shape: f32[128,128], index: 6, kind: input, shape index: {}]
  %s7 = inlined_call_operand.vmem [shape: f32[1,128], index: 7, kind: input, shape index: {}]
  %s8 = inlined_call_operand.hbm [shape: f32[128,256], index: 8, kind: input, shape index: {}]
  %s9 = inlined_call_operand.vmem [shape: f32[1,256], index: 9, kind: input, shape index: {}]
  %s10 = inlined_call_operand.hbm [shape: f32[128,128], index: 10, kind: input, shape index: {}]
  %s11 = inlined_call_operand.vmem [shape: f32[1,128], index: 11, kind: input, shape index: {}]
  %s12 = inlined_call_operand.hbm [shape: f32[128,128], index: 12, kind: input, shape index: {}]
  %s13 = inlined_call_operand.vmem [shape: f32[1,128], index: 13, kind: input, shape index: {}]
  %s14 = inlined_call_operand.hbm [shape: f32[128,128], index: 14, kind: input, shape index: {}]
  %s15 = inlined_call_operand.vmem [shape: f32[1,128], index: 15, kind: input, shape index: {}]
  %s16 = inlined_call_operand.hbm [shape: f32[128,128], index: 16, kind: input, shape index: {}]
  %s17 = inlined_call_operand.vmem [shape: f32[1,128], index: 17, kind: input, shape index: {}]
  %s18 = inlined_call_operand.hbm [shape: f32[8,128], index: 18, kind: output, shape index: {0}]
  %s19 = inlined_call_operand.hbm [shape: f32[8,128], index: 19, kind: output, shape index: {1}]
  %s20 = inlined_call_operand.hbm [shape: f32[8,128], index: 20, kind: output, shape index: {2}]
  %s21 = inlined_call_operand.hbm [shape: f32[8,128], index: 21, kind: output, shape index: {3}]
  %22 = xla_tuple %s18, %s19, %s20, %s21
  %s23 = sld [smem:[#allocation0]]
  $region146: #{tpu_custom_call.1} parent=0
    _
  %s25 = ssub.s32 1, %s23
  %s26 = scalar_select 0, %s25, %s23
  $region1: #{tpu_custom_call.1} parent=0
    #allocation2 [shape = 'u8[4096]{0}', space=vmem, size = 0x1000, scoped, tag = 'input window, operand 0, single buffered']
    #allocation3 [shape = 's32[1]{0}', space=sflag, size = 0x4, scoped, tag = 'scoped memory for tpu_custom_call.1']
    #allocation4 [shape = 's32[1]{0}', space=sflag, size = 0x4, scoped, tag = 'scoped memory for tpu_custom_call.1']
    #allocation5 [shape = 'u8[4096]{0}', space=vmem, size = 0x1000, scoped, tag = 'input window, operand 1, single buffered']
    #allocation6 [shape = 's32[1]{0}', space=sflag, size = 0x4, scoped, tag = 'scoped memory for tpu_custom_call.1']
    #allocation7 [shape = 'u8[65536]{0}', space=vmem, size = 0x10000, scoped, tag = 'input window, operand 2, single buffered']
    #allocation8 [shape = 'u8[65536]{0}', space=vmem, size = 0x10000, scoped, tag = 'input window, operand 4, single buffered']
    #allocation9 [shape = 's32[1]{0}', space=sflag, size = 0x4, scoped, tag = 'scoped memory for tpu_custom_call.1']
    #allocation10 [shape = 'u8[65536]{0}', space=vmem, size = 0x10000, scoped, tag = 'input window, operand 6, single buffered']
    #allocation11 [shape = 'u8[131072]{0}', space=vmem, size = 0x20000, scoped, tag = 'input window, operand 8, single buffered']
    #allocation12 [shape = 's32[1]{0}', space=sflag, size = 0x4, scoped, tag = 'scoped memory for tpu_custom_call.1']
    #allocation13 [shape = 'u8[65536]{0}', space=vmem, size = 0x10000, scoped, tag = 'input window, operand 10, single buffered']
    #allocation14 [shape = 'u8[65536]{0}', space=vmem, size = 0x10000, scoped, tag = 'input window, operand 12, single buffered']
    #allocation15 [shape = 's32[1]{0}', space=sflag, size = 0x4, scoped, tag = 'scoped memory for tpu_custom_call.1']
    #allocation16 [shape = 'u8[65536]{0}', space=vmem, size = 0x10000, scoped, tag = 'input window, operand 14, single buffered']
    #allocation17 [shape = 'u8[65536]{0}', space=vmem, size = 0x10000, scoped, tag = 'input window, operand 16, single buffered']
    #allocation18 [shape = 's32[1]{0}', space=sflag, size = 0x4, scoped, tag = 'scoped memory for tpu_custom_call.1']
    #allocation19 [shape = 'u8[4096]{0}', space=vmem, size = 0x1000, scoped, tag = 'output window, operand 0, single buffered']
    #allocation20 [shape = 'u8[4096]{0}', space=vmem, size = 0x1000, scoped, tag = 'output window, operand 1, single buffered']
    #allocation21 [shape = 's32[1]{0}', space=sflag, size = 0x4, scoped, tag = 'scoped memory for tpu_custom_call.1']
    #allocation22 [shape = 'u8[4096]{0}', space=vmem, size = 0x1000, scoped, tag = 'output window, operand 2, single buffered']
    #allocation23 [shape = 'u8[4096]{0}', space=vmem, size = 0x1000, scoped, tag = 'output window, operand 3, single buffered']
    #allocation24 [shape = 's32[1]{0}', space=sflag, size = 0x4, scoped, tag = 'scoped memory for tpu_custom_call.1']
    %27 = vsyncpa [#allocation3], 0
    %28 = vsyncpa [#allocation6], 0
    %29 = vsyncpa [#allocation9], 0
    %30 = vsyncpa [#allocation12], 0
    %31 = vsyncpa [#allocation15], 0
    %32 = vsyncpa [#allocation18], 0
    %33 = vsyncpa [#allocation4], 0
    %34 = vsyncpa [#allocation21], 0
    %35 = vsyncpa [#allocation24], 0
    // Predicated region
    $region2: #{tpu_custom_call.1} parent=1 // pred_check
      _
    $region3: #{tpu_custom_call.1} parent=1 // pred_check_branch
      %37 = sbr.rel (0) target = $region5
    $region4: #{tpu_custom_call.1} parent=1 // pred_region
      %s39 = ssub.s32 128, 128
      %40 = vsyncadd [#allocation3], %s39
      %s42 = sshll.u32 [#allocation2], 4
      %s43 = int_to_ptr.vmem [resolvable:$true] %s42
      %45 = dma.hbm_to_vmem [thread:$0]  %s0, 128, %s43, [#allocation3]
    $region5: #{tpu_custom_call.1} parent=1 // pred_fallthru
      _
    // Predicated region
    $region6: #{tpu_custom_call.1} parent=1 // pred_check
      _
    $region7: #{tpu_custom_call.1} parent=1 // pred_check_branch
      %47 = sbr.rel (0) target = $region9
    $region8: #{tpu_custom_call.1} parent=1 // pred_region
      %s49 = ssub.s32 128, 128
      %50 = vsyncadd [#allocation6], %s49
      %s52 = sshll.u32 [#allocation5], 4
      %s53 = int_to_ptr.vmem [resolvable:$true] %s52
      %55 = dma.hbm_to_vmem [thread:$0]  %s1, 128, %s53, [#allocation6]
    $region9: #{tpu_custom_call.1} parent=1 // pred_fallthru
      _
    // Predicated region
    $region10: #{tpu_custom_call.1} parent=1 // pred_check
      _
    $region11: #{tpu_custom_call.1} parent=1 // pred_check_branch
      %57 = sbr.rel (0) target = $region13
    $region12: #{tpu_custom_call.1} parent=1 // pred_region
      %s59 = ssub.s32 2048, 2048
      %60 = vsyncadd [#allocation6], %s59
      %s61 = sshll.u32 [#allocation7], 4
      %s62 = int_to_ptr.vmem [resolvable:$true] %s61
      %67 = dma.hbm_to_vmem [thread:$0]  %s2, 2048, %s62, [#allocation6], 128, 128, 8
    $region13: #{tpu_custom_call.1} parent=1 // pred_fallthru
      _
    // Predicated region
    $region14: #{tpu_custom_call.1} parent=1 // pred_check
      _
    $region15: #{tpu_custom_call.1} parent=1 // pred_check_branch
      %69 = sbr.rel (0) target = $region17
    $region16: #{tpu_custom_call.1} parent=1 // pred_region
      _
    $region17: #{tpu_custom_call.1} parent=1 // pred_fallthru
      _
    // Predicated region
    $region18: #{tpu_custom_call.1} parent=1 // pred_check
      _
    $region19: #{tpu_custom_call.1} parent=1 // pred_check_branch
      %71 = sbr.rel (0) target = $region21
    $region20: #{tpu_custom_call.1} parent=1 // pred_region
      %s73 = ssub.s32 2048, 2048
      %74 = vsyncadd [#allocation9], %s73
      %s75 = sshll.u32 [#allocation8], 4
      %s76 = int_to_ptr.vmem [resolvable:$true] %s75
      %81 = dma.hbm_to_vmem [thread:$0]  %s4, 2048, %s76, [#allocation9], 128, 128, 8
    $region21: #{tpu_custom_call.1} parent=1 // pred_fallthru
      _
    // Predicated region
    $region22: #{tpu_custom_call.1} parent=1 // pred_check
      _
    $region23: #{tpu_custom_call.1} parent=1 // pred_check_branch
      %83 = sbr.rel (0) target = $region25
    $region24: #{tpu_custom_call.1} parent=1 // pred_region
      _
    $region25: #{tpu_custom_call.1} parent=1 // pred_fallthru
      _
    // Predicated region
    $region26: #{tpu_custom_call.1} parent=1 // pred_check
      _
    $region27: #{tpu_custom_call.1} parent=1 // pred_check_branch
      %85 = sbr.rel (0) target = $region29
    $region28: #{tpu_custom_call.1} parent=1 // pred_region
      %s87 = ssub.s32 2048, 2048
      %88 = vsyncadd [#allocation9], %s87
      %s89 = sshll.u32 [#allocation10], 4
      %s90 = int_to_ptr.vmem [resolvable:$true] %s89
      %95 = dma.hbm_to_vmem [thread:$0]  %s6, 2048, %s90, [#allocation9], 128, 128, 8
    $region29: #{tpu_custom_call.1} parent=1 // pred_fallthru
      _
    // Predicated region
    $region30: #{tpu_custom_call.1} parent=1 // pred_check
      _
    $region31: #{tpu_custom_call.1} parent=1 // pred_check_branch
      %97 = sbr.rel (0) target = $region33
    $region32: #{tpu_custom_call.1} parent=1 // pred_region
      _
    $region33: #{tpu_custom_call.1} parent=1 // pred_fallthru
      _
    // Predicated region
    $region34: #{tpu_custom_call.1} parent=1 // pred_check
      _
    $region35: #{tpu_custom_call.1} parent=1 // pred_check_branch
      %99 = sbr.rel (0) target = $region37
    $region36: #{tpu_custom_call.1} parent=1 // pred_region
      %s101 = ssub.s32 4096, 4096
      %102 = vsyncadd [#allocation12], %s101
      %s103 = sshll.u32 [#allocation11], 4
      %s104 = int_to_ptr.vmem [resolvable:$true] %s103
      %109 = dma.hbm_to_vmem [thread:$0]  %s8, 4096, %s104, [#allocation12], 256, 256, 16
    $region37: #{tpu_custom_call.1} parent=1 // pred_fallthru
      _
    // Predicated region
    $region38: #{tpu_custom_call.1} parent=1 // pred_check
      _
    $region39: #{tpu_custom_call.1} parent=1 // pred_check_branch
      %111 = sbr.rel (0) target = $region41
    $region40: #{tpu_custom_call.1} parent=1 // pred_region
      _
    $region41: #{tpu_custom_call.1} parent=1 // pred_fallthru
      _
    // Predicated region
    $region42: #{tpu_custom_call.1} parent=1 // pred_check
      _
    $region43: #{tpu_custom_call.1} parent=1 // pred_check_branch
      %113 = sbr.rel (0) target = $region45
    $region44: #{tpu_custom_call.1} parent=1 // pred_region
      %s115 = ssub.s32 2048, 2048
      %116 = vsyncadd [#allocation12], %s115
      %s117 = sshll.u32 [#allocation13], 4
      %s118 = int_to_ptr.vmem [resolvable:$true] %s117
      %123 = dma.hbm_to_vmem [thread:$0]  %s10, 2048, %s118, [#allocation12], 128, 128, 8
    $region45: #{tpu_custom_call.1} parent=1 // pred_fallthru
      _
    // Predicated region
    $region46: #{tpu_custom_call.1} parent=1 // pred_check
      _
    $region47: #{tpu_custom_call.1} parent=1 // pred_check_branch
      %125 = sbr.rel (0) target = $region49
    $region48: #{tpu_custom_call.1} parent=1 // pred_region
      _
    $region49: #{tpu_custom_call.1} parent=1 // pred_fallthru
      _
    // Predicated region
    $region50: #{tpu_custom_call.1} parent=1 // pred_check
      _
    $region51: #{tpu_custom_call.1} parent=1 // pred_check_branch
      %127 = sbr.rel (0) target = $region53
    $region52: #{tpu_custom_call.1} parent=1 // pred_region
      %s129 = ssub.s32 2048, 2048
      %130 = vsyncadd [#allocation15], %s129
      %s131 = sshll.u32 [#allocation14], 4
      %s132 = int_to_ptr.vmem [resolvable:$true] %s131
      %137 = dma.hbm_to_vmem [thread:$0]  %s12, 2048, %s132, [#allocation15], 128, 128, 8
    $region53: #{tpu_custom_call.1} parent=1 // pred_fallthru
      _
    // Predicated region
    $region54: #{tpu_custom_call.1} parent=1 // pred_check
      _
    $region55: #{tpu_custom_call.1} parent=1 // pred_check_branch
      %139 = sbr.rel (0) target = $region57
    $region56: #{tpu_custom_call.1} parent=1 // pred_region
      _
    $region57: #{tpu_custom_call.1} parent=1 // pred_fallthru
      _
    // Predicated region
    $region58: #{tpu_custom_call.1} parent=1 // pred_check
      _
    $region59: #{tpu_custom_call.1} parent=1 // pred_check_branch
      %141 = sbr.rel (0) target = $region61
    $region60: #{tpu_custom_call.1} parent=1 // pred_region
      %s143 = ssub.s32 2048, 2048
      %144 = vsyncadd [#allocation15], %s143
      %s145 = sshll.u32 [#allocation16], 4
      %s146 = int_to_ptr.vmem [resolvable:$true] %s145
      %151 = dma.hbm_to_vmem [thread:$0]  %s14, 2048, %s146, [#allocation15], 128, 128, 8
    $region61: #{tpu_custom_call.1} parent=1 // pred_fallthru
      _
    // Predicated region
    $region62: #{tpu_custom_call.1} parent=1 // pred_check
      _
    $region63: #{tpu_custom_call.1} parent=1 // pred_check_branch
      %153 = sbr.rel (0) target = $region65
    $region64: #{tpu_custom_call.1} parent=1 // pred_region
      _
    $region65: #{tpu_custom_call.1} parent=1 // pred_fallthru
      _
    // Predicated region
    $region66: #{tpu_custom_call.1} parent=1 // pred_check
      _
    $region67: #{tpu_custom_call.1} parent=1 // pred_check_branch
      %155 = sbr.rel (0) target = $region69
    $region68: #{tpu_custom_call.1} parent=1 // pred_region
      %s157 = ssub.s32 2048, 2048
      %158 = vsyncadd [#allocation18], %s157
      %s159 = sshll.u32 [#allocation17], 4
      %s160 = int_to_ptr.vmem [resolvable:$true] %s159
      %165 = dma.hbm_to_vmem [thread:$0]  %s16, 2048, %s160, [#allocation18], 128, 128, 8
    $region69: #{tpu_custom_call.1} parent=1 // pred_fallthru
      _
    // Predicated region
    $region70: #{tpu_custom_call.1} parent=1 // pred_check
      _
    $region71: #{tpu_custom_call.1} parent=1 // pred_check_branch
      %167 = sbr.rel (0) target = $region73
    $region72: #{tpu_custom_call.1} parent=1 // pred_region
      _
    $region73: #{tpu_custom_call.1} parent=1 // pred_fallthru
      _
    // Predicated region
    $region74: #{tpu_custom_call.1} parent=1 // pred_check
      _
    $region75: #{tpu_custom_call.1} parent=1 // pred_check_branch
      %169 = sbr.rel (0) target = $region77
    $region76: #{tpu_custom_call.1} parent=1 // pred_region
      %170 = dma.done [#allocation3], 128
    $region77: #{tpu_custom_call.1} parent=1 // pred_fallthru
      _
    // Predicated region
    $region78: #{tpu_custom_call.1} parent=1 // pred_check
      _
    $region79: #{tpu_custom_call.1} parent=1 // pred_check_branch
      %172 = sbr.rel (0) target = $region81
    $region80: #{tpu_custom_call.1} parent=1 // pred_region
      %173 = dma.done [#allocation6], 128
    $region81: #{tpu_custom_call.1} parent=1 // pred_fallthru
      _
    // Predicated region
    $region82: #{tpu_custom_call.1} parent=1 // pred_check
      _
    $region83: #{tpu_custom_call.1} parent=1 // pred_check_branch
      %175 = sbr.rel (0) target = $region85
    $region84: #{tpu_custom_call.1} parent=1 // pred_region
      %176 = dma.done [#allocation6], 2048
    $region85: #{tpu_custom_call.1} parent=1 // pred_fallthru
      _
    // Predicated region
    $region86: #{tpu_custom_call.1} parent=1 // pred_check
      _
    $region87: #{tpu_custom_call.1} parent=1 // pred_check_branch
      %178 = sbr.rel (0) target = $region89
    $region88: #{tpu_custom_call.1} parent=1 // pred_region
      %179 = dma.done [#allocation9], 2048
    $region89: #{tpu_custom_call.1} parent=1 // pred_fallthru
      _
    // Predicated region
    $region90: #{tpu_custom_call.1} parent=1 // pred_check
      _
    $region91: #{tpu_custom_call.1} parent=1 // pred_check_branch
      %181 = sbr.rel (0) target = $region93
    $region92: #{tpu_custom_call.1} parent=1 // pred_region
      %182 = dma.done [#allocation9], 2048
    $region93: #{tpu_custom_call.1} parent=1 // pred_fallthru
      _
    // Predicated region
    $region94: #{tpu_custom_call.1} parent=1 // pred_check
      _
    $region95: #{tpu_custom_call.1} parent=1 // pred_check_branch
      %184 = sbr.rel (0) target = $region97
    $region96: #{tpu_custom_call.1} parent=1 // pred_region
      %185 = dma.done [#allocation12], 4096
    $region97: #{tpu_custom_call.1} parent=1 // pred_fallthru
      _
    // Predicated region
    $region98: #{tpu_custom_call.1} parent=1 // pred_check
      _
    $region99: #{tpu_custom_call.1} parent=1 // pred_check_branch
      %187 = sbr.rel (0) target = $region101
    $region100: #{tpu_custom_call.1} parent=1 // pred_region
      %188 = dma.done [#allocation12], 2048
    $region101: #{tpu_custom_call.1} parent=1 // pred_fallthru
      _
    // Predicated region
    $region102: #{tpu_custom_call.1} parent=1 // pred_check
      _
    $region103: #{tpu_custom_call.1} parent=1 // pred_check_branch
      %190 = sbr.rel (0) target = $region105
    $region104: #{tpu_custom_call.1} parent=1 // pred_region
      %191 = dma.done [#allocation15], 2048
    $region105: #{tpu_custom_call.1} parent=1 // pred_fallthru
      _
    // Predicated region
    $region106: #{tpu_custom_call.1} parent=1 // pred_check
      _
    $region107: #{tpu_custom_call.1} parent=1 // pred_check_branch
      %193 = sbr.rel (0) target = $region109
    $region108: #{tpu_custom_call.1} parent=1 // pred_region
      %194 = dma.done [#allocation15], 2048
    $region109: #{tpu_custom_call.1} parent=1 // pred_fallthru
      _
    // Predicated region
    $region110: #{tpu_custom_call.1} parent=1 // pred_check
      _
    $region111: #{tpu_custom_call.1} parent=1 // pred_check_branch
      %196 = sbr.rel (0) target = $region113
    $region112: #{tpu_custom_call.1} parent=1 // pred_region
      %197 = dma.done [#allocation18], 2048
    $region113: #{tpu_custom_call.1} parent=1 // pred_fallthru
      _
    %v198 = vld [vmem:[#allocation2] sm:$0xff]
    %v199 = vld [vmem:[#allocation7] sm:$0xff]
    %v200 = vld [vmem:[#allocation7 + $0x8] sm:$0xff]
    %v201 = vld [vmem:[#allocation7 + $0x10] sm:$0xff]
    %v202 = vld [vmem:[#allocation7 + $0x18] sm:$0xff]
    %v203 = vld [vmem:[#allocation7 + $0x20] sm:$0xff]
    %v204 = vld [vmem:[#allocation7 + $0x28] sm:$0xff]
    %v205 = vld [vmem:[#allocation7 + $0x30] sm:$0xff]
    %v206 = vld [vmem:[#allocation7 + $0x38] sm:$0xff]
    %v207 = vld [vmem:[#allocation7 + $0x40] sm:$0xff]
    %v208 = vld [vmem:[#allocation7 + $0x48] sm:$0xff]
    %v209 = vld [vmem:[#allocation7 + $0x50] sm:$0xff]
    %v210 = vld [vmem:[#allocation7 + $0x58] sm:$0xff]
    %v211 = vld [vmem:[#allocation7 + $0x60] sm:$0xff]
    %v212 = vld [vmem:[#allocation7 + $0x68] sm:$0xff]
    %v213 = vld [vmem:[#allocation7 + $0x70] sm:$0xff]
    %v214 = vld [vmem:[#allocation7 + $0x78] sm:$0xff]
    %v215 = vld [vmem:[%s3] sm:$0x1]
    %v217 = vlaneseq
    %v218 = vshrl.u32 %v217, 7
    %v219 = vsub.s32 0, %v218
    %v220 = vrot.slane %v215, %v219
    %222 = vmatprep.subr.mxu0 0.0
    %223 = vmatpush1.msra.mxu0 %v214
    %224 = vmatprep.subr.mxu0 0.0
    %225 = vmatpush1.msra.mxu0 %v213
    %226 = vmatprep.subr.mxu0 0.0
    %227 = vmatpush1.msra.mxu0 %v212
    %228 = vmatprep.subr.mxu0 0.0
    %229 = vmatpush1.msra.mxu0 %v211
    %230 = vmatprep.subr.mxu0 0.0
    %231 = vmatpush1.msra.mxu0 %v210
    %232 = vmatprep.subr.mxu0 0.0
    %233 = vmatpush1.msra.mxu0 %v209
    %234 = vmatprep.subr.mxu0 0.0
    %235 = vmatpush1.msra.mxu0 %v208
    %236 = vmatprep.subr.mxu0 0.0
    %237 = vmatpush1.msra.mxu0 %v207
    %238 = vmatprep.subr.mxu0 0.0
    %239 = vmatpush1.msra.mxu0 %v206
    %240 = vmatprep.subr.mxu0 0.0
    %241 = vmatpush1.msra.mxu0 %v205
    %242 = vmatprep.subr.mxu0 0.0
    %243 = vmatpush1.msra.mxu0 %v204
    %244 = vmatprep.subr.mxu0 0.0
    %245 = vmatpush1.msra.mxu0 %v203
    %246 = vmatprep.subr.mxu0 0.0
    %247 = vmatpush1.msra.mxu0 %v202
    %248 = vmatprep.subr.mxu0 0.0
    %249 = vmatpush1.msra.mxu0 %v201
    %250 = vmatprep.subr.mxu0 0.0
    %251 = vmatpush1.msra.mxu0 %v200
    %252 = vmatprep.subr.mxu0 0.0
    %253 = vmatpush1.msra.mxu0 %v199
    %254 = vmatprep.subr.mxu0 0.0
    %255 = vmatpush2.msra.mxu0 0.0
    %256 = vmatprep.subr.mxu0 0.0
    %257 = vmatpush2.msra.mxu0 0.0
    %258 = vmatprep.subr.mxu0 0.0
    %259 = vmatpush2.msra.mxu0 0.0
    %260 = vmatprep.subr.mxu0 0.0
    %261 = vmatpush2.msra.mxu0 0.0
    %262 = vmatprep.subr.mxu0 0.0
    %263 = vmatpush2.msra.mxu0 0.0
    %264 = vmatprep.subr.mxu0 0.0
    %265 = vmatpush2.msra.mxu0 0.0
    %266 = vmatprep.subr.mxu0 0.0
    %267 = vmatpush2.msra.mxu0 0.0
    %268 = vmatprep.subr.mxu0 0.0
    %269 = vmatpush2.msra.mxu0 0.0
    %270 = vmatprep.subr.mxu0 0.0
    %271 = vmatpush2.msra.mxu0 0.0
    %272 = vmatprep.subr.mxu0 0.0
    %273 = vmatpush2.msra.mxu0 0.0
    %274 = vmatprep.subr.mxu0 0.0
    %275 = vmatpush2.msra.mxu0 0.0
    %276 = vmatprep.subr.mxu0 0.0
    %277 = vmatpush2.msra.mxu0 0.0
    %278 = vmatprep.subr.mxu0 0.0
    %279 = vmatpush2.msra.mxu0 0.0
    %280 = vmatprep.subr.mxu0 0.0
    %281 = vmatpush2.msra.mxu0 0.0
    %282 = vmatprep.subr.mxu0 0.0
    %283 = vmatpush2.msra.mxu0 0.0
    %284 = vmatprep.subr.mxu0 0.0
    %285 = vmatpush2.msra.mxu0 0.0
    %286 = vmatprep.mubr.f32.mxu0 0.0
    %287 = vmatmul.mubr.f32.gmra.mxu0 %v198
    %v288 = vpop.f32.mrf.mxu0
    %v289 = vadd.f32 %v220, %v288
    %v290 = vpop.f32.mrf.mxu0
    %291 = vdwg.mxu0
    %v292 = vmul.f32 %v289, 0.5
    %v293 = vmul.f32 %v289, 0.70710677
    %v294 = verf.f32.pop %v293
    %v295 = vadd.f32 %v294, 1.0
    %v296 = vmul.f32 %v292, %v295
    %v297 = vld [vmem:[#allocation8] sm:$0xff]
    %v298 = vld [vmem:[#allocation8 + $0x8] sm:$0xff]
    %v299 = vld [vmem:[#allocation8 + $0x10] sm:$0xff]
    %v300 = vld [vmem:[#allocation8 + $0x18] sm:$0xff]
    %v301 = vld [vmem:[#allocation8 + $0x20] sm:$0xff]
    %v302 = vld [vmem:[#allocation8 + $0x28] sm:$0xff]
    %v303 = vld [vmem:[#allocation8 + $0x30] sm:$0xff]
    %v304 = vld [vmem:[#allocation8 + $0x38] sm:$0xff]
    %v305 = vld [vmem:[#allocation8 + $0x40] sm:$0xff]
    %v306 = vld [vmem:[#allocation8 + $0x48] sm:$0xff]
    %v307 = vld [vmem:[#allocation8 + $0x50] sm:$0xff]
    %v308 = vld [vmem:[#allocation8 + $0x58] sm:$0xff]
    %v309 = vld [vmem:[#allocation8 + $0x60] sm:$0xff]
    %v310 = vld [vmem:[#allocation8 + $0x68] sm:$0xff]
    %v311 = vld [vmem:[#allocation8 + $0x70] sm:$0xff]
    %v312 = vld [vmem:[#allocation8 + $0x78] sm:$0xff]
    %v313 = vld [vmem:[%s5] sm:$0x1]
    %v315 = vlaneseq
    %v316 = vshrl.u32 %v315, 7
    %v317 = vsub.s32 0, %v316
    %v318 = vrot.slane %v313, %v317
    %320 = vmatprep.subr.mxu0 0.0
    %321 = vmatpush1.msra.mxu0 %v312
    %322 = vmatprep.subr.mxu0 0.0
    %323 = vmatpush1.msra.mxu0 %v311
    %324 = vmatprep.subr.mxu0 0.0
    %325 = vmatpush1.msra.mxu0 %v310
    %326 = vmatprep.subr.mxu0 0.0
    %327 = vmatpush1.msra.mxu0 %v309
    %328 = vmatprep.subr.mxu0 0.0
    %329 = vmatpush1.msra.mxu0 %v308
    %330 = vmatprep.subr.mxu0 0.0
    %331 = vmatpush1.msra.mxu0 %v307
    %332 = vmatprep.subr.mxu0 0.0
    %333 = vmatpush1.msra.mxu0 %v306
    %334 = vmatprep.subr.mxu0 0.0
    %335 = vmatpush1.msra.mxu0 %v305
    %336 = vmatprep.subr.mxu0 0.0
    %337 = vmatpush1.msra.mxu0 %v304
    %338 = vmatprep.subr.mxu0 0.0
    %339 = vmatpush1.msra.mxu0 %v303
    %340 = vmatprep.subr.mxu0 0.0
    %341 = vmatpush1.msra.mxu0 %v302
    %342 = vmatprep.subr.mxu0 0.0
    %343 = vmatpush1.msra.mxu0 %v301
    %344 = vmatprep.subr.mxu0 0.0
    %345 = vmatpush1.msra.mxu0 %v300
    %346 = vmatprep.subr.mxu0 0.0
    %347 = vmatpush1.msra.mxu0 %v299
    %348 = vmatprep.subr.mxu0 0.0
    %349 = vmatpush1.msra.mxu0 %v298
    %350 = vmatprep.subr.mxu0 0.0
    %351 = vmatpush1.msra.mxu0 %v297
    %352 = vmatprep.subr.mxu0 0.0
    %353 = vmatpush2.msra.mxu0 0.0
    %354 = vmatprep.subr.mxu0 0.0
    %355 = vmatpush2.msra.mxu0 0.0
    %356 = vmatprep.subr.mxu0 0.0
    %357 = vmatpush2.msra.mxu0 0.0
    %358 = vmatprep.subr.mxu0 0.0
    %359 = vmatpush2.msra.mxu0 0.0
    %360 = vmatprep.subr.mxu0 0.0
    %361 = vmatpush2.msra.mxu0 0.0
    %362 = vmatprep.subr.mxu0 0.0
    %363 = vmatpush2.msra.mxu0 0.0
    %364 = vmatprep.subr.mxu0 0.0
    %365 = vmatpush2.msra.mxu0 0.0
    %366 = vmatprep.subr.mxu0 0.0
    %367 = vmatpush2.msra.mxu0 0.0
    %368 = vmatprep.subr.mxu0 0.0
    %369 = vmatpush2.msra.mxu0 0.0
    %370 = vmatprep.subr.mxu0 0.0
    %371 = vmatpush2.msra.mxu0 0.0
    %372 = vmatprep.subr.mxu0 0.0
    %373 = vmatpush2.msra.mxu0 0.0
    %374 = vmatprep.subr.mxu0 0.0
    %375 = vmatpush2.msra.mxu0 0.0
    %376 = vmatprep.subr.mxu0 0.0
    %377 = vmatpush2.msra.mxu0 0.0
    %378 = vmatprep.subr.mxu0 0.0
    %379 = vmatpush2.msra.mxu0 0.0
    %380 = vmatprep.subr.mxu0 0.0
    %381 = vmatpush2.msra.mxu0 0.0
    %382 = vmatprep.subr.mxu0 0.0
    %383 = vmatpush2.msra.mxu0 0.0
    %384 = vmatprep.mubr.f32.mxu0 0.0
    %385 = vmatmul.mubr.f32.gmra.mxu0 %v296
    %v386 = vpop.f32.mrf.mxu0
    %v387 = vadd.f32 %v318, %v386
    %v388 = vpop.f32.mrf.mxu0
    %389 = vdwg.mxu0
    %v390 = vmul.f32 %v387, 0.5
    %v391 = vmul.f32 %v387, 0.70710677
    %v392 = verf.f32.pop %v391
    %v393 = vadd.f32 %v392, 1.0
    %v394 = vmul.f32 %v390, %v393
    %v395 = vld [vmem:[#allocation10] sm:$0xff]
    %v396 = vld [vmem:[#allocation10 + $0x8] sm:$0xff]
    %v397 = vld [vmem:[#allocation10 + $0x10] sm:$0xff]
    %v398 = vld [vmem:[#allocation10 + $0x18] sm:$0xff]
    %v399 = vld [vmem:[#allocation10 + $0x20] sm:$0xff]
    %v400 = vld [vmem:[#allocation10 + $0x28] sm:$0xff]
    %v401 = vld [vmem:[#allocation10 + $0x30] sm:$0xff]
    %v402 = vld [vmem:[#allocation10 + $0x38] sm:$0xff]
    %v403 = vld [vmem:[#allocation10 + $0x40] sm:$0xff]
    %v404 = vld [vmem:[#allocation10 + $0x48] sm:$0xff]
    %v405 = vld [vmem:[#allocation10 + $0x50] sm:$0xff]
    %v406 = vld [vmem:[#allocation10 + $0x58] sm:$0xff]
    %v407 = vld [vmem:[#allocation10 + $0x60] sm:$0xff]
    %v408 = vld [vmem:[#allocation10 + $0x68] sm:$0xff]
    %v409 = vld [vmem:[#allocation10 + $0x70] sm:$0xff]
    %v410 = vld [vmem:[#allocation10 + $0x78] sm:$0xff]
    %v411 = vld [vmem:[%s7] sm:$0x1]
    %v413 = vlaneseq
    %v414 = vshrl.u32 %v413, 7
    %v415 = vsub.s32 0, %v414
    %v416 = vrot.slane %v411, %v415
    %418 = vmatprep.subr.mxu0 0.0
    %419 = vmatpush1.msra.mxu0 %v410
    %420 = vmatprep.subr.mxu0 0.0
    %421 = vmatpush1.msra.mxu0 %v409
    %422 = vmatprep.subr.mxu0 0.0
    %423 = vmatpush1.msra.mxu0 %v408
    %424 = vmatprep.subr.mxu0 0.0
    %425 = vmatpush1.msra.mxu0 %v407
    %426 = vmatprep.subr.mxu0 0.0
    %427 = vmatpush1.msra.mxu0 %v406
    %428 = vmatprep.subr.mxu0 0.0
    %429 = vmatpush1.msra.mxu0 %v405
    %430 = vmatprep.subr.mxu0 0.0
    %431 = vmatpush1.msra.mxu0 %v404
    %432 = vmatprep.subr.mxu0 0.0
    %433 = vmatpush1.msra.mxu0 %v403
    %434 = vmatprep.subr.mxu0 0.0
    %435 = vmatpush1.msra.mxu0 %v402
    %436 = vmatprep.subr.mxu0 0.0
    %437 = vmatpush1.msra.mxu0 %v401
    %438 = vmatprep.subr.mxu0 0.0
    %439 = vmatpush1.msra.mxu0 %v400
    %440 = vmatprep.subr.mxu0 0.0
    %441 = vmatpush1.msra.mxu0 %v399
    %442 = vmatprep.subr.mxu0 0.0
    %443 = vmatpush1.msra.mxu0 %v398
    %444 = vmatprep.subr.mxu0 0.0
    %445 = vmatpush1.msra.mxu0 %v397
    %446 = vmatprep.subr.mxu0 0.0
    %447 = vmatpush1.msra.mxu0 %v396
    %448 = vmatprep.subr.mxu0 0.0
    %449 = vmatpush1.msra.mxu0 %v395
    %450 = vmatprep.subr.mxu0 0.0
    %451 = vmatpush2.msra.mxu0 0.0
    %452 = vmatprep.subr.mxu0 0.0
    %453 = vmatpush2.msra.mxu0 0.0
    %454 = vmatprep.subr.mxu0 0.0
    %455 = vmatpush2.msra.mxu0 0.0
    %456 = vmatprep.subr.mxu0 0.0
    %457 = vmatpush2.msra.mxu0 0.0
    %458 = vmatprep.subr.mxu0 0.0
    %459 = vmatpush2.msra.mxu0 0.0
    %460 = vmatprep.subr.mxu0 0.0
    %461 = vmatpush2.msra.mxu0 0.0
    %462 = vmatprep.subr.mxu0 0.0
    %463 = vmatpush2.msra.mxu0 0.0
    %464 = vmatprep.subr.mxu0 0.0
    %465 = vmatpush2.msra.mxu0 0.0
    %466 = vmatprep.subr.mxu0 0.0
    %467 = vmatpush2.msra.mxu0 0.0
    %468 = vmatprep.subr.mxu0 0.0
    %469 = vmatpush2.msra.mxu0 0.0
    %470 = vmatprep.subr.mxu0 0.0
    %471 = vmatpush2.msra.mxu0 0.0
    %472 = vmatprep.subr.mxu0 0.0
    %473 = vmatpush2.msra.mxu0 0.0
    %474 = vmatprep.subr.mxu0 0.0
    %475 = vmatpush2.msra.mxu0 0.0
    %476 = vmatprep.subr.mxu0 0.0
    %477 = vmatpush2.msra.mxu0 0.0
    %478 = vmatprep.subr.mxu0 0.0
    %479 = vmatpush2.msra.mxu0 0.0
    %480 = vmatprep.subr.mxu0 0.0
    %481 = vmatpush2.msra.mxu0 0.0
    %482 = vmatprep.mubr.f32.mxu0 0.0
    %483 = vmatmul.mubr.f32.gmra.mxu0 %v394
    %v484 = vpop.f32.mrf.mxu0
    %v485 = vadd.f32 %v416, %v484
    %v486 = vpop.f32.mrf.mxu0
    %487 = vdwg.mxu0
    %v488 = vmul.f32 %v485, 0.5
    %v489 = vmul.f32 %v485, 0.70710677
    %v490 = verf.f32.pop %v489
    %v491 = vadd.f32 %v490, 1.0
    %v492 = vmul.f32 %v488, %v491
    %v493 = vld [vmem:[#allocation11] sm:$0xff]
    %v494 = vld [vmem:[#allocation11 + $0x8] sm:$0xff]
    %v495 = vld [vmem:[#allocation11 + $0x10] sm:$0xff]
    %v496 = vld [vmem:[#allocation11 + $0x18] sm:$0xff]
    %v497 = vld [vmem:[#allocation11 + $0x20] sm:$0xff]
    %v498 = vld [vmem:[#allocation11 + $0x28] sm:$0xff]
    %v499 = vld [vmem:[#allocation11 + $0x30] sm:$0xff]
    %v500 = vld [vmem:[#allocation11 + $0x38] sm:$0xff]
    %v501 = vld [vmem:[#allocation11 + $0x40] sm:$0xff]
    %v502 = vld [vmem:[#allocation11 + $0x48] sm:$0xff]
    %v503 = vld [vmem:[#allocation11 + $0x50] sm:$0xff]
    %v504 = vld [vmem:[#allocation11 + $0x58] sm:$0xff]
    %v505 = vld [vmem:[#allocation11 + $0x60] sm:$0xff]
    %v506 = vld [vmem:[#allocation11 + $0x68] sm:$0xff]
    %v507 = vld [vmem:[#allocation11 + $0x70] sm:$0xff]
    %v508 = vld [vmem:[#allocation11 + $0x78] sm:$0xff]
    %v509 = vld [vmem:[#allocation11 + $0x80] sm:$0xff]
    %v510 = vld [vmem:[#allocation11 + $0x88] sm:$0xff]
    %v511 = vld [vmem:[#allocation11 + $0x90] sm:$0xff]
    %v512 = vld [vmem:[#allocation11 + $0x98] sm:$0xff]
    %v513 = vld [vmem:[#allocation11 + $0xa0] sm:$0xff]
    %v514 = vld [vmem:[#allocation11 + $0xa8] sm:$0xff]
    %v515 = vld [vmem:[#allocation11 + $0xb0] sm:$0xff]
    %v516 = vld [vmem:[#allocation11 + $0xb8] sm:$0xff]
    %v517 = vld [vmem:[#allocation11 + $0xc0] sm:$0xff]
    %v518 = vld [vmem:[#allocation11 + $0xc8] sm:$0xff]
    %v519 = vld [vmem:[#allocation11 + $0xd0] sm:$0xff]
    %v520 = vld [vmem:[#allocation11 + $0xd8] sm:$0xff]
    %v521 = vld [vmem:[#allocation11 + $0xe0] sm:$0xff]
    %v522 = vld [vmem:[#allocation11 + $0xe8] sm:$0xff]
    %v523 = vld [vmem:[#allocation11 + $0xf0] sm:$0xff]
    %v524 = vld [vmem:[#allocation11 + $0xf8] sm:$0xff]
    %v525 = vld [vmem:[%s9] sm:$0x3]
    %v527 = vlaneseq
    %v528 = vshrl.u32 %v527, 7
    %v529 = vsub.s32 0, %v528
    %v530 = vrot.slane %v525, %v529
    %v531 = vlaneseq
    %v532 = vshrl.u32 %v531, 7
    %v533 = vsub.s32 1, %v532
    %v534 = vrot.slane %v525, %v533
    %537 = vmatprep.subr.mxu0 %v524
    %538 = vmatpush1.msra.mxu0 %v523
    %539 = vmatprep.subr.mxu0 %v522
    %540 = vmatpush1.msra.mxu0 %v521
    %541 = vmatprep.subr.mxu0 %v520
    %542 = vmatpush1.msra.mxu0 %v519
    %543 = vmatprep.subr.mxu0 %v518
    %544 = vmatpush1.msra.mxu0 %v517
    %545 = vmatprep.subr.mxu0 %v516
    %546 = vmatpush1.msra.mxu0 %v515
    %547 = vmatprep.subr.mxu0 %v514
    %548 = vmatpush1.msra.mxu0 %v513
    %549 = vmatprep.subr.mxu0 %v512
    %550 = vmatpush1.msra.mxu0 %v511
    %551 = vmatprep.subr.mxu0 %v510
    %552 = vmatpush1.msra.mxu0 %v509
    %553 = vmatprep.subr.mxu0 %v508
    %554 = vmatpush1.msra.mxu0 %v507
    %555 = vmatprep.subr.mxu0 %v506
    %556 = vmatpush1.msra.mxu0 %v505
    %557 = vmatprep.subr.mxu0 %v504
    %558 = vmatpush1.msra.mxu0 %v503
    %559 = vmatprep.subr.mxu0 %v502
    %560 = vmatpush1.msra.mxu0 %v501
    %561 = vmatprep.subr.mxu0 %v500
    %562 = vmatpush1.msra.mxu0 %v499
    %563 = vmatprep.subr.mxu0 %v498
    %564 = vmatpush1.msra.mxu0 %v497
    %565 = vmatprep.subr.mxu0 %v496
    %566 = vmatpush1.msra.mxu0 %v495
    %567 = vmatprep.subr.mxu0 %v494
    %568 = vmatpush1.msra.mxu0 %v493
    %569 = vmatprep.subr.mxu0 0.0
    %570 = vmatpush2.msra.mxu0 0.0
    %571 = vmatprep.subr.mxu0 0.0
    %572 = vmatpush2.msra.mxu0 0.0
    %573 = vmatprep.subr.mxu0 0.0
    %574 = vmatpush2.msra.mxu0 0.0
    %575 = vmatprep.subr.mxu0 0.0
    %576 = vmatpush2.msra.mxu0 0.0
    %577 = vmatprep.subr.mxu0 0.0
    %578 = vmatpush2.msra.mxu0 0.0
    %579 = vmatprep.subr.mxu0 0.0
    %580 = vmatpush2.msra.mxu0 0.0
    %581 = vmatprep.subr.mxu0 0.0
    %582 = vmatpush2.msra.mxu0 0.0
    %583 = vmatprep.subr.mxu0 0.0
    %584 = vmatpush2.msra.mxu0 0.0
    %585 = vmatprep.subr.mxu0 0.0
    %586 = vmatpush2.msra.mxu0 0.0
    %587 = vmatprep.subr.mxu0 0.0
    %588 = vmatpush2.msra.mxu0 0.0
    %589 = vmatprep.subr.mxu0 0.0
    %590 = vmatpush2.msra.mxu0 0.0
    %591 = vmatprep.subr.mxu0 0.0
    %592 = vmatpush2.msra.mxu0 0.0
    %593 = vmatprep.subr.mxu0 0.0
    %594 = vmatpush2.msra.mxu0 0.0
    %595 = vmatprep.subr.mxu0 0.0
    %596 = vmatpush2.msra.mxu0 0.0
    %597 = vmatprep.subr.mxu0 0.0
    %598 = vmatpush2.msra.mxu0 0.0
    %599 = vmatprep.subr.mxu0 0.0
    %600 = vmatpush2.msra.mxu0 0.0
    %601 = vmatprep.mubr.f32.mxu0 0.0
    %602 = vmatmul.mubr.f32.gmra.mxu0 %v492
    %v603 = vpop.f32.mrf.mxu0
    %v604 = vadd.f32 %v530, %v603
    %v605 = vpop.f32.mrf.mxu0
    %v606 = vadd.f32 %v534, %v605
    %607 = vdwg.mxu0
    %608 = vst [vmem:[#allocation22] sm:$0xff] %v604
    %609 = vst [vmem:[#allocation23] sm:$0xff] %v606
    %v610 = vld [vmem:[#allocation5] sm:$0xff]
    %v611 = vmul.f32 %v606, 0.5
    %v612 = vmul.f32 %v611, 1.442695
    %v613 = vpow.pop %v612
    %v614 = vmul.f32 %v610, %v613
    %v615 = vadd.f32 %v604, %v614
    %616 = vst [vmem:[#allocation19] sm:$0xff] %v615
    %v617 = vld [vmem:[#allocation13] sm:$0xff]
    %v618 = vld [vmem:[#allocation13 + $0x8] sm:$0xff]
    %v619 = vld [vmem:[#allocation13 + $0x10] sm:$0xff]
    %v620 = vld [vmem:[#allocation13 + $0x18] sm:$0xff]
    %v621 = vld [vmem:[#allocation13 + $0x20] sm:$0xff]
    %v622 = vld [vmem:[#allocation13 + $0x28] sm:$0xff]
    %v623 = vld [vmem:[#allocation13 + $0x30] sm:$0xff]
    %v624 = vld [vmem:[#allocation13 + $0x38] sm:$0xff]
    %v625 = vld [vmem:[#allocation13 + $0x40] sm:$0xff]
    %v626 = vld [vmem:[#allocation13 + $0x48] sm:$0xff]
    %v627 = vld [vmem:[#allocation13 + $0x50] sm:$0xff]
    %v628 = vld [vmem:[#allocation13 + $0x58] sm:$0xff]
    %v629 = vld [vmem:[#allocation13 + $0x60] sm:$0xff]
    %v630 = vld [vmem:[#allocation13 + $0x68] sm:$0xff]
    %v631 = vld [vmem:[#allocation13 + $0x70] sm:$0xff]
    %v632 = vld [vmem:[#allocation13 + $0x78] sm:$0xff]
    %v633 = vld [vmem:[%s11] sm:$0x1]
    %v635 = vlaneseq
    %v636 = vshrl.u32 %v635, 7
    %v637 = vsub.s32 0, %v636
    %v638 = vrot.slane %v633, %v637
    %640 = vmatprep.subr.mxu0 0.0
    %641 = vmatpush1.msra.mxu0 %v632
    %642 = vmatprep.subr.mxu0 0.0
    %643 = vmatpush1.msra.mxu0 %v631
    %644 = vmatprep.subr.mxu0 0.0
    %645 = vmatpush1.msra.mxu0 %v630
    %646 = vmatprep.subr.mxu0 0.0
    %647 = vmatpush1.msra.mxu0 %v629
    %648 = vmatprep.subr.mxu0 0.0
    %649 = vmatpush1.msra.mxu0 %v628
    %650 = vmatprep.subr.mxu0 0.0
    %651 = vmatpush1.msra.mxu0 %v627
    %652 = vmatprep.subr.mxu0 0.0
    %653 = vmatpush1.msra.mxu0 %v626
    %654 = vmatprep.subr.mxu0 0.0
    %655 = vmatpush1.msra.mxu0 %v625
    %656 = vmatprep.subr.mxu0 0.0
    %657 = vmatpush1.msra.mxu0 %v624
    %658 = vmatprep.subr.mxu0 0.0
    %659 = vmatpush1.msra.mxu0 %v623
    %660 = vmatprep.subr.mxu0 0.0
    %661 = vmatpush1.msra.mxu0 %v622
    %662 = vmatprep.subr.mxu0 0.0
    %663 = vmatpush1.msra.mxu0 %v621
    %664 = vmatprep.subr.mxu0 0.0
    %665 = vmatpush1.msra.mxu0 %v620
    %666 = vmatprep.subr.mxu0 0.0
    %667 = vmatpush1.msra.mxu0 %v619
    %668 = vmatprep.subr.mxu0 0.0
    %669 = vmatpush1.msra.mxu0 %v618
    %670 = vmatprep.subr.mxu0 0.0
    %671 = vmatpush1.msra.mxu0 %v617
    %672 = vmatprep.subr.mxu0 0.0
    %673 = vmatpush2.msra.mxu0 0.0
    %674 = vmatprep.subr.mxu0 0.0
    %675 = vmatpush2.msra.mxu0 0.0
    %676 = vmatprep.subr.mxu0 0.0
    %677 = vmatpush2.msra.mxu0 0.0
    %678 = vmatprep.subr.mxu0 0.0
    %679 = vmatpush2.msra.mxu0 0.0
    %680 = vmatprep.subr.mxu0 0.0
    %681 = vmatpush2.msra.mxu0 0.0
    %682 = vmatprep.subr.mxu0 0.0
    %683 = vmatpush2.msra.mxu0 0.0
    %684 = vmatprep.subr.mxu0 0.0
    %685 = vmatpush2.msra.mxu0 0.0
    %686 = vmatprep.subr.mxu0 0.0
    %687 = vmatpush2.msra.mxu0 0.0
    %688 = vmatprep.subr.mxu0 0.0
    %689 = vmatpush2.msra.mxu0 0.0
    %690 = vmatprep.subr.mxu0 0.0
    %691 = vmatpush2.msra.mxu0 0.0
    %692 = vmatprep.subr.mxu0 0.0
    %693 = vmatpush2.msra.mxu0 0.0
    %694 = vmatprep.subr.mxu0 0.0
    %695 = vmatpush2.msra.mxu0 0.0
    %696 = vmatprep.subr.mxu0 0.0
    %697 = vmatpush2.msra.mxu0 0.0
    %698 = vmatprep.subr.mxu0 0.0
    %699 = vmatpush2.msra.mxu0 0.0
    %700 = vmatprep.subr.mxu0 0.0
    %701 = vmatpush2.msra.mxu0 0.0
    %702 = vmatprep.subr.mxu0 0.0
    %703 = vmatpush2.msra.mxu0 0.0
    %704 = vmatprep.mubr.f32.mxu0 0.0
    %705 = vmatmul.mubr.f32.gmra.mxu0 %v615
    %v706 = vpop.f32.mrf.mxu0
    %v707 = vadd.f32 %v638, %v706
    %v708 = vpop.f32.mrf.mxu0
    %709 = vdwg.mxu0
    %v710 = vmul.f32 %v707, 0.5
    %v711 = vmul.f32 %v707, 0.70710677
    %v712 = verf.f32.pop %v711
    %v713 = vadd.f32 %v712, 1.0
    %v714 = vmul.f32 %v710, %v713
    %v715 = vld [vmem:[#allocation14] sm:$0xff]
    %v716 = vld [vmem:[#allocation14 + $0x8] sm:$0xff]
    %v717 = vld [vmem:[#allocation14 + $0x10] sm:$0xff]
    %v718 = vld [vmem:[#allocation14 + $0x18] sm:$0xff]
    %v719 = vld [vmem:[#allocation14 + $0x20] sm:$0xff]
    %v720 = vld [vmem:[#allocation14 + $0x28] sm:$0xff]
    %v721 = vld [vmem:[#allocation14 + $0x30] sm:$0xff]
    %v722 = vld [vmem:[#allocation14 + $0x38] sm:$0xff]
    %v723 = vld [vmem:[#allocation14 + $0x40] sm:$0xff]
    %v724 = vld [vmem:[#allocation14 + $0x48] sm:$0xff]
    %v725 = vld [vmem:[#allocation14 + $0x50] sm:$0xff]
    %v726 = vld [vmem:[#allocation14 + $0x58] sm:$0xff]
    %v727 = vld [vmem:[#allocation14 + $0x60] sm:$0xff]
    %v728 = vld [vmem:[#allocation14 + $0x68] sm:$0xff]
    %v729 = vld [vmem:[#allocation14 + $0x70] sm:$0xff]
    %v730 = vld [vmem:[#allocation14 + $0x78] sm:$0xff]
    %v731 = vld [vmem:[%s13] sm:$0x1]
    %v733 = vlaneseq
    %v734 = vshrl.u32 %v733, 7
    %v735 = vsub.s32 0, %v734
    %v736 = vrot.slane %v731, %v735
    %738 = vmatprep.subr.mxu0 0.0
    %739 = vmatpush1.msra.mxu0 %v730
    %740 = vmatprep.subr.mxu0 0.0
    %741 = vmatpush1.msra.mxu0 %v729
    %742 = vmatprep.subr.mxu0 0.0
    %743 = vmatpush1.msra.mxu0 %v728
    %744 = vmatprep.subr.mxu0 0.0
    %745 = vmatpush1.msra.mxu0 %v727
    %746 = vmatprep.subr.mxu0 0.0
    %747 = vmatpush1.msra.mxu0 %v726
    %748 = vmatprep.subr.mxu0 0.0
    %749 = vmatpush1.msra.mxu0 %v725
    %750 = vmatprep.subr.mxu0 0.0
    %751 = vmatpush1.msra.mxu0 %v724
    %752 = vmatprep.subr.mxu0 0.0
    %753 = vmatpush1.msra.mxu0 %v723
    %754 = vmatprep.subr.mxu0 0.0
    %755 = vmatpush1.msra.mxu0 %v722
    %756 = vmatprep.subr.mxu0 0.0
    %757 = vmatpush1.msra.mxu0 %v721
    %758 = vmatprep.subr.mxu0 0.0
    %759 = vmatpush1.msra.mxu0 %v720
    %760 = vmatprep.subr.mxu0 0.0
    %761 = vmatpush1.msra.mxu0 %v719
    %762 = vmatprep.subr.mxu0 0.0
    %763 = vmatpush1.msra.mxu0 %v718
    %764 = vmatprep.subr.mxu0 0.0
    %765 = vmatpush1.msra.mxu0 %v717
    %766 = vmatprep.subr.mxu0 0.0
    %767 = vmatpush1.msra.mxu0 %v716
    %768 = vmatprep.subr.mxu0 0.0
    %769 = vmatpush1.msra.mxu0 %v715
    %770 = vmatprep.subr.mxu0 0.0
    %771 = vmatpush2.msra.mxu0 0.0
    %772 = vmatprep.subr.mxu0 0.0
    %773 = vmatpush2.msra.mxu0 0.0
    %774 = vmatprep.subr.mxu0 0.0
    %775 = vmatpush2.msra.mxu0 0.0
    %776 = vmatprep.subr.mxu0 0.0
    %777 = vmatpush2.msra.mxu0 0.0
    %778 = vmatprep.subr.mxu0 0.0
    %779 = vmatpush2.msra.mxu0 0.0
    %780 = vmatprep.subr.mxu0 0.0
    %781 = vmatpush2.msra.mxu0 0.0
    %782 = vmatprep.subr.mxu0 0.0
    %783 = vmatpush2.msra.mxu0 0.0
    %784 = vmatprep.subr.mxu0 0.0
    %785 = vmatpush2.msra.mxu0 0.0
    %786 = vmatprep.subr.mxu0 0.0
    %787 = vmatpush2.msra.mxu0 0.0
    %788 = vmatprep.subr.mxu0 0.0
    %789 = vmatpush2.msra.mxu0 0.0
    %790 = vmatprep.subr.mxu0 0.0
    %791 = vmatpush2.msra.mxu0 0.0
    %792 = vmatprep.subr.mxu0 0.0
    %793 = vmatpush2.msra.mxu0 0.0
    %794 = vmatprep.subr.mxu0 0.0
    %795 = vmatpush2.msra.mxu0 0.0
    %796 = vmatprep.subr.mxu0 0.0
    %797 = vmatpush2.msra.mxu0 0.0
    %798 = vmatprep.subr.mxu0 0.0
    %799 = vmatpush2.msra.mxu0 0.0
    %800 = vmatprep.subr.mxu0 0.0
    %801 = vmatpush2.msra.mxu0 0.0
    %802 = vmatprep.mubr.f32.mxu0 0.0
    %803 = vmatmul.mubr.f32.gmra.mxu0 %v714
    %v804 = vpop.f32.mrf.mxu0
    %v805 = vadd.f32 %v736, %v804
    %v806 = vpop.f32.mrf.mxu0
    %807 = vdwg.mxu0
    %v808 = vmul.f32 %v805, 0.5
    %v809 = vmul.f32 %v805, 0.70710677
    %v810 = verf.f32.pop %v809
    %v811 = vadd.f32 %v810, 1.0
    %v812 = vmul.f32 %v808, %v811
    %v813 = vld [vmem:[#allocation16] sm:$0xff]
    %v814 = vld [vmem:[#allocation16 + $0x8] sm:$0xff]
    %v815 = vld [vmem:[#allocation16 + $0x10] sm:$0xff]
    %v816 = vld [vmem:[#allocation16 + $0x18] sm:$0xff]
    %v817 = vld [vmem:[#allocation16 + $0x20] sm:$0xff]
    %v818 = vld [vmem:[#allocation16 + $0x28] sm:$0xff]
    %v819 = vld [vmem:[#allocation16 + $0x30] sm:$0xff]
    %v820 = vld [vmem:[#allocation16 + $0x38] sm:$0xff]
    %v821 = vld [vmem:[#allocation16 + $0x40] sm:$0xff]
    %v822 = vld [vmem:[#allocation16 + $0x48] sm:$0xff]
    %v823 = vld [vmem:[#allocation16 + $0x50] sm:$0xff]
    %v824 = vld [vmem:[#allocation16 + $0x58] sm:$0xff]
    %v825 = vld [vmem:[#allocation16 + $0x60] sm:$0xff]
    %v826 = vld [vmem:[#allocation16 + $0x68] sm:$0xff]
    %v827 = vld [vmem:[#allocation16 + $0x70] sm:$0xff]
    %v828 = vld [vmem:[#allocation16 + $0x78] sm:$0xff]
    %v829 = vld [vmem:[%s15] sm:$0x1]
    %v831 = vlaneseq
    %v832 = vshrl.u32 %v831, 7
    %v833 = vsub.s32 0, %v832
    %v834 = vrot.slane %v829, %v833
    %836 = vmatprep.subr.mxu0 0.0
    %837 = vmatpush1.msra.mxu0 %v828
    %838 = vmatprep.subr.mxu0 0.0
    %839 = vmatpush1.msra.mxu0 %v827
    %840 = vmatprep.subr.mxu0 0.0
    %841 = vmatpush1.msra.mxu0 %v826
    %842 = vmatprep.subr.mxu0 0.0
    %843 = vmatpush1.msra.mxu0 %v825
    %844 = vmatprep.subr.mxu0 0.0
    %845 = vmatpush1.msra.mxu0 %v824
    %846 = vmatprep.subr.mxu0 0.0
    %847 = vmatpush1.msra.mxu0 %v823
    %848 = vmatprep.subr.mxu0 0.0
    %849 = vmatpush1.msra.mxu0 %v822
    %850 = vmatprep.subr.mxu0 0.0
    %851 = vmatpush1.msra.mxu0 %v821
    %852 = vmatprep.subr.mxu0 0.0
    %853 = vmatpush1.msra.mxu0 %v820
    %854 = vmatprep.subr.mxu0 0.0
    %855 = vmatpush1.msra.mxu0 %v819
    %856 = vmatprep.subr.mxu0 0.0
    %857 = vmatpush1.msra.mxu0 %v818
    %858 = vmatprep.subr.mxu0 0.0
    %859 = vmatpush1.msra.mxu0 %v817
    %860 = vmatprep.subr.mxu0 0.0
    %861 = vmatpush1.msra.mxu0 %v816
    %862 = vmatprep.subr.mxu0 0.0
    %863 = vmatpush1.msra.mxu0 %v815
    %864 = vmatprep.subr.mxu0 0.0
    %865 = vmatpush1.msra.mxu0 %v814
    %866 = vmatprep.subr.mxu0 0.0
    %867 = vmatpush1.msra.mxu0 %v813
    %868 = vmatprep.subr.mxu0 0.0
    %869 = vmatpush2.msra.mxu0 0.0
    %870 = vmatprep.subr.mxu0 0.0
    %871 = vmatpush2.msra.mxu0 0.0
    %872 = vmatprep.subr.mxu0 0.0
    %873 = vmatpush2.msra.mxu0 0.0
    %874 = vmatprep.subr.mxu0 0.0
    %875 = vmatpush2.msra.mxu0 0.0
    %876 = vmatprep.subr.mxu0 0.0
    %877 = vmatpush2.msra.mxu0 0.0
    %878 = vmatprep.subr.mxu0 0.0
    %879 = vmatpush2.msra.mxu0 0.0
    %880 = vmatprep.subr.mxu0 0.0
    %881 = vmatpush2.msra.mxu0 0.0
    %882 = vmatprep.subr.mxu0 0.0
    %883 = vmatpush2.msra.mxu0 0.0
    %884 = vmatprep.subr.mxu0 0.0
    %885 = vmatpush2.msra.mxu0 0.0
    %886 = vmatprep.subr.mxu0 0.0
    %887 = vmatpush2.msra.mxu0 0.0
    %888 = vmatprep.subr.mxu0 0.0
    %889 = vmatpush2.msra.mxu0 0.0
    %890 = vmatprep.subr.mxu0 0.0
    %891 = vmatpush2.msra.mxu0 0.0
    %892 = vmatprep.subr.mxu0 0.0
    %893 = vmatpush2.msra.mxu0 0.0
    %894 = vmatprep.subr.mxu0 0.0
    %895 = vmatpush2.msra.mxu0 0.0
    %896 = vmatprep.subr.mxu0 0.0
    %897 = vmatpush2.msra.mxu0 0.0
    %898 = vmatprep.subr.mxu0 0.0
    %899 = vmatpush2.msra.mxu0 0.0
    %900 = vmatprep.mubr.f32.mxu0 0.0
    %901 = vmatmul.mubr.f32.gmra.mxu0 %v812
    %v902 = vpop.f32.mrf.mxu0
    %v903 = vadd.f32 %v834, %v902
    %v904 = vpop.f32.mrf.mxu0
    %905 = vdwg.mxu0
    %v906 = vmul.f32 %v903, 0.5
    %v907 = vmul.f32 %v903, 0.70710677
    %v908 = verf.f32.pop %v907
    %v909 = vadd.f32 %v908, 1.0
    %v910 = vmul.f32 %v906, %v909
    %v911 = vld [vmem:[#allocation17] sm:$0xff]
    %v912 = vld [vmem:[#allocation17 + $0x8] sm:$0xff]
    %v913 = vld [vmem:[#allocation17 + $0x10] sm:$0xff]
    %v914 = vld [vmem:[#allocation17 + $0x18] sm:$0xff]
    %v915 = vld [vmem:[#allocation17 + $0x20] sm:$0xff]
    %v916 = vld [vmem:[#allocation17 + $0x28] sm:$0xff]
    %v917 = vld [vmem:[#allocation17 + $0x30] sm:$0xff]
    %v918 = vld [vmem:[#allocation17 + $0x38] sm:$0xff]
    %v919 = vld [vmem:[#allocation17 + $0x40] sm:$0xff]
    %v920 = vld [vmem:[#allocation17 + $0x48] sm:$0xff]
    %v921 = vld [vmem:[#allocation17 + $0x50] sm:$0xff]
    %v922 = vld [vmem:[#allocation17 + $0x58] sm:$0xff]
    %v923 = vld [vmem:[#allocation17 + $0x60] sm:$0xff]
    %v924 = vld [vmem:[#allocation17 + $0x68] sm:$0xff]
    %v925 = vld [vmem:[#allocation17 + $0x70] sm:$0xff]
    %v926 = vld [vmem:[#allocation17 + $0x78] sm:$0xff]
    %v927 = vld [vmem:[%s17] sm:$0x1]
    %v929 = vlaneseq
    %v930 = vshrl.u32 %v929, 7
    %v931 = vsub.s32 0, %v930
    %v932 = vrot.slane %v927, %v931
    %934 = vmatprep.subr.mxu0 0.0
    %935 = vmatpush1.msra.mxu0 %v926
    %936 = vmatprep.subr.mxu0 0.0
    %937 = vmatpush1.msra.mxu0 %v925
    %938 = vmatprep.subr.mxu0 0.0
    %939 = vmatpush1.msra.mxu0 %v924
    %940 = vmatprep.subr.mxu0 0.0
    %941 = vmatpush1.msra.mxu0 %v923
    %942 = vmatprep.subr.mxu0 0.0
    %943 = vmatpush1.msra.mxu0 %v922
    %944 = vmatprep.subr.mxu0 0.0
    %945 = vmatpush1.msra.mxu0 %v921
    %946 = vmatprep.subr.mxu0 0.0
    %947 = vmatpush1.msra.mxu0 %v920
    %948 = vmatprep.subr.mxu0 0.0
    %949 = vmatpush1.msra.mxu0 %v919
    %950 = vmatprep.subr.mxu0 0.0
    %951 = vmatpush1.msra.mxu0 %v918
    %952 = vmatprep.subr.mxu0 0.0
    %953 = vmatpush1.msra.mxu0 %v917
    %954 = vmatprep.subr.mxu0 0.0
    %955 = vmatpush1.msra.mxu0 %v916
    %956 = vmatprep.subr.mxu0 0.0
    %957 = vmatpush1.msra.mxu0 %v915
    %958 = vmatprep.subr.mxu0 0.0
    %959 = vmatpush1.msra.mxu0 %v914
    %960 = vmatprep.subr.mxu0 0.0
    %961 = vmatpush1.msra.mxu0 %v913
    %962 = vmatprep.subr.mxu0 0.0
    %963 = vmatpush1.msra.mxu0 %v912
    %964 = vmatprep.subr.mxu0 0.0
    %965 = vmatpush1.msra.mxu0 %v911
    %966 = vmatprep.subr.mxu0 0.0
    %967 = vmatpush2.msra.mxu0 0.0
    %968 = vmatprep.subr.mxu0 0.0
    %969 = vmatpush2.msra.mxu0 0.0
    %970 = vmatprep.subr.mxu0 0.0
    %971 = vmatpush2.msra.mxu0 0.0
    %972 = vmatprep.subr.mxu0 0.0
    %973 = vmatpush2.msra.mxu0 0.0
    %974 = vmatprep.subr.mxu0 0.0
    %975 = vmatpush2.msra.mxu0 0.0
    %976 = vmatprep.subr.mxu0 0.0
    %977 = vmatpush2.msra.mxu0 0.0
    %978 = vmatprep.subr.mxu0 0.0
    %979 = vmatpush2.msra.mxu0 0.0
    %980 = vmatprep.subr.mxu0 0.0
    %981 = vmatpush2.msra.mxu0 0.0
    %982 = vmatprep.subr.mxu0 0.0
    %983 = vmatpush2.msra.mxu0 0.0
    %984 = vmatprep.subr.mxu0 0.0
    %985 = vmatpush2.msra.mxu0 0.0
    %986 = vmatprep.subr.mxu0 0.0
    %987 = vmatpush2.msra.mxu0 0.0
    %988 = vmatprep.subr.mxu0 0.0
    %989 = vmatpush2.msra.mxu0 0.0
    %990 = vmatprep.subr.mxu0 0.0
    %991 = vmatpush2.msra.mxu0 0.0
    %992 = vmatprep.subr.mxu0 0.0
    %993 = vmatpush2.msra.mxu0 0.0
    %994 = vmatprep.subr.mxu0 0.0
    %995 = vmatpush2.msra.mxu0 0.0
    %996 = vmatprep.subr.mxu0 0.0
    %997 = vmatpush2.msra.mxu0 0.0
    %998 = vmatprep.mubr.f32.mxu0 0.0
    %999 = vmatmul.mubr.f32.gmra.mxu0 %v910
    %v1000 = vpop.f32.mrf.mxu0
    %v1001 = vadd.f32 %v932, %v1000
    %v1002 = vpop.f32.mrf.mxu0
    %1003 = vdwg.mxu0
    %1004 = vst [vmem:[#allocation20] sm:$0xff] %v1001
    // Predicated region
    $region114: #{tpu_custom_call.1} parent=1 // pred_check
      _
    $region115: #{tpu_custom_call.1} parent=1 // pred_check_branch
      %1006 = sbr.rel (0) target = $region117
    $region116: #{tpu_custom_call.1} parent=1 // pred_region
      %s1008 = ssub.s32 128, 128
      %1009 = vsyncadd [#allocation4], %s1008
      %s1011 = sshll.u32 [#allocation19], 4
      %s1012 = int_to_ptr.vmem [resolvable:$true] %s1011
      %1014 = dma.vmem_to_hbm [thread:$0]  %s1012, 128, %s18, [#allocation4]
    $region117: #{tpu_custom_call.1} parent=1 // pred_fallthru
      _
    // Predicated region
    $region118: #{tpu_custom_call.1} parent=1 // pred_check
      _
    $region119: #{tpu_custom_call.1} parent=1 // pred_check_branch
      %1016 = sbr.rel (0) target = $region121
    $region120: #{tpu_custom_call.1} parent=1 // pred_region
      %s1018 = ssub.s32 128, 128
      %1019 = vsyncadd [#allocation21], %s1018
      %s1021 = sshll.u32 [#allocation20], 4
      %s1022 = int_to_ptr.vmem [resolvable:$true] %s1021
      %1024 = dma.vmem_to_hbm [thread:$0]  %s1022, 128, %s19, [#allocation21]
    $region121: #{tpu_custom_call.1} parent=1 // pred_fallthru
      _
    // Predicated region
    $region122: #{tpu_custom_call.1} parent=1 // pred_check
      _
    $region123: #{tpu_custom_call.1} parent=1 // pred_check_branch
      %1026 = sbr.rel (0) target = $region125
    $region124: #{tpu_custom_call.1} parent=1 // pred_region
      %s1028 = ssub.s32 128, 128
      %1029 = vsyncadd [#allocation21], %s1028
      %s1031 = sshll.u32 [#allocation22], 4
      %s1032 = int_to_ptr.vmem [resolvable:$true] %s1031
      %1034 = dma.vmem_to_hbm [thread:$0]  %s1032, 128, %s20, [#allocation21]
    $region125: #{tpu_custom_call.1} parent=1 // pred_fallthru
      _
    // Predicated region
    $region126: #{tpu_custom_call.1} parent=1 // pred_check
      _
    $region127: #{tpu_custom_call.1} parent=1 // pred_check_branch
      %1036 = sbr.rel (0) target = $region129
    $region128: #{tpu_custom_call.1} parent=1 // pred_region
      %s1038 = ssub.s32 128, 128
      %1039 = vsyncadd [#allocation24], %s1038
      %s1041 = sshll.u32 [#allocation23], 4
      %s1042 = int_to_ptr.vmem [resolvable:$true] %s1041
      %1044 = dma.vmem_to_hbm [thread:$0]  %s1042, 128, %s21, [#allocation24]
    $region129: #{tpu_custom_call.1} parent=1 // pred_fallthru
      _
    // Predicated region
    $region130: #{tpu_custom_call.1} parent=1 // pred_check
      _
    $region131: #{tpu_custom_call.1} parent=1 // pred_check_branch
      %1046 = sbr.rel (0) target = $region133
    $region132: #{tpu_custom_call.1} parent=1 // pred_region
      %1047 = dma.done [#allocation4], 128
    $region133: #{tpu_custom_call.1} parent=1 // pred_fallthru
      _
    // Predicated region
    $region134: #{tpu_custom_call.1} parent=1 // pred_check
      _
    $region135: #{tpu_custom_call.1} parent=1 // pred_check_branch
      %1049 = sbr.rel (0) target = $region137
    $region136: #{tpu_custom_call.1} parent=1 // pred_region
      %1050 = dma.done [#allocation21], 128
    $region137: #{tpu_custom_call.1} parent=1 // pred_fallthru
      _
    // Predicated region
    $region138: #{tpu_custom_call.1} parent=1 // pred_check
      _
    $region139: #{tpu_custom_call.1} parent=1 // pred_check_branch
      %1052 = sbr.rel (0) target = $region141
    $region140: #{tpu_custom_call.1} parent=1 // pred_region
      %1053 = dma.done [#allocation21], 128
    $region141: #{tpu_custom_call.1} parent=1 // pred_fallthru
      _
    // Predicated region
    $region142: #{tpu_custom_call.1} parent=1 // pred_check
      _
    $region143: #{tpu_custom_call.1} parent=1 // pred_check_branch
      %1055 = sbr.rel (0) target = $region145
    $region144: #{tpu_custom_call.1} parent=1 // pred_region
      %1056 = dma.done [#allocation24], 128
    $region145: #{tpu_custom_call.1} parent=1 // pred_fallthru
      _
    %1057 = vsyncpa [#allocation3], 1
    %1058 = vsyncpa [#allocation6], 1
    %1059 = vsyncpa [#allocation9], 1
    %1060 = vsyncpa [#allocation12], 1
    %1061 = vsyncpa [#allocation15], 1
    %1062 = vsyncpa [#allocation18], 1
    %1063 = vsyncpa [#allocation4], 1
    %1064 = vsyncpa [#allocation21], 1
    %1065 = vsyncpa [#allocation24], 1

// kernel: tpu_custom_call.1
$region0: #{tpu_custom_call.1}
  #allocation0 [shape = 'u32[]', space=smem, size = 0x4, offset = 0x4, fixed_abs, tag = 'smem constant byte address 0x4 - core index']
  #allocation1 [shape = 'u32[144,128]{1,0:T(1,128)}', space=vmem, size = 0x12000, scoped, tag = 'internal scratch']
  %s0 = inlined_call_operand.hbm [shape: f32[8,128], index: 0, kind: input, shape index: {}]
  %s1 = inlined_call_operand.hbm [shape: f32[8,128], index: 1, kind: input, shape index: {}]
  %s2 = inlined_call_operand.hbm [shape: f32[128,128], index: 2, kind: input, shape index: {}]
  %s3 = inlined_call_operand.vmem [shape: f32[1,128], index: 3, kind: input, shape index: {}]
  %s4 = inlined_call_operand.hbm [shape: f32[128,128], index: 4, kind: input, shape index: {}]
  %s5 = inlined_call_operand.vmem [shape: f32[1,128], index: 5, kind: input, shape index: {}]
  %s6 = inlined_call_operand.hbm [shape: f32[128,128], index: 6, kind: input, shape index: {}]
  %s7 = inlined_call_operand.vmem [shape: f32[1,128], index: 7, kind: input, shape index: {}]
  %s8 = inlined_call_operand.hbm [shape: f32[128,256], index: 8, kind: input, shape index: {}]
  %s9 = inlined_call_operand.vmem [shape: f32[1,256], index: 9, kind: input, shape index: {}]
  %s10 = inlined_call_operand.hbm [shape: f32[128,128], index: 10, kind: input, shape index: {}]
  %s11 = inlined_call_operand.vmem [shape: f32[1,128], index: 11, kind: input, shape index: {}]
  %s12 = inlined_call_operand.hbm [shape: f32[128,128], index: 12, kind: input, shape index: {}]
  %s13 = inlined_call_operand.vmem [shape: f32[1,128], index: 13, kind: input, shape index: {}]
  %s14 = inlined_call_operand.hbm [shape: f32[128,128], index: 14, kind: input, shape index: {}]
  %s15 = inlined_call_operand.vmem [shape: f32[1,128], index: 15, kind: input, shape index: {}]
  %s16 = inlined_call_operand.hbm [shape: f32[128,128], index: 16, kind: input, shape index: {}]
  %s17 = inlined_call_operand.vmem [shape: f32[1,128], index: 17, kind: input, shape index: {}]
  %s18 = inlined_call_operand.hbm [shape: f32[8,128], index: 18, kind: output, shape index: {0}]
  %s19 = inlined_call_operand.hbm [shape: f32[8,128], index: 19, kind: output, shape index: {1}]
  %s20 = inlined_call_operand.hbm [shape: f32[8,128], index: 20, kind: output, shape index: {2}]
  %s21 = inlined_call_operand.hbm [shape: f32[8,128], index: 21, kind: output, shape index: {3}]
  %22 = xla_tuple %s18, %s19, %s20, %s21
  %s23 = sld [smem:[#allocation0]]
  $region146: #{tpu_custom_call.1} parent=0
    _
  %s25 = ssub.s32 1, %s23
  %s26 = scalar_select 0, %s25, %s23
  $region1: #{tpu_custom_call.1} parent=0
    #allocation2 [shape = 'u8[4096]{0}', space=vmem, size = 0x1000, scoped, tag = 'input window, operand 0, single buffered']
    #allocation3 [shape = 's32[1]{0}', space=sflag, size = 0x4, scoped, tag = 'scoped memory for tpu_custom_call.1']
    #allocation4 [shape = 's32[1]{0}', space=sflag, size = 0x4, scoped, tag = 'scoped memory for tpu_custom_call.1']
    #allocation5 [shape = 'u8[4096]{0}', space=vmem, size = 0x1000, scoped, tag = 'input window, operand 1, single buffered']
    #allocation6 [shape = 's32[1]{0}', space=sflag, size = 0x4, scoped, tag = 'scoped memory for tpu_custom_call.1']
    #allocation7 [shape = 'u8[65536]{0}', space=vmem, size = 0x10000, scoped, tag = 'input window, operand 2, single buffered']
    #allocation8 [shape = 'u8[65536]{0}', space=vmem, size = 0x10000, scoped, tag = 'input window, operand 4, single buffered']
    #allocation9 [shape = 's32[1]{0}', space=sflag, size = 0x4, scoped, tag = 'scoped memory for tpu_custom_call.1']
    #allocation10 [shape = 'u8[65536]{0}', space=vmem, size = 0x10000, scoped, tag = 'input window, operand 6, single buffered']
    #allocation11 [shape = 'u8[131072]{0}', space=vmem, size = 0x20000, scoped, tag = 'input window, operand 8, single buffered']
    #allocation12 [shape = 's32[1]{0}', space=sflag, size = 0x4, scoped, tag = 'scoped memory for tpu_custom_call.1']
    #allocation13 [shape = 'u8[65536]{0}', space=vmem, size = 0x10000, scoped, tag = 'input window, operand 10, single buffered']
    #allocation14 [shape = 'u8[65536]{0}', space=vmem, size = 0x10000, scoped, tag = 'input window, operand 12, single buffered']
    #allocation15 [shape = 's32[1]{0}', space=sflag, size = 0x4, scoped, tag = 'scoped memory for tpu_custom_call.1']
    #allocation16 [shape = 'u8[65536]{0}', space=vmem, size = 0x10000, scoped, tag = 'input window, operand 14, single buffered']
    #allocation17 [shape = 'u8[65536]{0}', space=vmem, size = 0x10000, scoped, tag = 'input window, operand 16, single buffered']
    #allocation18 [shape = 's32[1]{0}', space=sflag, size = 0x4, scoped, tag = 'scoped memory for tpu_custom_call.1']
    #allocation19 [shape = 'u8[4096]{0}', space=vmem, size = 0x1000, scoped, tag = 'output window, operand 0, single buffered']
    #allocation20 [shape = 'u8[4096]{0}', space=vmem, size = 0x1000, scoped, tag = 'output window, operand 1, single buffered']
    #allocation21 [shape = 's32[1]{0}', space=sflag, size = 0x4, scoped, tag = 'scoped memory for tpu_custom_call.1']
    #allocation22 [shape = 'u8[4096]{0}', space=vmem, size = 0x1000, scoped, tag = 'output window, operand 2, single buffered']
    #allocation23 [shape = 'u8[4096]{0}', space=vmem, size = 0x1000, scoped, tag = 'output window, operand 3, single buffered']
    #allocation24 [shape = 's32[1]{0}', space=sflag, size = 0x4, scoped, tag = 'scoped memory for tpu_custom_call.1']
    %27 = vsyncpa [#allocation3], 0
    %28 = vsyncpa [#allocation6], 0
    %29 = vsyncpa [#allocation9], 0
    %30 = vsyncpa [#allocation12], 0
    %31 = vsyncpa [#allocation15], 0
    %32 = vsyncpa [#allocation18], 0
    %33 = vsyncpa [#allocation4], 0
    %34 = vsyncpa [#allocation21], 0
    %35 = vsyncpa [#allocation24], 0
    // Predicated region
    $region2: #{tpu_custom_call.1} parent=1 // pred_check
      _
    $region3: #{tpu_custom_call.1} parent=1 // pred_check_branch
      %37 = sbr.rel (0) target = $region5
    $region4: #{tpu_custom_call.1} parent=1 // pred_region
      %s39 = ssub.s32 128, 128
      %40 = vsyncadd [#allocation3], %s39
      %s42 = sshll.u32 [#allocation2], 4
      %s43 = int_to_ptr.vmem [resolvable:$true] %s42
      %45 = dma.hbm_to_vmem [thread:$0]  %s0, 128, %s43, [#allocation3]
    $region5: #{tpu_custom_call.1} parent=1 // pred_fallthru
      _
    // Predicated region
    $region6: #{tpu_custom_call.1} parent=1 // pred_check
      _
    $region7: #{tpu_custom_call.1} parent=1 // pred_check_branch
      %47 = sbr.rel (0) target = $region9
    $region8: #{tpu_custom_call.1} parent=1 // pred_region
      %s49 = ssub.s32 128, 128
      %50 = vsyncadd [#allocation6], %s49
      %s52 = sshll.u32 [#allocation5], 4
      %s53 = int_to_ptr.vmem [resolvable:$true] %s52
      %55 = dma.hbm_to_vmem [thread:$0]  %s1, 128, %s53, [#allocation6]
    $region9: #{tpu_custom_call.1} parent=1 // pred_fallthru
      _
    // Predicated region
    $region10: #{tpu_custom_call.1} parent=1 // pred_check
      _
    $region11: #{tpu_custom_call.1} parent=1 // pred_check_branch
      %57 = sbr.rel (0) target = $region13
    $region12: #{tpu_custom_call.1} parent=1 // pred_region
      %s59 = ssub.s32 2048, 2048
      %60 = vsyncadd [#allocation6], %s59
      %s61 = sshll.u32 [#allocation7], 4
      %s62 = int_to_ptr.vmem [resolvable:$true] %s61
      %67 = dma.hbm_to_vmem [thread:$0]  %s2, 2048, %s62, [#allocation6], 128, 128, 8
    $region13: #{tpu_custom_call.1} parent=1 // pred_fallthru
      _
    // Predicated region
    $region14: #{tpu_custom_call.1} parent=1 // pred_check
      _
    $region15: #{tpu_custom_call.1} parent=1 // pred_check_branch
      %69 = sbr.rel (0) target = $region17
    $region16: #{tpu_custom_call.1} parent=1 // pred_region
      _
    $region17: #{tpu_custom_call.1} parent=1 // pred_fallthru
      _
    // Predicated region
    $region18: #{tpu_custom_call.1} parent=1 // pred_check
      _
    $region19: #{tpu_custom_call.1} parent=1 // pred_check_branch
      %71 = sbr.rel (0) target = $region21
    $region20: #{tpu_custom_call.1} parent=1 // pred_region
      %s73 = ssub.s32 2048, 2048
      %74 = vsyncadd [#allocation9], %s73
      %s75 = sshll.u32 [#allocation8], 4
      %s76 = int_to_ptr.vmem [resolvable:$true] %s75
      %81 = dma.hbm_to_vmem [thread:$0]  %s4, 2048, %s76, [#allocation9], 128, 128, 8
    $region21: #{tpu_custom_call.1} parent=1 // pred_fallthru
      _
    // Predicated region
    $region22: #{tpu_custom_call.1} parent=1 // pred_check
      _
    $region23: #{tpu_custom_call.1} parent=1 // pred_check_branch
      %83 = sbr.rel (0) target = $region25
    $region24: #{tpu_custom_call.1} parent=1 // pred_region
      _
    $region25: #{tpu_custom_call.1} parent=1 // pred_fallthru
      _
    // Predicated region
    $region26: #{tpu_custom_call.1} parent=1 // pred_check
      _
    $region27: #{tpu_custom_call.1} parent=1 // pred_check_branch
      %85 = sbr.rel (0) target = $region29
    $region28: #{tpu_custom_call.1} parent=1 // pred_region
      %s87 = ssub.s32 2048, 2048
      %88 = vsyncadd [#allocation9], %s87
      %s89 = sshll.u32 [#allocation10], 4
      %s90 = int_to_ptr.vmem [resolvable:$true] %s89
      %95 = dma.hbm_to_vmem [thread:$0]  %s6, 2048, %s90, [#allocation9], 128, 128, 8
    $region29: #{tpu_custom_call.1} parent=1 // pred_fallthru
      _
    // Predicated region
    $region30: #{tpu_custom_call.1} parent=1 // pred_check
      _
    $region31: #{tpu_custom_call.1} parent=1 // pred_check_branch
      %97 = sbr.rel (0) target = $region33
    $region32: #{tpu_custom_call.1} parent=1 // pred_region
      _
    $region33: #{tpu_custom_call.1} parent=1 // pred_fallthru
      _
    // Predicated region
    $region34: #{tpu_custom_call.1} parent=1 // pred_check
      _
    $region35: #{tpu_custom_call.1} parent=1 // pred_check_branch
      %99 = sbr.rel (0) target = $region37
    $region36: #{tpu_custom_call.1} parent=1 // pred_region
      %s101 = ssub.s32 4096, 4096
      %102 = vsyncadd [#allocation12], %s101
      %s103 = sshll.u32 [#allocation11], 4
      %s104 = int_to_ptr.vmem [resolvable:$true] %s103
      %109 = dma.hbm_to_vmem [thread:$0]  %s8, 4096, %s104, [#allocation12], 256, 256, 16
    $region37: #{tpu_custom_call.1} parent=1 // pred_fallthru
      _
    // Predicated region
    $region38: #{tpu_custom_call.1} parent=1 // pred_check
      _
    $region39: #{tpu_custom_call.1} parent=1 // pred_check_branch
      %111 = sbr.rel (0) target = $region41
    $region40: #{tpu_custom_call.1} parent=1 // pred_region
      _
    $region41: #{tpu_custom_call.1} parent=1 // pred_fallthru
      _
    // Predicated region
    $region42: #{tpu_custom_call.1} parent=1 // pred_check
      _
    $region43: #{tpu_custom_call.1} parent=1 // pred_check_branch
      %113 = sbr.rel (0) target = $region45
    $region44: #{tpu_custom_call.1} parent=1 // pred_region
      %s115 = ssub.s32 2048, 2048
      %116 = vsyncadd [#allocation12], %s115
      %s117 = sshll.u32 [#allocation13], 4
      %s118 = int_to_ptr.vmem [resolvable:$true] %s117
      %123 = dma.hbm_to_vmem [thread:$0]  %s10, 2048, %s118, [#allocation12], 128, 128, 8
    $region45: #{tpu_custom_call.1} parent=1 // pred_fallthru
      _
    // Predicated region
    $region46: #{tpu_custom_call.1} parent=1 // pred_check
      _
    $region47: #{tpu_custom_call.1} parent=1 // pred_check_branch
      %125 = sbr.rel (0) target = $region49
    $region48: #{tpu_custom_call.1} parent=1 // pred_region
      _
    $region49: #{tpu_custom_call.1} parent=1 // pred_fallthru
      _
    // Predicated region
    $region50: #{tpu_custom_call.1} parent=1 // pred_check
      _
    $region51: #{tpu_custom_call.1} parent=1 // pred_check_branch
      %127 = sbr.rel (0) target = $region53
    $region52: #{tpu_custom_call.1} parent=1 // pred_region
      %s129 = ssub.s32 2048, 2048
      %130 = vsyncadd [#allocation15], %s129
      %s131 = sshll.u32 [#allocation14], 4
      %s132 = int_to_ptr.vmem [resolvable:$true] %s131
      %137 = dma.hbm_to_vmem [thread:$0]  %s12, 2048, %s132, [#allocation15], 128, 128, 8
    $region53: #{tpu_custom_call.1} parent=1 // pred_fallthru
      _
    // Predicated region
    $region54: #{tpu_custom_call.1} parent=1 // pred_check
      _
    $region55: #{tpu_custom_call.1} parent=1 // pred_check_branch
      %139 = sbr.rel (0) target = $region57
    $region56: #{tpu_custom_call.1} parent=1 // pred_region
      _
    $region57: #{tpu_custom_call.1} parent=1 // pred_fallthru
      _
    // Predicated region
    $region58: #{tpu_custom_call.1} parent=1 // pred_check
      _
    $region59: #{tpu_custom_call.1} parent=1 // pred_check_branch
      %141 = sbr.rel (0) target = $region61
    $region60: #{tpu_custom_call.1} parent=1 // pred_region
      %s143 = ssub.s32 2048, 2048
      %144 = vsyncadd [#allocation15], %s143
      %s145 = sshll.u32 [#allocation16], 4
      %s146 = int_to_ptr.vmem [resolvable:$true] %s145
      %151 = dma.hbm_to_vmem [thread:$0]  %s14, 2048, %s146, [#allocation15], 128, 128, 8
    $region61: #{tpu_custom_call.1} parent=1 // pred_fallthru
      _
    // Predicated region
    $region62: #{tpu_custom_call.1} parent=1 // pred_check
      _
    $region63: #{tpu_custom_call.1} parent=1 // pred_check_branch
      %153 = sbr.rel (0) target = $region65
    $region64: #{tpu_custom_call.1} parent=1 // pred_region
      _
    $region65: #{tpu_custom_call.1} parent=1 // pred_fallthru
      _
    // Predicated region
    $region66: #{tpu_custom_call.1} parent=1 // pred_check
      _
    $region67: #{tpu_custom_call.1} parent=1 // pred_check_branch
      %155 = sbr.rel (0) target = $region69
    $region68: #{tpu_custom_call.1} parent=1 // pred_region
      %s157 = ssub.s32 2048, 2048
      %158 = vsyncadd [#allocation18], %s157
      %s159 = sshll.u32 [#allocation17], 4
      %s160 = int_to_ptr.vmem [resolvable:$true] %s159
      %165 = dma.hbm_to_vmem [thread:$0]  %s16, 2048, %s160, [#allocation18], 128, 128, 8
    $region69: #{tpu_custom_call.1} parent=1 // pred_fallthru
      _
    // Predicated region
    $region70: #{tpu_custom_call.1} parent=1 // pred_check
      _
    $region71: #{tpu_custom_call.1} parent=1 // pred_check_branch
      %167 = sbr.rel (0) target = $region73
    $region72: #{tpu_custom_call.1} parent=1 // pred_region
      _
    $region73: #{tpu_custom_call.1} parent=1 // pred_fallthru
      _
    // Predicated region
    $region74: #{tpu_custom_call.1} parent=1 // pred_check
      _
    $region75: #{tpu_custom_call.1} parent=1 // pred_check_branch
      %169 = sbr.rel (0) target = $region77
    $region76: #{tpu_custom_call.1} parent=1 // pred_region
      %170 = dma.done [#allocation3], 128
    $region77: #{tpu_custom_call.1} parent=1 // pred_fallthru
      _
    // Predicated region
    $region78: #{tpu_custom_call.1} parent=1 // pred_check
      _
    $region79: #{tpu_custom_call.1} parent=1 // pred_check_branch
      %172 = sbr.rel (0) target = $region81
    $region80: #{tpu_custom_call.1} parent=1 // pred_region
      %173 = dma.done [#allocation6], 128
    $region81: #{tpu_custom_call.1} parent=1 // pred_fallthru
      _
    // Predicated region
    $region82: #{tpu_custom_call.1} parent=1 // pred_check
      _
    $region83: #{tpu_custom_call.1} parent=1 // pred_check_branch
      %175 = sbr.rel (0) target = $region85
    $region84: #{tpu_custom_call.1} parent=1 // pred_region
      %176 = dma.done [#allocation6], 2048
    $region85: #{tpu_custom_call.1} parent=1 // pred_fallthru
      _
    // Predicated region
    $region86: #{tpu_custom_call.1} parent=1 // pred_check
      _
    $region87: #{tpu_custom_call.1} parent=1 // pred_check_branch
      %178 = sbr.rel (0) target = $region89
    $region88: #{tpu_custom_call.1} parent=1 // pred_region
      %179 = dma.done [#allocation9], 2048
    $region89: #{tpu_custom_call.1} parent=1 // pred_fallthru
      _
    // Predicated region
    $region90: #{tpu_custom_call.1} parent=1 // pred_check
      _
    $region91: #{tpu_custom_call.1} parent=1 // pred_check_branch
      %181 = sbr.rel (0) target = $region93
    $region92: #{tpu_custom_call.1} parent=1 // pred_region
      %182 = dma.done [#allocation9], 2048
    $region93: #{tpu_custom_call.1} parent=1 // pred_fallthru
      _
    // Predicated region
    $region94: #{tpu_custom_call.1} parent=1 // pred_check
      _
    $region95: #{tpu_custom_call.1} parent=1 // pred_check_branch
      %184 = sbr.rel (0) target = $region97
    $region96: #{tpu_custom_call.1} parent=1 // pred_region
      %185 = dma.done [#allocation12], 4096
    $region97: #{tpu_custom_call.1} parent=1 // pred_fallthru
      _
    // Predicated region
    $region98: #{tpu_custom_call.1} parent=1 // pred_check
      _
    $region99: #{tpu_custom_call.1} parent=1 // pred_check_branch
      %187 = sbr.rel (0) target = $region101
    $region100: #{tpu_custom_call.1} parent=1 // pred_region
      %188 = dma.done [#allocation12], 2048
    $region101: #{tpu_custom_call.1} parent=1 // pred_fallthru
      _
    // Predicated region
    $region102: #{tpu_custom_call.1} parent=1 // pred_check
      _
    $region103: #{tpu_custom_call.1} parent=1 // pred_check_branch
      %190 = sbr.rel (0) target = $region105
    $region104: #{tpu_custom_call.1} parent=1 // pred_region
      %191 = dma.done [#allocation15], 2048
    $region105: #{tpu_custom_call.1} parent=1 // pred_fallthru
      _
    // Predicated region
    $region106: #{tpu_custom_call.1} parent=1 // pred_check
      _
    $region107: #{tpu_custom_call.1} parent=1 // pred_check_branch
      %193 = sbr.rel (0) target = $region109
    $region108: #{tpu_custom_call.1} parent=1 // pred_region
      %194 = dma.done [#allocation15], 2048
    $region109: #{tpu_custom_call.1} parent=1 // pred_fallthru
      _
    // Predicated region
    $region110: #{tpu_custom_call.1} parent=1 // pred_check
      _
    $region111: #{tpu_custom_call.1} parent=1 // pred_check_branch
      %196 = sbr.rel (0) target = $region113
    $region112: #{tpu_custom_call.1} parent=1 // pred_region
      %197 = dma.done [#allocation18], 2048
    $region113: #{tpu_custom_call.1} parent=1 // pred_fallthru
      _
    %v198 = vld [vmem:[#allocation2] sm:$0xff]
    %v199 = vld [vmem:[#allocation7] sm:$0xff]
    %v200 = vld [vmem:[#allocation7 + $0x8] sm:$0xff]
    %v201 = vld [vmem:[#allocation7 + $0x10] sm:$0xff]
    %v202 = vld [vmem:[#allocation7 + $0x18] sm:$0xff]
    %v203 = vld [vmem:[#allocation7 + $0x20] sm:$0xff]
    %v204 = vld [vmem:[#allocation7 + $0x28] sm:$0xff]
    %v205 = vld [vmem:[#allocation7 + $0x30] sm:$0xff]
    %v206 = vld [vmem:[#allocation7 + $0x38] sm:$0xff]
    %v207 = vld [vmem:[#allocation7 + $0x40] sm:$0xff]
    %v208 = vld [vmem:[#allocation7 + $0x48] sm:$0xff]
    %v209 = vld [vmem:[#allocation7 + $0x50] sm:$0xff]
    %v210 = vld [vmem:[#allocation7 + $0x58] sm:$0xff]
    %v211 = vld [vmem:[#allocation7 + $0x60] sm:$0xff]
    %v212 = vld [vmem:[#allocation7 + $0x68] sm:$0xff]
    %v213 = vld [vmem:[#allocation7 + $0x70] sm:$0xff]
    %v214 = vld [vmem:[#allocation7 + $0x78] sm:$0xff]
    %v215 = vld [vmem:[%s3] sm:$0x1]
    %v217 = vlaneseq
    %v218 = vshrl.u32 %v217, 7
    %v219 = vsub.s32 0, %v218
    %v220 = vrot.slane %v215, %v219
    %222 = vmatprep.subr.mxu0 0.0
    %223 = vmatpush1.msra.mxu0 %v214
    %224 = vmatprep.subr.mxu0 0.0
    %225 = vmatpush1.msra.mxu0 %v213
    %226 = vmatprep.subr.mxu0 0.0
    %227 = vmatpush1.msra.mxu0 %v212
    %228 = vmatprep.subr.mxu0 0.0
    %229 = vmatpush1.msra.mxu0 %v211
    %230 = vmatprep.subr.mxu0 0.0
    %231 = vmatpush1.msra.mxu0 %v210
    %232 = vmatprep.subr.mxu0 0.0
    %233 = vmatpush1.msra.mxu0 %v209
    %234 = vmatprep.subr.mxu0 0.0
    %235 = vmatpush1.msra.mxu0 %v208
    %236 = vmatprep.subr.mxu0 0.0
    %237 = vmatpush1.msra.mxu0 %v207
    %238 = vmatprep.subr.mxu0 0.0
    %239 = vmatpush1.msra.mxu0 %v206
    %240 = vmatprep.subr.mxu0 0.0
    %241 = vmatpush1.msra.mxu0 %v205
    %242 = vmatprep.subr.mxu0 0.0
    %243 = vmatpush1.msra.mxu0 %v204
    %244 = vmatprep.subr.mxu0 0.0
    %245 = vmatpush1.msra.mxu0 %v203
    %246 = vmatprep.subr.mxu0 0.0
    %247 = vmatpush1.msra.mxu0 %v202
    %248 = vmatprep.subr.mxu0 0.0
    %249 = vmatpush1.msra.mxu0 %v201
    %250 = vmatprep.subr.mxu0 0.0
    %251 = vmatpush1.msra.mxu0 %v200
    %252 = vmatprep.subr.mxu0 0.0
    %253 = vmatpush1.msra.mxu0 %v199
    %254 = vmatprep.subr.mxu0 0.0
    %255 = vmatpush2.msra.mxu0 0.0
    %256 = vmatprep.subr.mxu0 0.0
    %257 = vmatpush2.msra.mxu0 0.0
    %258 = vmatprep.subr.mxu0 0.0
    %259 = vmatpush2.msra.mxu0 0.0
    %260 = vmatprep.subr.mxu0 0.0
    %261 = vmatpush2.msra.mxu0 0.0
    %262 = vmatprep.subr.mxu0 0.0
    %263 = vmatpush2.msra.mxu0 0.0
    %264 = vmatprep.subr.mxu0 0.0
    %265 = vmatpush2.msra.mxu0 0.0
    %266 = vmatprep.subr.mxu0 0.0
    %267 = vmatpush2.msra.mxu0 0.0
    %268 = vmatprep.subr.mxu0 0.0
    %269 = vmatpush2.msra.mxu0 0.0
    %270 = vmatprep.subr.mxu0 0.0
    %271 = vmatpush2.msra.mxu0 0.0
    %272 = vmatprep.subr.mxu0 0.0
    %273 = vmatpush2.msra.mxu0 0.0
    %274 = vmatprep.subr.mxu0 0.0
    %275 = vmatpush2.msra.mxu0 0.0
    %276 = vmatprep.subr.mxu0 0.0
    %277 = vmatpush2.msra.mxu0 0.0
    %278 = vmatprep.subr.mxu0 0.0
    %279 = vmatpush2.msra.mxu0 0.0
    %280 = vmatprep.subr.mxu0 0.0
    %281 = vmatpush2.msra.mxu0 0.0
    %282 = vmatprep.subr.mxu0 0.0
    %283 = vmatpush2.msra.mxu0 0.0
    %284 = vmatprep.subr.mxu0 0.0
    %285 = vmatpush2.msra.mxu0 0.0
    %286 = vmatprep.mubr.f32.mxu0 0.0
    %287 = vmatmul.mubr.f32.gmra.mxu0 %v198
    %v288 = vpop.f32.mrf.mxu0
    %v289 = vadd.f32 %v220, %v288
    %v290 = vpop.f32.mrf.mxu0
    %291 = vdwg.mxu0
    %v292 = vmul.f32 %v289, 0.5
    %v293 = vmul.f32 %v289, 0.70710677
    %v294 = verf.f32.pop %v293
    %v295 = vadd.f32 %v294, 1.0
    %v296 = vmul.f32 %v292, %v295
    %v297 = vld [vmem:[#allocation8] sm:$0xff]
    %v298 = vld [vmem:[#allocation8 + $0x8] sm:$0xff]
    %v299 = vld [vmem:[#allocation8 + $0x10] sm:$0xff]
    %v300 = vld [vmem:[#allocation8 + $0x18] sm:$0xff]
    %v301 = vld [vmem:[#allocation8 + $0x20] sm:$0xff]
    %v302 = vld [vmem:[#allocation8 + $0x28] sm:$0xff]
    %v303 = vld [vmem:[#allocation8 + $0x30] sm:$0xff]
    %v304 = vld [vmem:[#allocation8 + $0x38] sm:$0xff]
    %v305 = vld [vmem:[#allocation8 + $0x40] sm:$0xff]
    %v306 = vld [vmem:[#allocation8 + $0x48] sm:$0xff]
    %v307 = vld [vmem:[#allocation8 + $0x50] sm:$0xff]
    %v308 = vld [vmem:[#allocation8 + $0x58] sm:$0xff]
    %v309 = vld [vmem:[#allocation8 + $0x60] sm:$0xff]
    %v310 = vld [vmem:[#allocation8 + $0x68] sm:$0xff]
    %v311 = vld [vmem:[#allocation8 + $0x70] sm:$0xff]
    %v312 = vld [vmem:[#allocation8 + $0x78] sm:$0xff]
    %v313 = vld [vmem:[%s5] sm:$0x1]
    %v315 = vlaneseq
    %v316 = vshrl.u32 %v315, 7
    %v317 = vsub.s32 0, %v316
    %v318 = vrot.slane %v313, %v317
    %320 = vmatprep.subr.mxu0 0.0
    %321 = vmatpush1.msra.mxu0 %v312
    %322 = vmatprep.subr.mxu0 0.0
    %323 = vmatpush1.msra.mxu0 %v311
    %324 = vmatprep.subr.mxu0 0.0
    %325 = vmatpush1.msra.mxu0 %v310
    %326 = vmatprep.subr.mxu0 0.0
    %327 = vmatpush1.msra.mxu0 %v309
    %328 = vmatprep.subr.mxu0 0.0
    %329 = vmatpush1.msra.mxu0 %v308
    %330 = vmatprep.subr.mxu0 0.0
    %331 = vmatpush1.msra.mxu0 %v307
    %332 = vmatprep.subr.mxu0 0.0
    %333 = vmatpush1.msra.mxu0 %v306
    %334 = vmatprep.subr.mxu0 0.0
    %335 = vmatpush1.msra.mxu0 %v305
    %336 = vmatprep.subr.mxu0 0.0
    %337 = vmatpush1.msra.mxu0 %v304
    %338 = vmatprep.subr.mxu0 0.0
    %339 = vmatpush1.msra.mxu0 %v303
    %340 = vmatprep.subr.mxu0 0.0
    %341 = vmatpush1.msra.mxu0 %v302
    %342 = vmatprep.subr.mxu0 0.0
    %343 = vmatpush1.msra.mxu0 %v301
    %344 = vmatprep.subr.mxu0 0.0
    %345 = vmatpush1.msra.mxu0 %v300
    %346 = vmatprep.subr.mxu0 0.0
    %347 = vmatpush1.msra.mxu0 %v299
    %348 = vmatprep.subr.mxu0 0.0
    %349 = vmatpush1.msra.mxu0 %v298
    %350 = vmatprep.subr.mxu0 0.0
    %351 = vmatpush1.msra.mxu0 %v297
    %352 = vmatprep.subr.mxu0 0.0
    %353 = vmatpush2.msra.mxu0 0.0
    %354 = vmatprep.subr.mxu0 0.0
    %355 = vmatpush2.msra.mxu0 0.0
    %356 = vmatprep.subr.mxu0 0.0
    %357 = vmatpush2.msra.mxu0 0.0
    %358 = vmatprep.subr.mxu0 0.0
    %359 = vmatpush2.msra.mxu0 0.0
    %360 = vmatprep.subr.mxu0 0.0
    %361 = vmatpush2.msra.mxu0 0.0
    %362 = vmatprep.subr.mxu0 0.0
    %363 = vmatpush2.msra.mxu0 0.0
    %364 = vmatprep.subr.mxu0 0.0
    %365 = vmatpush2.msra.mxu0 0.0
    %366 = vmatprep.subr.mxu0 0.0
    %367 = vmatpush2.msra.mxu0 0.0
    %368 = vmatprep.subr.mxu0 0.0
    %369 = vmatpush2.msra.mxu0 0.0
    %370 = vmatprep.subr.mxu0 0.0
    %371 = vmatpush2.msra.mxu0 0.0
    %372 = vmatprep.subr.mxu0 0.0
    %373 = vmatpush2.msra.mxu0 0.0
    %374 = vmatprep.subr.mxu0 0.0
    %375 = vmatpush2.msra.mxu0 0.0
    %376 = vmatprep.subr.mxu0 0.0
    %377 = vmatpush2.msra.mxu0 0.0
    %378 = vmatprep.subr.mxu0 0.0
    %379 = vmatpush2.msra.mxu0 0.0
    %380 = vmatprep.subr.mxu0 0.0
    %381 = vmatpush2.msra.mxu0 0.0
    %382 = vmatprep.subr.mxu0 0.0
    %383 = vmatpush2.msra.mxu0 0.0
    %384 = vmatprep.mubr.f32.mxu0 0.0
    %385 = vmatmul.mubr.f32.gmra.mxu0 %v296
    %v386 = vpop.f32.mrf.mxu0
    %v387 = vadd.f32 %v318, %v386
    %v388 = vpop.f32.mrf.mxu0
    %389 = vdwg.mxu0
    %v390 = vmul.f32 %v387, 0.5
    %v391 = vmul.f32 %v387, 0.70710677
    %v392 = verf.f32.pop %v391
    %v393 = vadd.f32 %v392, 1.0
    %v394 = vmul.f32 %v390, %v393
    %v395 = vld [vmem:[#allocation10] sm:$0xff]
    %v396 = vld [vmem:[#allocation10 + $0x8] sm:$0xff]
    %v397 = vld [vmem:[#allocation10 + $0x10] sm:$0xff]
    %v398 = vld [vmem:[#allocation10 + $0x18] sm:$0xff]
    %v399 = vld [vmem:[#allocation10 + $0x20] sm:$0xff]
    %v400 = vld [vmem:[#allocation10 + $0x28] sm:$0xff]
    %v401 = vld [vmem:[#allocation10 + $0x30] sm:$0xff]
    %v402 = vld [vmem:[#allocation10 + $0x38] sm:$0xff]
    %v403 = vld [vmem:[#allocation10 + $0x40] sm:$0xff]
    %v404 = vld [vmem:[#allocation10 + $0x48] sm:$0xff]
    %v405 = vld [vmem:[#allocation10 + $0x50] sm:$0xff]
    %v406 = vld [vmem:[#allocation10 + $0x58] sm:$0xff]
    %v407 = vld [vmem:[#allocation10 + $0x60] sm:$0xff]
    %v408 = vld [vmem:[#allocation10 + $0x68] sm:$0xff]
    %v409 = vld [vmem:[#allocation10 + $0x70] sm:$0xff]
    %v410 = vld [vmem:[#allocation10 + $0x78] sm:$0xff]
    %v411 = vld [vmem:[%s7] sm:$0x1]
    %v413 = vlaneseq
    %v414 = vshrl.u32 %v413, 7
    %v415 = vsub.s32 0, %v414
    %v416 = vrot.slane %v411, %v415
    %418 = vmatprep.subr.mxu0 0.0
    %419 = vmatpush1.msra.mxu0 %v410
    %420 = vmatprep.subr.mxu0 0.0
    %421 = vmatpush1.msra.mxu0 %v409
    %422 = vmatprep.subr.mxu0 0.0
    %423 = vmatpush1.msra.mxu0 %v408
    %424 = vmatprep.subr.mxu0 0.0
    %425 = vmatpush1.msra.mxu0 %v407
    %426 = vmatprep.subr.mxu0 0.0
    %427 = vmatpush1.msra.mxu0 %v406
    %428 = vmatprep.subr.mxu0 0.0
    %429 = vmatpush1.msra.mxu0 %v405
    %430 = vmatprep.subr.mxu0 0.0
    %431 = vmatpush1.msra.mxu0 %v404
    %432 = vmatprep.subr.mxu0 0.0
    %433 = vmatpush1.msra.mxu0 %v403
    %434 = vmatprep.subr.mxu0 0.0
    %435 = vmatpush1.msra.mxu0 %v402
    %436 = vmatprep.subr.mxu0 0.0
    %437 = vmatpush1.msra.mxu0 %v401
    %438 = vmatprep.subr.mxu0 0.0
    %439 = vmatpush1.msra.mxu0 %v400
    %440 = vmatprep.subr.mxu0 0.0
    %441 = vmatpush1.msra.mxu0 %v399
    %442 = vmatprep.subr.mxu0 0.0
    %443 = vmatpush1.msra.mxu0 %v398
    %444 = vmatprep.subr.mxu0 0.0
    %445 = vmatpush1.msra.mxu0 %v397
    %446 = vmatprep.subr.mxu0 0.0
    %447 = vmatpush1.msra.mxu0 %v396
    %448 = vmatprep.subr.mxu0 0.0
    %449 = vmatpush1.msra.mxu0 %v395
    %450 = vmatprep.subr.mxu0 0.0
    %451 = vmatpush2.msra.mxu0 0.0
    %452 = vmatprep.subr.mxu0 0.0
    %453 = vmatpush2.msra.mxu0 0.0
    %454 = vmatprep.subr.mxu0 0.0
    %455 = vmatpush2.msra.mxu0 0.0
    %456 = vmatprep.subr.mxu0 0.0
    %457 = vmatpush2.msra.mxu0 0.0
    %458 = vmatprep.subr.mxu0 0.0
    %459 = vmatpush2.msra.mxu0 0.0
    %460 = vmatprep.subr.mxu0 0.0
    %461 = vmatpush2.msra.mxu0 0.0
    %462 = vmatprep.subr.mxu0 0.0
    %463 = vmatpush2.msra.mxu0 0.0
    %464 = vmatprep.subr.mxu0 0.0
    %465 = vmatpush2.msra.mxu0 0.0
    %466 = vmatprep.subr.mxu0 0.0
    %467 = vmatpush2.msra.mxu0 0.0
    %468 = vmatprep.subr.mxu0 0.0
    %469 = vmatpush2.msra.mxu0 0.0
    %470 = vmatprep.subr.mxu0 0.0
    %471 = vmatpush2.msra.mxu0 0.0
    %472 = vmatprep.subr.mxu0 0.0
    %473 = vmatpush2.msra.mxu0 0.0
    %474 = vmatprep.subr.mxu0 0.0
    %475 = vmatpush2.msra.mxu0 0.0
    %476 = vmatprep.subr.mxu0 0.0
    %477 = vmatpush2.msra.mxu0 0.0
    %478 = vmatprep.subr.mxu0 0.0
    %479 = vmatpush2.msra.mxu0 0.0
    %480 = vmatprep.subr.mxu0 0.0
    %481 = vmatpush2.msra.mxu0 0.0
    %482 = vmatprep.mubr.f32.mxu0 0.0
    %483 = vmatmul.mubr.f32.gmra.mxu0 %v394
    %v484 = vpop.f32.mrf.mxu0
    %v485 = vadd.f32 %v416, %v484
    %v486 = vpop.f32.mrf.mxu0
    %487 = vdwg.mxu0
    %v488 = vmul.f32 %v485, 0.5
    %v489 = vmul.f32 %v485, 0.70710677
    %v490 = verf.f32.pop %v489
    %v491 = vadd.f32 %v490, 1.0
    %v492 = vmul.f32 %v488, %v491
    %v493 = vld [vmem:[#allocation11] sm:$0xff]
    %v494 = vld [vmem:[#allocation11 + $0x8] sm:$0xff]
    %v495 = vld [vmem:[#allocation11 + $0x10] sm:$0xff]
    %v496 = vld [vmem:[#allocation11 + $0x18] sm:$0xff]
    %v497 = vld [vmem:[#allocation11 + $0x20] sm:$0xff]
    %v498 = vld [vmem:[#allocation11 + $0x28] sm:$0xff]
    %v499 = vld [vmem:[#allocation11 + $0x30] sm:$0xff]
    %v500 = vld [vmem:[#allocation11 + $0x38] sm:$0xff]
    %v501 = vld [vmem:[#allocation11 + $0x40] sm:$0xff]
    %v502 = vld [vmem:[#allocation11 + $0x48] sm:$0xff]
    %v503 = vld [vmem:[#allocation11 + $0x50] sm:$0xff]
    %v504 = vld [vmem:[#allocation11 + $0x58] sm:$0xff]
    %v505 = vld [vmem:[#allocation11 + $0x60] sm:$0xff]
    %v506 = vld [vmem:[#allocation11 + $0x68] sm:$0xff]
    %v507 = vld [vmem:[#allocation11 + $0x70] sm:$0xff]
    %v508 = vld [vmem:[#allocation11 + $0x78] sm:$0xff]
    %v509 = vld [vmem:[#allocation11 + $0x80] sm:$0xff]
    %v510 = vld [vmem:[#allocation11 + $0x88] sm:$0xff]
    %v511 = vld [vmem:[#allocation11 + $0x90] sm:$0xff]
    %v512 = vld [vmem:[#allocation11 + $0x98] sm:$0xff]
    %v513 = vld [vmem:[#allocation11 + $0xa0] sm:$0xff]
    %v514 = vld [vmem:[#allocation11 + $0xa8] sm:$0xff]
    %v515 = vld [vmem:[#allocation11 + $0xb0] sm:$0xff]
    %v516 = vld [vmem:[#allocation11 + $0xb8] sm:$0xff]
    %v517 = vld [vmem:[#allocation11 + $0xc0] sm:$0xff]
    %v518 = vld [vmem:[#allocation11 + $0xc8] sm:$0xff]
    %v519 = vld [vmem:[#allocation11 + $0xd0] sm:$0xff]
    %v520 = vld [vmem:[#allocation11 + $0xd8] sm:$0xff]
    %v521 = vld [vmem:[#allocation11 + $0xe0] sm:$0xff]
    %v522 = vld [vmem:[#allocation11 + $0xe8] sm:$0xff]
    %v523 = vld [vmem:[#allocation11 + $0xf0] sm:$0xff]
    %v524 = vld [vmem:[#allocation11 + $0xf8] sm:$0xff]
    %v525 = vld [vmem:[%s9] sm:$0x3]
    %v527 = vlaneseq
    %v528 = vshrl.u32 %v527, 7
    %v529 = vsub.s32 0, %v528
    %v530 = vrot.slane %v525, %v529
    %v531 = vlaneseq
    %v532 = vshrl.u32 %v531, 7
    %v533 = vsub.s32 1, %v532
    %v534 = vrot.slane %v525, %v533
    %537 = vmatprep.subr.mxu0 %v524
    %538 = vmatpush1.msra.mxu0 %v523
    %539 = vmatprep.subr.mxu0 %v522
    %540 = vmatpush1.msra.mxu0 %v521
    %541 = vmatprep.subr.mxu0 %v520
    %542 = vmatpush1.msra.mxu0 %v519
    %543 = vmatprep.subr.mxu0 %v518
    %544 = vmatpush1.msra.mxu0 %v517
    %545 = vmatprep.subr.mxu0 %v516
    %546 = vmatpush1.msra.mxu0 %v515
    %547 = vmatprep.subr.mxu0 %v514
    %548 = vmatpush1.msra.mxu0 %v513
    %549 = vmatprep.subr.mxu0 %v512
    %550 = vmatpush1.msra.mxu0 %v511
    %551 = vmatprep.subr.mxu0 %v510
    %552 = vmatpush1.msra.mxu0 %v509
    %553 = vmatprep.subr.mxu0 %v508
    %554 = vmatpush1.msra.mxu0 %v507
    %555 = vmatprep.subr.mxu0 %v506
    %556 = vmatpush1.msra.mxu0 %v505
    %557 = vmatprep.subr.mxu0 %v504
    %558 = vmatpush1.msra.mxu0 %v503
    %559 = vmatprep.subr.mxu0 %v502
    %560 = vmatpush1.msra.mxu0 %v501
    %561 = vmatprep.subr.mxu0 %v500
    %562 = vmatpush1.msra.mxu0 %v499
    %563 = vmatprep.subr.mxu0 %v498
    %564 = vmatpush1.msra.mxu0 %v497
    %565 = vmatprep.subr.mxu0 %v496
    %566 = vmatpush1.msra.mxu0 %v495
    %567 = vmatprep.subr.mxu0 %v494
    %568 = vmatpush1.msra.mxu0 %v493
    %569 = vmatprep.subr.mxu0 0.0
    %570 = vmatpush2.msra.mxu0 0.0
    %571 = vmatprep.subr.mxu0 0.0
    %572 = vmatpush2.msra.mxu0 0.0
    %573 = vmatprep.subr.mxu0 0.0
    %574 = vmatpush2.msra.mxu0 0.0
    %575 = vmatprep.subr.mxu0 0.0
    %576 = vmatpush2.msra.mxu0 0.0
    %577 = vmatprep.subr.mxu0 0.0
    %578 = vmatpush2.msra.mxu0 0.0
    %579 = vmatprep.subr.mxu0 0.0
    %580 = vmatpush2.msra.mxu0 0.0
    %581 = vmatprep.subr.mxu0 0.0
    %582 = vmatpush2.msra.mxu0 0.0
    %583 = vmatprep.subr.mxu0 0.0
    %584 = vmatpush2.msra.mxu0 0.0
    %585 = vmatprep.subr.mxu0 0.0
    %586 = vmatpush2.msra.mxu0 0.0
    %587 = vmatprep.subr.mxu0 0.0
    %588 = vmatpush2.msra.mxu0 0.0
    %589 = vmatprep.subr.mxu0 0.0
    %590 = vmatpush2.msra.mxu0 0.0
    %591 = vmatprep.subr.mxu0 0.0
    %592 = vmatpush2.msra.mxu0 0.0
    %593 = vmatprep.subr.mxu0 0.0
    %594 = vmatpush2.msra.mxu0 0.0
    %595 = vmatprep.subr.mxu0 0.0
    %596 = vmatpush2.msra.mxu0 0.0
    %597 = vmatprep.subr.mxu0 0.0
    %598 = vmatpush2.msra.mxu0 0.0
    %599 = vmatprep.subr.mxu0 0.0
    %600 = vmatpush2.msra.mxu0 0.0
    %601 = vmatprep.mubr.f32.mxu0 0.0
    %602 = vmatmul.mubr.f32.gmra.mxu0 %v492
    %v603 = vpop.f32.mrf.mxu0
    %v604 = vadd.f32 %v530, %v603
    %v605 = vpop.f32.mrf.mxu0
    %v606 = vadd.f32 %v534, %v605
    %607 = vdwg.mxu0
    %608 = vst [vmem:[#allocation22] sm:$0xff] %v604
    %609 = vst [vmem:[#allocation23] sm:$0xff] %v606
    %v610 = vld [vmem:[#allocation5] sm:$0xff]
    %v611 = vmul.f32 %v606, 0.5
    %v612 = vmul.f32 %v611, 1.442695
    %v613 = vpow.pop %v612
    %v614 = vmul.f32 %v610, %v613
    %v615 = vadd.f32 %v604, %v614
    %616 = vst [vmem:[#allocation19] sm:$0xff] %v615
    %v617 = vld [vmem:[#allocation13] sm:$0xff]
    %v618 = vld [vmem:[#allocation13 + $0x8] sm:$0xff]
    %v619 = vld [vmem:[#allocation13 + $0x10] sm:$0xff]
    %v620 = vld [vmem:[#allocation13 + $0x18] sm:$0xff]
    %v621 = vld [vmem:[#allocation13 + $0x20] sm:$0xff]
    %v622 = vld [vmem:[#allocation13 + $0x28] sm:$0xff]
    %v623 = vld [vmem:[#allocation13 + $0x30] sm:$0xff]
    %v624 = vld [vmem:[#allocation13 + $0x38] sm:$0xff]
    %v625 = vld [vmem:[#allocation13 + $0x40] sm:$0xff]
    %v626 = vld [vmem:[#allocation13 + $0x48] sm:$0xff]
    %v627 = vld [vmem:[#allocation13 + $0x50] sm:$0xff]
    %v628 = vld [vmem:[#allocation13 + $0x58] sm:$0xff]
    %v629 = vld [vmem:[#allocation13 + $0x60] sm:$0xff]
    %v630 = vld [vmem:[#allocation13 + $0x68] sm:$0xff]
    %v631 = vld [vmem:[#allocation13 + $0x70] sm:$0xff]
    %v632 = vld [vmem:[#allocation13 + $0x78] sm:$0xff]
    %v633 = vld [vmem:[%s11] sm:$0x1]
    %v635 = vlaneseq
    %v636 = vshrl.u32 %v635, 7
    %v637 = vsub.s32 0, %v636
    %v638 = vrot.slane %v633, %v637
    %640 = vmatprep.subr.mxu0 0.0
    %641 = vmatpush1.msra.mxu0 %v632
    %642 = vmatprep.subr.mxu0 0.0
    %643 = vmatpush1.msra.mxu0 %v631
    %644 = vmatprep.subr.mxu0 0.0
    %645 = vmatpush1.msra.mxu0 %v630
    %646 = vmatprep.subr.mxu0 0.0
    %647 = vmatpush1.msra.mxu0 %v629
    %648 = vmatprep.subr.mxu0 0.0
    %649 = vmatpush1.msra.mxu0 %v628
    %650 = vmatprep.subr.mxu0 0.0
    %651 = vmatpush1.msra.mxu0 %v627
    %652 = vmatprep.subr.mxu0 0.0
    %653 = vmatpush1.msra.mxu0 %v626
    %654 = vmatprep.subr.mxu0 0.0
    %655 = vmatpush1.msra.mxu0 %v625
    %656 = vmatprep.subr.mxu0 0.0
    %657 = vmatpush1.msra.mxu0 %v624
    %658 = vmatprep.subr.mxu0 0.0
    %659 = vmatpush1.msra.mxu0 %v623
    %660 = vmatprep.subr.mxu0 0.0
    %661 = vmatpush1.msra.mxu0 %v622
    %662 = vmatprep.subr.mxu0 0.0
    %663 = vmatpush1.msra.mxu0 %v621
    %664 = vmatprep.subr.mxu0 0.0
    %665 = vmatpush1.msra.mxu0 %v620
    %666 = vmatprep.subr.mxu0 0.0
    %667 = vmatpush1.msra.mxu0 %v619
    %668 = vmatprep.subr.mxu0 0.0
    %669 = vmatpush1.msra.mxu0 %v618
    %670 = vmatprep.subr.mxu0 0.0
    %671 = vmatpush1.msra.mxu0 %v617
    %672 = vmatprep.subr.mxu0 0.0
    %673 = vmatpush2.msra.mxu0 0.0
    %674 = vmatprep.subr.mxu0 0.0
    %675 = vmatpush2.msra.mxu0 0.0
    %676 = vmatprep.subr.mxu0 0.0
    %677 = vmatpush2.msra.mxu0 0.0
    %678 = vmatprep.subr.mxu0 0.0
    %679 = vmatpush2.msra.mxu0 0.0
    %680 = vmatprep.subr.mxu0 0.0
    %681 = vmatpush2.msra.mxu0 0.0
    %682 = vmatprep.subr.mxu0 0.0
    %683 = vmatpush2.msra.mxu0 0.0
    %684 = vmatprep.subr.mxu0 0.0
    %685 = vmatpush2.msra.mxu0 0.0
    %686 = vmatprep.subr.mxu0 0.0
    %687 = vmatpush2.msra.mxu0 0.0
    %688 = vmatprep.subr.mxu0 0.0
    %689 = vmatpush2.msra.mxu0 0.0
    %690 = vmatprep.subr.mxu0 0.0
    %691 = vmatpush2.msra.mxu0 0.0
    %692 = vmatprep.subr.mxu0 0.0
    %693 = vmatpush2.msra.mxu0 0.0
    %694 = vmatprep.subr.mxu0 0.0
    %695 = vmatpush2.msra.mxu0 0.0
    %696 = vmatprep.subr.mxu0 0.0
    %697 = vmatpush2.msra.mxu0 0.0
    %698 = vmatprep.subr.mxu0 0.0
    %699 = vmatpush2.msra.mxu0 0.0
    %700 = vmatprep.subr.mxu0 0.0
    %701 = vmatpush2.msra.mxu0 0.0
    %702 = vmatprep.subr.mxu0 0.0
    %703 = vmatpush2.msra.mxu0 0.0
    %704 = vmatprep.mubr.f32.mxu0 0.0
    %705 = vmatmul.mubr.f32.gmra.mxu0 %v615
    %v706 = vpop.f32.mrf.mxu0
    %v707 = vadd.f32 %v638, %v706
    %v708 = vpop.f32.mrf.mxu0
    %709 = vdwg.mxu0
    %v710 = vmul.f32 %v707, 0.5
    %v711 = vmul.f32 %v707, 0.70710677
    %v712 = verf.f32.pop %v711
    %v713 = vadd.f32 %v712, 1.0
    %v714 = vmul.f32 %v710, %v713
    %v715 = vld [vmem:[#allocation14] sm:$0xff]
    %v716 = vld [vmem:[#allocation14 + $0x8] sm:$0xff]
    %v717 = vld [vmem:[#allocation14 + $0x10] sm:$0xff]
    %v718 = vld [vmem:[#allocation14 + $0x18] sm:$0xff]
    %v719 = vld [vmem:[#allocation14 + $0x20] sm:$0xff]
    %v720 = vld [vmem:[#allocation14 + $0x28] sm:$0xff]
    %v721 = vld [vmem:[#allocation14 + $0x30] sm:$0xff]
    %v722 = vld [vmem:[#allocation14 + $0x38] sm:$0xff]
    %v723 = vld [vmem:[#allocation14 + $0x40] sm:$0xff]
    %v724 = vld [vmem:[#allocation14 + $0x48] sm:$0xff]
    %v725 = vld [vmem:[#allocation14 + $0x50] sm:$0xff]
    %v726 = vld [vmem:[#allocation14 + $0x58] sm:$0xff]
    %v727 = vld [vmem:[#allocation14 + $0x60] sm:$0xff]
    %v728 = vld [vmem:[#allocation14 + $0x68] sm:$0xff]
    %v729 = vld [vmem:[#allocation14 + $0x70] sm:$0xff]
    %v730 = vld [vmem:[#allocation14 + $0x78] sm:$0xff]
    %v731 = vld [vmem:[%s13] sm:$0x1]
    %v733 = vlaneseq
    %v734 = vshrl.u32 %v733, 7
    %v735 = vsub.s32 0, %v734
    %v736 = vrot.slane %v731, %v735
    %738 = vmatprep.subr.mxu0 0.0
    %739 = vmatpush1.msra.mxu0 %v730
    %740 = vmatprep.subr.mxu0 0.0
    %741 = vmatpush1.msra.mxu0 %v729
    %742 = vmatprep.subr.mxu0 0.0
    %743 = vmatpush1.msra.mxu0 %v728
    %744 = vmatprep.subr.mxu0 0.0
    %745 = vmatpush1.msra.mxu0 %v727
    %746 = vmatprep.subr.mxu0 0.0
    %747 = vmatpush1.msra.mxu0 %v726
    %748 = vmatprep.subr.mxu0 0.0
    %749 = vmatpush1.msra.mxu0 %v725
    %750 = vmatprep.subr.mxu0 0.0
    %751 = vmatpush1.msra.mxu0 %v724
    %752 = vmatprep.subr.mxu0 0.0
    %753 = vmatpush1.msra.mxu0 %v723
    %754 = vmatprep.subr.mxu0 0.0
    %755 = vmatpush1.msra.mxu0 %v722
    %756 = vmatprep.subr.mxu0 0.0
    %757 = vmatpush1.msra.mxu0 %v721
    %758 = vmatprep.subr.mxu0 0.0
    %759 = vmatpush1.msra.mxu0 %v720
    %760 = vmatprep.subr.mxu0 0.0
    %761 = vmatpush1.msra.mxu0 %v719
    %762 = vmatprep.subr.mxu0 0.0
    %763 = vmatpush1.msra.mxu0 %v718
    %764 = vmatprep.subr.mxu0 0.0
    %765 = vmatpush1.msra.mxu0 %v717
    %766 = vmatprep.subr.mxu0 0.0
    %767 = vmatpush1.msra.mxu0 %v716
    %768 = vmatprep.subr.mxu0 0.0
    %769 = vmatpush1.msra.mxu0 %v715
    %770 = vmatprep.subr.mxu0 0.0
    %771 = vmatpush2.msra.mxu0 0.0
    %772 = vmatprep.subr.mxu0 0.0
    %773 = vmatpush2.msra.mxu0 0.0
    %774 = vmatprep.subr.mxu0 0.0
    %775 = vmatpush2.msra.mxu0 0.0
    %776 = vmatprep.subr.mxu0 0.0
    %777 = vmatpush2.msra.mxu0 0.0
    %778 = vmatprep.subr.mxu0 0.0
    %779 = vmatpush2.msra.mxu0 0.0
    %780 = vmatprep.subr.mxu0 0.0
    %781 = vmatpush2.msra.mxu0 0.0
    %782 = vmatprep.subr.mxu0 0.0
    %783 = vmatpush2.msra.mxu0 0.0
    %784 = vmatprep.subr.mxu0 0.0
    %785 = vmatpush2.msra.mxu0 0.0
    %786 = vmatprep.subr.mxu0 0.0
    %787 = vmatpush2.msra.mxu0 0.0
    %788 = vmatprep.subr.mxu0 0.0
    %789 = vmatpush2.msra.mxu0 0.0
    %790 = vmatprep.subr.mxu0 0.0
    %791 = vmatpush2.msra.mxu0 0.0
    %792 = vmatprep.subr.mxu0 0.0
    %793 = vmatpush2.msra.mxu0 0.0
    %794 = vmatprep.subr.mxu0 0.0
    %795 = vmatpush2.msra.mxu0 0.0
    %796 = vmatprep.subr.mxu0 0.0
    %797 = vmatpush2.msra.mxu0 0.0
    %798 = vmatprep.subr.mxu0 0.0
    %799 = vmatpush2.msra.mxu0 0.0
    %800 = vmatprep.subr.mxu0 0.0
    %801 = vmatpush2.msra.mxu0 0.0
    %802 = vmatprep.mubr.f32.mxu0 0.0
    %803 = vmatmul.mubr.f32.gmra.mxu0 %v714
    %v804 = vpop.f32.mrf.mxu0
    %v805 = vadd.f32 %v736, %v804
    %v806 = vpop.f32.mrf.mxu0
    %807 = vdwg.mxu0
    %v808 = vmul.f32 %v805, 0.5
    %v809 = vmul.f32 %v805, 0.70710677
    %v810 = verf.f32.pop %v809
    %v811 = vadd.f32 %v810, 1.0
    %v812 = vmul.f32 %v808, %v811
    %v813 = vld [vmem:[#allocation16] sm:$0xff]
    %v814 = vld [vmem:[#allocation16 + $0x8] sm:$0xff]
    %v815 = vld [vmem:[#allocation16 + $0x10] sm:$0xff]
    %v816 = vld [vmem:[#allocation16 + $0x18] sm:$0xff]
    %v817 = vld [vmem:[#allocation16 + $0x20] sm:$0xff]
    %v818 = vld [vmem:[#allocation16 + $0x28] sm:$0xff]
    %v819 = vld [vmem:[#allocation16 + $0x30] sm:$0xff]
    %v820 = vld [vmem:[#allocation16 + $0x38] sm:$0xff]
    %v821 = vld [vmem:[#allocation16 + $0x40] sm:$0xff]
    %v822 = vld [vmem:[#allocation16 + $0x48] sm:$0xff]
    %v823 = vld [vmem:[#allocation16 + $0x50] sm:$0xff]
    %v824 = vld [vmem:[#allocation16 + $0x58] sm:$0xff]
    %v825 = vld [vmem:[#allocation16 + $0x60] sm:$0xff]
    %v826 = vld [vmem:[#allocation16 + $0x68] sm:$0xff]
    %v827 = vld [vmem:[#allocation16 + $0x70] sm:$0xff]
    %v828 = vld [vmem:[#allocation16 + $0x78] sm:$0xff]
    %v829 = vld [vmem:[%s15] sm:$0x1]
    %v831 = vlaneseq
    %v832 = vshrl.u32 %v831, 7
    %v833 = vsub.s32 0, %v832
    %v834 = vrot.slane %v829, %v833
    %836 = vmatprep.subr.mxu0 0.0
    %837 = vmatpush1.msra.mxu0 %v828
    %838 = vmatprep.subr.mxu0 0.0
    %839 = vmatpush1.msra.mxu0 %v827
    %840 = vmatprep.subr.mxu0 0.0
    %841 = vmatpush1.msra.mxu0 %v826
    %842 = vmatprep.subr.mxu0 0.0
    %843 = vmatpush1.msra.mxu0 %v825
    %844 = vmatprep.subr.mxu0 0.0
    %845 = vmatpush1.msra.mxu0 %v824
    %846 = vmatprep.subr.mxu0 0.0
    %847 = vmatpush1.msra.mxu0 %v823
    %848 = vmatprep.subr.mxu0 0.0
    %849 = vmatpush1.msra.mxu0 %v822
    %850 = vmatprep.subr.mxu0 0.0
    %851 = vmatpush1.msra.mxu0 %v821
    %852 = vmatprep.subr.mxu0 0.0
    %853 = vmatpush1.msra.mxu0 %v820
    %854 = vmatprep.subr.mxu0 0.0
    %855 = vmatpush1.msra.mxu0 %v819
    %856 = vmatprep.subr.mxu0 0.0
    %857 = vmatpush1.msra.mxu0 %v818
    %858 = vmatprep.subr.mxu0 0.0
    %859 = vmatpush1.msra.mxu0 %v817
    %860 = vmatprep.subr.mxu0 0.0
    %861 = vmatpush1.msra.mxu0 %v816
    %862 = vmatprep.subr.mxu0 0.0
    %863 = vmatpush1.msra.mxu0 %v815
    %864 = vmatprep.subr.mxu0 0.0
    %865 = vmatpush1.msra.mxu0 %v814
    %866 = vmatprep.subr.mxu0 0.0
    %867 = vmatpush1.msra.mxu0 %v813
    %868 = vmatprep.subr.mxu0 0.0
    %869 = vmatpush2.msra.mxu0 0.0
    %870 = vmatprep.subr.mxu0 0.0
    %871 = vmatpush2.msra.mxu0 0.0
    %872 = vmatprep.subr.mxu0 0.0
    %873 = vmatpush2.msra.mxu0 0.0
    %874 = vmatprep.subr.mxu0 0.0
    %875 = vmatpush2.msra.mxu0 0.0
    %876 = vmatprep.subr.mxu0 0.0
    %877 = vmatpush2.msra.mxu0 0.0
    %878 = vmatprep.subr.mxu0 0.0
    %879 = vmatpush2.msra.mxu0 0.0
    %880 = vmatprep.subr.mxu0 0.0
    %881 = vmatpush2.msra.mxu0 0.0
    %882 = vmatprep.subr.mxu0 0.0
    %883 = vmatpush2.msra.mxu0 0.0
    %884 = vmatprep.subr.mxu0 0.0
    %885 = vmatpush2.msra.mxu0 0.0
    %886 = vmatprep.subr.mxu0 0.0
    %887 = vmatpush2.msra.mxu0 0.0
    %888 = vmatprep.subr.mxu0 0.0
    %889 = vmatpush2.msra.mxu0 0.0
    %890 = vmatprep.subr.mxu0 0.0
    %891 = vmatpush2.msra.mxu0 0.0
    %892 = vmatprep.subr.mxu0 0.0
    %893 = vmatpush2.msra.mxu0 0.0
    %894 = vmatprep.subr.mxu0 0.0
    %895 = vmatpush2.msra.mxu0 0.0
    %896 = vmatprep.subr.mxu0 0.0
    %897 = vmatpush2.msra.mxu0 0.0
    %898 = vmatprep.subr.mxu0 0.0
    %899 = vmatpush2.msra.mxu0 0.0
    %900 = vmatprep.mubr.f32.mxu0 0.0
    %901 = vmatmul.mubr.f32.gmra.mxu0 %v812
    %v902 = vpop.f32.mrf.mxu0
    %v903 = vadd.f32 %v834, %v902
    %v904 = vpop.f32.mrf.mxu0
    %905 = vdwg.mxu0
    %v906 = vmul.f32 %v903, 0.5
    %v907 = vmul.f32 %v903, 0.70710677
    %v908 = verf.f32.pop %v907
    %v909 = vadd.f32 %v908, 1.0
    %v910 = vmul.f32 %v906, %v909
    %v911 = vld [vmem:[#allocation17] sm:$0xff]
    %v912 = vld [vmem:[#allocation17 + $0x8] sm:$0xff]
    %v913 = vld [vmem:[#allocation17 + $0x10] sm:$0xff]
    %v914 = vld [vmem:[#allocation17 + $0x18] sm:$0xff]
    %v915 = vld [vmem:[#allocation17 + $0x20] sm:$0xff]
    %v916 = vld [vmem:[#allocation17 + $0x28] sm:$0xff]
    %v917 = vld [vmem:[#allocation17 + $0x30] sm:$0xff]
    %v918 = vld [vmem:[#allocation17 + $0x38] sm:$0xff]
    %v919 = vld [vmem:[#allocation17 + $0x40] sm:$0xff]
    %v920 = vld [vmem:[#allocation17 + $0x48] sm:$0xff]
    %v921 = vld [vmem:[#allocation17 + $0x50] sm:$0xff]
    %v922 = vld [vmem:[#allocation17 + $0x58] sm:$0xff]
    %v923 = vld [vmem:[#allocation17 + $0x60] sm:$0xff]
    %v924 = vld [vmem:[#allocation17 + $0x68] sm:$0xff]
    %v925 = vld [vmem:[#allocation17 + $0x70] sm:$0xff]
    %v926 = vld [vmem:[#allocation17 + $0x78] sm:$0xff]
    %v927 = vld [vmem:[%s17] sm:$0x1]
    %v929 = vlaneseq
    %v930 = vshrl.u32 %v929, 7
    %v931 = vsub.s32 0, %v930
    %v932 = vrot.slane %v927, %v931
    %934 = vmatprep.subr.mxu0 0.0
    %935 = vmatpush1.msra.mxu0 %v926
    %936 = vmatprep.subr.mxu0 0.0
    %937 = vmatpush1.msra.mxu0 %v925
    %938 = vmatprep.subr.mxu0 0.0
    %939 = vmatpush1.msra.mxu0 %v924
    %940 = vmatprep.subr.mxu0 0.0
    %941 = vmatpush1.msra.mxu0 %v923
    %942 = vmatprep.subr.mxu0 0.0
    %943 = vmatpush1.msra.mxu0 %v922
    %944 = vmatprep.subr.mxu0 0.0
    %945 = vmatpush1.msra.mxu0 %v921
    %946 = vmatprep.subr.mxu0 0.0
    %947 = vmatpush1.msra.mxu0 %v920
    %948 = vmatprep.subr.mxu0 0.0
    %949 = vmatpush1.msra.mxu0 %v919
    %950 = vmatprep.subr.mxu0 0.0
    %951 = vmatpush1.msra.mxu0 %v918
    %952 = vmatprep.subr.mxu0 0.0
    %953 = vmatpush1.msra.mxu0 %v917
    %954 = vmatprep.subr.mxu0 0.0
    %955 = vmatpush1.msra.mxu0 %v916
    %956 = vmatprep.subr.mxu0 0.0
    %957 = vmatpush1.msra.mxu0 %v915
    %958 = vmatprep.subr.mxu0 0.0
    %959 = vmatpush1.msra.mxu0 %v914
    %960 = vmatprep.subr.mxu0 0.0
    %961 = vmatpush1.msra.mxu0 %v913
    %962 = vmatprep.subr.mxu0 0.0
    %963 = vmatpush1.msra.mxu0 %v912
    %964 = vmatprep.subr.mxu0 0.0
    %965 = vmatpush1.msra.mxu0 %v911
    %966 = vmatprep.subr.mxu0 0.0
    %967 = vmatpush2.msra.mxu0 0.0
    %968 = vmatprep.subr.mxu0 0.0
    %969 = vmatpush2.msra.mxu0 0.0
    %970 = vmatprep.subr.mxu0 0.0
    %971 = vmatpush2.msra.mxu0 0.0
    %972 = vmatprep.subr.mxu0 0.0
    %973 = vmatpush2.msra.mxu0 0.0
    %974 = vmatprep.subr.mxu0 0.0
    %975 = vmatpush2.msra.mxu0 0.0
    %976 = vmatprep.subr.mxu0 0.0
    %977 = vmatpush2.msra.mxu0 0.0
    %978 = vmatprep.subr.mxu0 0.0
    %979 = vmatpush2.msra.mxu0 0.0
    %980 = vmatprep.subr.mxu0 0.0
    %981 = vmatpush2.msra.mxu0 0.0
    %982 = vmatprep.subr.mxu0 0.0
    %983 = vmatpush2.msra.mxu0 0.0
    %984 = vmatprep.subr.mxu0 0.0
    %985 = vmatpush2.msra.mxu0 0.0
    %986 = vmatprep.subr.mxu0 0.0
    %987 = vmatpush2.msra.mxu0 0.0
    %988 = vmatprep.subr.mxu0 0.0
    %989 = vmatpush2.msra.mxu0 0.0
    %990 = vmatprep.subr.mxu0 0.0
    %991 = vmatpush2.msra.mxu0 0.0
    %992 = vmatprep.subr.mxu0 0.0
    %993 = vmatpush2.msra.mxu0 0.0
    %994 = vmatprep.subr.mxu0 0.0
    %995 = vmatpush2.msra.mxu0 0.0
    %996 = vmatprep.subr.mxu0 0.0
    %997 = vmatpush2.msra.mxu0 0.0
    %998 = vmatprep.mubr.f32.mxu0 0.0
    %999 = vmatmul.mubr.f32.gmra.mxu0 %v910
    %v1000 = vpop.f32.mrf.mxu0
    %v1001 = vadd.f32 %v932, %v1000
    %v1002 = vpop.f32.mrf.mxu0
    %1003 = vdwg.mxu0
    %1004 = vst [vmem:[#allocation20] sm:$0xff] %v1001
    // Predicated region
    $region114: #{tpu_custom_call.1} parent=1 // pred_check
      _
    $region115: #{tpu_custom_call.1} parent=1 // pred_check_branch
      %1006 = sbr.rel (0) target = $region117
    $region116: #{tpu_custom_call.1} parent=1 // pred_region
      %s1008 = ssub.s32 128, 128
      %1009 = vsyncadd [#allocation4], %s1008
      %s1011 = sshll.u32 [#allocation19], 4
      %s1012 = int_to_ptr.vmem [resolvable:$true] %s1011
      %1014 = dma.vmem_to_hbm [thread:$0]  %s1012, 128, %s18, [#allocation4]
    $region117: #{tpu_custom_call.1} parent=1 // pred_fallthru
      _
    // Predicated region
    $region118: #{tpu_custom_call.1} parent=1 // pred_check
      _
    $region119: #{tpu_custom_call.1} parent=1 // pred_check_branch
      %1016 = sbr.rel (0) target = $region121
    $region120: #{tpu_custom_call.1} parent=1 // pred_region
      %s1018 = ssub.s32 128, 128
      %1019 = vsyncadd [#allocation21], %s1018
      %s1021 = sshll.u32 [#allocation20], 4
      %s1022 = int_to_ptr.vmem [resolvable:$true] %s1021
      %1024 = dma.vmem_to_hbm [thread:$0]  %s1022, 128, %s19, [#allocation21]
    $region121: #{tpu_custom_call.1} parent=1 // pred_fallthru
      _
    // Predicated region
    $region122: #{tpu_custom_call.1} parent=1 // pred_check
      _
    $region123: #{tpu_custom_call.1} parent=1 // pred_check_branch
      %1026 = sbr.rel (0) target = $region125
    $region124: #{tpu_custom_call.1} parent=1 // pred_region
      %s1028 = ssub.s32 128, 128
      %1029 = vsyncadd [#allocation21], %s1028
      %s1031 = sshll.u32 [#allocation22], 4
      %s1032 = int_to_ptr.vmem [resolvable:$true] %s1031
      %1034 = dma.vmem_to_hbm [thread:$0]  %s1032, 128, %s20, [#allocation21]
    $region125: #{tpu_custom_call.1} parent=1 // pred_fallthru
      _
    // Predicated region
    $region126: #{tpu_custom_call.1} parent=1 // pred_check
      _
    $region127: #{tpu_custom_call.1} parent=1 // pred_check_branch
      %1036 = sbr.rel (0) target = $region129
    $region128: #{tpu_custom_call.1} parent=1 // pred_region
      %s1038 = ssub.s32 128, 128
      %1039 = vsyncadd [#allocation24], %s1038
      %s1041 = sshll.u32 [#allocation23], 4
      %s1042 = int_to_ptr.vmem [resolvable:$true] %s1041
      %1044 = dma.vmem_to_hbm [thread:$0]  %s1042, 128, %s21, [#allocation24]
    $region129: #{tpu_custom_call.1} parent=1 // pred_fallthru
      _
    // Predicated region
    $region130: #{tpu_custom_call.1} parent=1 // pred_check
      _
    $region131: #{tpu_custom_call.1} parent=1 // pred_check_branch
      %1046 = sbr.rel (0) target = $region133
    $region132: #{tpu_custom_call.1} parent=1 // pred_region
      %1047 = dma.done [#allocation4], 128
    $region133: #{tpu_custom_call.1} parent=1 // pred_fallthru
      _
    // Predicated region
    $region134: #{tpu_custom_call.1} parent=1 // pred_check
      _
    $region135: #{tpu_custom_call.1} parent=1 // pred_check_branch
      %1049 = sbr.rel (0) target = $region137
    $region136: #{tpu_custom_call.1} parent=1 // pred_region
      %1050 = dma.done [#allocation21], 128
    $region137: #{tpu_custom_call.1} parent=1 // pred_fallthru
      _
    // Predicated region
    $region138: #{tpu_custom_call.1} parent=1 // pred_check
      _
    $region139: #{tpu_custom_call.1} parent=1 // pred_check_branch
      %1052 = sbr.rel (0) target = $region141
    $region140: #{tpu_custom_call.1} parent=1 // pred_region
      %1053 = dma.done [#allocation21], 128
    $region141: #{tpu_custom_call.1} parent=1 // pred_fallthru
      _
    // Predicated region
    $region142: #{tpu_custom_call.1} parent=1 // pred_check
      _
    $region143: #{tpu_custom_call.1} parent=1 // pred_check_branch
      %1055 = sbr.rel (0) target = $region145
    $region144: #{tpu_custom_call.1} parent=1 // pred_region
      %1056 = dma.done [#allocation24], 128
    $region145: #{tpu_custom_call.1} parent=1 // pred_fallthru
      _
    %1057 = vsyncpa [#allocation3], 1
    %1058 = vsyncpa [#allocation6], 1
    %1059 = vsyncpa [#allocation9], 1
    %1060 = vsyncpa [#allocation12], 1
    %1061 = vsyncpa [#allocation15], 1
    %1062 = vsyncpa [#allocation18], 1
    %1063 = vsyncpa [#allocation4], 1
    %1064 = vsyncpa [#allocation21], 1
    %1065 = vsyncpa [#allocation24], 1

</llo_original>
